<compile_context>
chip_gen: v6e
topology: v6e:2x2x1
jax: 0.10.0
libtpu: 0.0.40
codegen_flags: <defaults>
</compile_context>

<pallas_src>
import jax
import jax.numpy as jnp
import numpy as np
from jax.experimental import pallas as pl
from jax.experimental.pallas import tpu as pltpu


def cnn2_kernel(x_ref, w1_ref, b1_ref,
                w2_ref, b2_ref, w3_ref, b3_ref, w4_ref, b4_ref,
                wf1_ref, bf1_ref, wf2_ref, bf2_ref, wf3_ref, bf3_ref,
                out_ref):
    k = pl.program_id(0)

    @pl.when(k == 0)
    def _():
        out_ref[...] = jnp.zeros_like(out_ref)

    # conv1 partial sum for this K-chunk, on the VPU.
    # x_ref : (N, R, C) bf16   w1_ref : (4, R, C) bf16   (R=16 sublanes dense)
    xs = x_ref[...].astype(jnp.float32)                  # (N, R, C)
    cols = []
    for c in range(4):                                   # 4 conv1 output channels
        wc = w1_ref[c].astype(jnp.float32)               # (R, C)
        prod = xs * wc[None, :, :]                       # (N, R, C)
        s = jnp.sum(prod, axis=2)                        # lane reduce   -> (N, R)
        cols.append(jnp.sum(s, axis=1, keepdims=True))   # sublane reduce-> (N, 1)
    out_ref[...] += jnp.concatenate(cols, axis=1)        # accumulate (N, 4) in f32

    @pl.when(k == pl.num_programs(0) - 1)
    def _():
        relu = lambda v: jnp.maximum(v, 0.0)
        dot = lambda a, b: jnp.dot(a, b, preferred_element_type=jnp.float32)

        # MaxPool2d(2, 2, padding=1) on a 1x1 spatial map is the identity.
        y = relu(out_ref[...] + b1_ref[...])             # conv1 + relu + pool -> (N, 4)
        y = relu(dot(y, w2_ref[...]) + b2_ref[...])      # conv2 (1x1) + relu + pool
        y = relu(dot(y, w3_ref[...]) + b3_ref[...])      # conv3 (1x1) + relu + pool
        y = relu(dot(y, w4_ref[...]) + b4_ref[...])      # conv4 (1x1) + relu + pool
        # torch.flatten(x, 1): (N, 100, 1, 1) -> (N, 100); already that shape.
        y = relu(dot(y, wf1_ref[...]) + bf1_ref[...])    # fc1 + relu
        y = relu(dot(y, wf2_ref[...]) + bf2_ref[...])    # fc2 + relu
        y = relu(dot(y, wf3_ref[...]) + bf3_ref[...])    # fc3 + relu
        # TODO(synk): the original forward calls self.fc3 AGAIN on this
        # 4-feature tensor, which is a shape error in PyTorch (fc3 expects 32
        # inputs); omitted to keep a runnable forward.
        out_ref[...] = y.astype(out_ref.dtype)


def cnn2_forward(x_nchw, params, *, grid_steps=2, sublanes_per_step=16):
    N = x_nchw.shape[0]
    K = x_nchw.shape[1] * x_nchw.shape[2] * x_nchw.shape[3]   # 3*224*224 = 150528

    (w1, b1, w2, b2, w3, b3, w4, b4, wf1, bf1, wf2, bf2, wf3, bf3) = params
    assert w1.shape == (4, K)

    G, R = grid_steps, sublanes_per_step
    rows = G * R
    assert K % rows == 0 and R % 8 == 0
    C = K // rows                                             # 4704 lanes per row

    # Fold K into (rows, lanes) for both streamed operands (same row-major
    # reshape on both sides preserves the elementwise pairing), and stream bf16.
    x_s = x_nchw.reshape(N, rows, C).astype(jnp.bfloat16)     # (N, 32, 4704)
    w1_s = w1.reshape(4, rows, C).astype(jnp.bfloat16)        # (4, 32, 4704)

    full = lambda a: pl.BlockSpec(a.shape, lambda k: (0,) * a.ndim)
    grid_spec = pltpu.PrefetchScalarGridSpec(
        num_scalar_prefetch=0,
        grid=(G,),
        in_specs=[
            pl.BlockSpec((N, R, C), lambda k: (0, k, 0)),     # x chunk (dense)
            pl.BlockSpec((4, R, C), lambda k: (0, k, 0)),     # w1 chunk (dense)
            full(b1),
            full(w2), full(b2), full(w3), full(b3), full(w4), full(b4),
            full(wf1), full(bf1), full(wf2), full(bf2), full(wf3), full(bf3),
        ],
        out_specs=pl.BlockSpec((N, 4), lambda k: (0, 0)),
    )

    return pl.pallas_call(
        cnn2_kernel,
        out_shape=jax.ShapeDtypeStruct((N, 4), jnp.float32),
        grid_spec=grid_spec,
        compiler_params=pltpu.CompilerParams(
            dimension_semantics=("arbitrary",),
            vmem_limit_bytes=32 * 1024 * 1024,
        ),
    )(x_s, w1_s, b1, w2, b2, w3, b3, w4, b4,
      wf1, bf1, wf2, bf2, wf3, bf3)


def init_params(key):
    """Deterministic PyTorch-style uniform(-1/sqrt(fan_in), +) init."""
    def lin(key, fan_in, fan_out, w_shape=None):
        kw, kb = jax.random.split(key)
        bound = 1.0 / np.sqrt(fan_in)
        shape = (fan_in, fan_out) if w_shape is None else w_shape
        w = jax.random.uniform(kw, shape, jnp.float32, -bound, bound)
        b = jax.random.uniform(kb, (1, fan_out), jnp.float32, -bound, bound)
        return w, b

    keys = jax.random.split(key, 7)
    K = 3 * 224 * 224
    # conv1: torch weight (4, 3, 224, 224) flattened out-channel-major -> (4, K)
    w1, b1 = lin(keys[0], K, 4, w_shape=(4, K))
    w2, b2 = lin(keys[1], 4, 50)      # conv2 1x1: (50,4,1,1) -> (4,50)
    w3, b3 = lin(keys[2], 50, 4)      # conv3 1x1
    w4, b4 = lin(keys[3], 4, 100)     # conv4 1x1
    wf1, bf1 = lin(keys[4], 100, 4)   # fc1
    wf2, bf2 = lin(keys[5], 4, 32)    # fc2
    wf3, bf3 = lin(keys[6], 32, 4)    # fc3
    return (w1, b1, w2, b2, w3, b3, w4, b4, wf1, bf1, wf2, bf2, wf3, bf3)


def cnn2_reference(x_nchw, params):
    """Pure-JAX reference of the same (runnable) forward semantics.

    conv1 operands are quantized to bf16 exactly as the kernel streams them,
    so the assert isolates kernel correctness from the bf16 design choice.
    """
    (w1, b1, w2, b2, w3, b3, w4, b4, wf1, bf1, wf2, bf2, wf3, bf3) = params
    relu = lambda v: jnp.maximum(v, 0.0)
    N = x_nchw.shape[0]
    xq = x_nchw.reshape(N, -1).astype(jnp.bfloat16).astype(jnp.float32)
    wq = w1.astype(jnp.bfloat16).astype(jnp.float32)
    y = relu(xq @ wq.T + b1)
    y = relu(y @ w2 + b2)
    y = relu(y @ w3 + b3)
    y = relu(y @ w4 + b4)
    y = relu(y @ wf1 + bf1)
    y = relu(y @ wf2 + bf2)
    y = relu(y @ wf3 + bf3)
    return y


if __name__ == "__main__":
    key = jax.random.PRNGKey(0)
    kx, kp = jax.random.split(key)
    # conv1 has a 224x224 kernel, so the input spatial size must be 224.
    x = jax.random.normal(kx, (2, 3, 224, 224), jnp.float32)
    params = init_params(kp)

    out = cnn2_forward(x, params)
    out = jax.block_until_ready(out)

    ref = cnn2_reference(x, params)
    np.testing.assert_allclose(np.asarray(out), np.asarray(ref),
                               rtol=1e-2, atol=1e-2)
    print("KERNEL_OK")
</pallas_src>

<mosaic_0001>
module attributes {stable_mosaic.version = 11 : i64} {
  func.func @cnn2_kernel(%arg0: i32, %arg1: memref<2x16x4704xbf16, #tpu.memory_space<vmem>>, %arg2: memref<4x16x4704xbf16, #tpu.memory_space<vmem>>, %arg3: memref<1x4xf32, #tpu.memory_space<vmem>>, %arg4: memref<4x50xf32, #tpu.memory_space<vmem>>, %arg5: memref<1x50xf32, #tpu.memory_space<vmem>>, %arg6: memref<50x4xf32, #tpu.memory_space<vmem>>, %arg7: memref<1x4xf32, #tpu.memory_space<vmem>>, %arg8: memref<4x100xf32, #tpu.memory_space<vmem>>, %arg9: memref<1x100xf32, #tpu.memory_space<vmem>>, %arg10: memref<100x4xf32, #tpu.memory_space<vmem>>, %arg11: memref<1x4xf32, #tpu.memory_space<vmem>>, %arg12: memref<4x32xf32, #tpu.memory_space<vmem>>, %arg13: memref<1x32xf32, #tpu.memory_space<vmem>>, %arg14: memref<32x4xf32, #tpu.memory_space<vmem>>, %arg15: memref<1x4xf32, #tpu.memory_space<vmem>>, %arg16: memref<2x4xf32, #tpu.memory_space<vmem>>) attributes {dimension_semantics = [#tpu.dimension_semantics<arbitrary>], iteration_bounds = array<i64: 2>, scalar_prefetch = 0 : i64, scratch_operands = 0 : i64, tpu.core_type = #tpu.core_type<tc>, window_params = [{transform_indices = @transform_0, window_bounds = array<i64: 2, 16, 4704>}, {transform_indices = @transform_1, window_bounds = array<i64: 4, 16, 4704>}, {pipeline_mode = #tpu.pipeline_mode<synchronous>, transform_indices = @transform_2, window_bounds = array<i64: 1, 4>}, {pipeline_mode = #tpu.pipeline_mode<synchronous>, transform_indices = @transform_3, window_bounds = array<i64: 4, 50>}, {pipeline_mode = #tpu.pipeline_mode<synchronous>, transform_indices = @transform_4, window_bounds = array<i64: 1, 50>}, {pipeline_mode = #tpu.pipeline_mode<synchronous>, transform_indices = @transform_5, window_bounds = array<i64: 50, 4>}, {pipeline_mode = #tpu.pipeline_mode<synchronous>, transform_indices = @transform_6, window_bounds = array<i64: 1, 4>}, {pipeline_mode = #tpu.pipeline_mode<synchronous>, transform_indices = @transform_7, window_bounds = array<i64: 4, 100>}, {pipeline_mode = #tpu.pipeline_mode<synchronous>, transform_indices = @transform_8, window_bounds = array<i64: 1, 100>}, {pipeline_mode = #tpu.pipeline_mode<synchronous>, transform_indices = @transform_9, window_bounds = array<i64: 100, 4>}, {pipeline_mode = #tpu.pipeline_mode<synchronous>, transform_indices = @transform_10, window_bounds = array<i64: 1, 4>}, {pipeline_mode = #tpu.pipeline_mode<synchronous>, transform_indices = @transform_11, window_bounds = array<i64: 4, 32>}, {pipeline_mode = #tpu.pipeline_mode<synchronous>, transform_indices = @transform_12, window_bounds = array<i64: 1, 32>}, {pipeline_mode = #tpu.pipeline_mode<synchronous>, transform_indices = @transform_13, window_bounds = array<i64: 32, 4>}, {pipeline_mode = #tpu.pipeline_mode<synchronous>, transform_indices = @transform_14, window_bounds = array<i64: 1, 4>}, {pipeline_mode = #tpu.pipeline_mode<synchronous>, transform_indices = @transform_15, window_bounds = array<i64: 2, 4>}]} {
    %c0_i32 = arith.constant 0 : i32
    %0 = arith.cmpi eq, %arg0, %c0_i32 : i32
    %1 = arith.extui %0 : i1 to i32
    %c0_i32_0 = arith.constant 0 : i32
    %2 = arith.cmpi ne, %1, %c0_i32_0 : i32
    scf.if %2 {
      %cst_24 = arith.constant 0.000000e+00 : f32
      %48 = vector.broadcast %cst_24 : f32 to vector<2x4xf32>
      %c0_25 = arith.constant 0 : index
      %c0_26 = arith.constant 0 : index
      %49 = vector.load %arg16[%c0_25, %c0_26] : memref<2x4xf32, #tpu.memory_space<vmem>>, vector<2x4xf32>
      tpu.vector_store %arg16[%c0_25, %c0_26], %48 {strides = array<i32>} : memref<2x4xf32, #tpu.memory_space<vmem>>, vector<2x4xf32>,
    } else {
    }
    %c0 = arith.constant 0 : index
    %c0_1 = arith.constant 0 : index
    %c0_2 = arith.constant 0 : index
    %3 = vector.load %arg1[%c0, %c0_1, %c0_2] : memref<2x16x4704xbf16, #tpu.memory_space<vmem>>, vector<2x16x4704xbf16>
    %4 = arith.extf %3 : vector<2x16x4704xbf16> to vector<2x16x4704xf32>
    %c0_3 = arith.constant 0 : index
    %c0_4 = arith.constant 0 : index
    %c0_5 = arith.constant 0 : index
    %5 = vector.load %arg2[%c0_3, %c0_4, %c0_5] : memref<4x16x4704xbf16, #tpu.memory_space<vmem>>, vector<1x16x4704xbf16>
    %6 = vector.shape_cast %5 : vector<1x16x4704xbf16> to vector<16x4704xbf16>
    %7 = arith.extf %6 : vector<16x4704xbf16> to vector<16x4704xf32>
    %8 = vector.shape_cast %7 : vector<16x4704xf32> to vector<1x16x4704xf32>
    %9 = vector.broadcast %8 : vector<1x16x4704xf32> to vector<2x16x4704xf32>
    %10 = arith.mulf %4, %9 : vector<2x16x4704xf32>
    %cst = arith.constant dense<0.000000e+00> : vector<2x16xf32>
    %11 = vector.multi_reduction <add>, %10, %cst [2] : vector<2x16x4704xf32> to vector<2x16xf32>
    %cst_6 = arith.constant dense<0.000000e+00> : vector<2xf32>
    %12 = vector.multi_reduction <add>, %11, %cst_6 [1] : vector<2x16xf32> to vector<2xf32>
    %13 = vector.shape_cast %12 : vector<2xf32> to vector<2x1xf32>
    %c1 = arith.constant 1 : index
    %c0_7 = arith.constant 0 : index
    %c0_8 = arith.constant 0 : index
    %14 = vector.load %arg2[%c1, %c0_7, %c0_8] : memref<4x16x4704xbf16, #tpu.memory_space<vmem>>, vector<1x16x4704xbf16>
    %15 = vector.shape_cast %14 : vector<1x16x4704xbf16> to vector<16x4704xbf16>
    %16 = arith.extf %15 : vector<16x4704xbf16> to vector<16x4704xf32>
    %17 = vector.shape_cast %16 : vector<16x4704xf32> to vector<1x16x4704xf32>
    %18 = vector.broadcast %17 : vector<1x16x4704xf32> to vector<2x16x4704xf32>
    %19 = arith.mulf %4, %18 : vector<2x16x4704xf32>
    %cst_9 = arith.constant dense<0.000000e+00> : vector<2x16xf32>
    %20 = vector.multi_reduction <add>, %19, %cst_9 [2] : vector<2x16x4704xf32> to vector<2x16xf32>
    %cst_10 = arith.constant dense<0.000000e+00> : vector<2xf32>
    %21 = vector.multi_reduction <add>, %20, %cst_10 [1] : vector<2x16xf32> to vector<2xf32>
    %22 = vector.shape_cast %21 : vector<2xf32> to vector<2x1xf32>
    %c2 = arith.constant 2 : index
    %c0_11 = arith.constant 0 : index
    %c0_12 = arith.constant 0 : index
    %23 = vector.load %arg2[%c2, %c0_11, %c0_12] : memref<4x16x4704xbf16, #tpu.memory_space<vmem>>, vector<1x16x4704xbf16>
    %24 = vector.shape_cast %23 : vector<1x16x4704xbf16> to vector<16x4704xbf16>
    %25 = arith.extf %24 : vector<16x4704xbf16> to vector<16x4704xf32>
    %26 = vector.shape_cast %25 : vector<16x4704xf32> to vector<1x16x4704xf32>
    %27 = vector.broadcast %26 : vector<1x16x4704xf32> to vector<2x16x4704xf32>
    %28 = arith.mulf %4, %27 : vector<2x16x4704xf32>
    %cst_13 = arith.constant dense<0.000000e+00> : vector<2x16xf32>
    %29 = vector.multi_reduction <add>, %28, %cst_13 [2] : vector<2x16x4704xf32> to vector<2x16xf32>
    %cst_14 = arith.constant dense<0.000000e+00> : vector<2xf32>
    %30 = vector.multi_reduction <add>, %29, %cst_14 [1] : vector<2x16xf32> to vector<2xf32>
    %31 = vector.shape_cast %30 : vector<2xf32> to vector<2x1xf32>
    %c3 = arith.constant 3 : index
    %c0_15 = arith.constant 0 : index
    %c0_16 = arith.constant 0 : index
    %32 = vector.load %arg2[%c3, %c0_15, %c0_16] : memref<4x16x4704xbf16, #tpu.memory_space<vmem>>, vector<1x16x4704xbf16>
    %33 = vector.shape_cast %32 : vector<1x16x4704xbf16> to vector<16x4704xbf16>
    %34 = arith.extf %33 : vector<16x4704xbf16> to vector<16x4704xf32>
    %35 = vector.shape_cast %34 : vector<16x4704xf32> to vector<1x16x4704xf32>
    %36 = vector.broadcast %35 : vector<1x16x4704xf32> to vector<2x16x4704xf32>
    %37 = arith.mulf %4, %36 : vector<2x16x4704xf32>
    %cst_17 = arith.constant dense<0.000000e+00> : vector<2x16xf32>
    %38 = vector.multi_reduction <add>, %37, %cst_17 [2] : vector<2x16x4704xf32> to vector<2x16xf32>
    %cst_18 = arith.constant dense<0.000000e+00> : vector<2xf32>
    %39 = vector.multi_reduction <add>, %38, %cst_18 [1] : vector<2x16xf32> to vector<2xf32>
    %40 = vector.shape_cast %39 : vector<2xf32> to vector<2x1xf32>
    %c0_19 = arith.constant 0 : index
    %c0_20 = arith.constant 0 : index
    %41 = vector.load %arg16[%c0_19, %c0_20] : memref<2x4xf32, #tpu.memory_space<vmem>>, vector<2x4xf32>
    %42 = tpu.concatenate %13, %22, %31, %40 in 1 : vector<2x1xf32>, vector<2x1xf32>, vector<2x1xf32>, vector<2x1xf32> -> vector<2x4xf32>
    %43 = arith.addf %41, %42 : vector<2x4xf32>
    %c0_21 = arith.constant 0 : index
    %c0_22 = arith.constant 0 : index
    %44 = vector.load %arg16[%c0_21, %c0_22] : memref<2x4xf32, #tpu.memory_space<vmem>>, vector<2x4xf32>
    tpu.vector_store %arg16[%c0_21, %c0_22], %43 {strides = array<i32>} : memref<2x4xf32, #tpu.memory_space<vmem>>, vector<2x4xf32>,
    %c1_i32 = arith.constant 1 : i32
    %45 = arith.cmpi eq, %arg0, %c1_i32 : i32
    %46 = arith.extui %45 : i1 to i32
    %c0_i32_23 = arith.constant 0 : i32
    %47 = arith.cmpi ne, %46, %c0_i32_23 : i32
    scf.if %47 {
      %c0_24 = arith.constant 0 : index
      %c0_25 = arith.constant 0 : index
      %48 = vector.load %arg16[%c0_24, %c0_25] : memref<2x4xf32, #tpu.memory_space<vmem>>, vector<2x4xf32>
      %c0_26 = arith.constant 0 : index
      %c0_27 = arith.constant 0 : index
      %49 = vector.load %arg3[%c0_26, %c0_27] : memref<1x4xf32, #tpu.memory_space<vmem>>, vector<1x4xf32>
      %50 = vector.broadcast %49 : vector<1x4xf32> to vector<2x4xf32>
      %51 = arith.addf %48, %50 : vector<2x4xf32>
      %cst_28 = arith.constant 0.000000e+00 : f32
      %52 = vector.broadcast %cst_28 : f32 to vector<2x4xf32>
      %53 = arith.maximumf %51, %52 : vector<2x4xf32>
      %c0_29 = arith.constant 0 : index
      %c0_30 = arith.constant 0 : index
      %54 = vector.load %arg4[%c0_29, %c0_30] : memref<4x50xf32, #tpu.memory_space<vmem>>, vector<4x50xf32>
      %cst_31 = arith.constant dense<0.000000e+00> : vector<2x50xf32>
      %55 = tpu.matmul %53, %54, %cst_31 {dimension_numbers = #tpu.dot_dimension_numbers<[1], [0], [0], [1], [0, 0, 1, 1], [], []>} : vector<2x4xf32>, vector<4x50xf32>, vector<2x50xf32> -> vector<2x50xf32>
      %c0_32 = arith.constant 0 : index
      %c0_33 = arith.constant 0 : index
      %56 = vector.load %arg5[%c0_32, %c0_33] : memref<1x50xf32, #tpu.memory_space<vmem>>, vector<1x50xf32>
      %57 = vector.broadcast %56 : vector<1x50xf32> to vector<2x50xf32>
      %58 = arith.addf %55, %57 : vector<2x50xf32>
      %cst_34 = arith.constant 0.000000e+00 : f32
      %59 = vector.broadcast %cst_34 : f32 to vector<2x50xf32>
      %60 = arith.maximumf %58, %59 : vector<2x50xf32>
      %c0_35 = arith.constant 0 : index
      %c0_36 = arith.constant 0 : index
      %61 = vector.load %arg6[%c0_35, %c0_36] : memref<50x4xf32, #tpu.memory_space<vmem>>, vector<50x4xf32>
      %cst_37 = arith.constant dense<0.000000e+00> : vector<2x4xf32>
      %62 = tpu.matmul %60, %61, %cst_37 {dimension_numbers = #tpu.dot_dimension_numbers<[1], [0], [0], [1], [0, 0, 1, 1], [], []>} : vector<2x50xf32>, vector<50x4xf32>, vector<2x4xf32> -> vector<2x4xf32>
      %c0_38 = arith.constant 0 : index
      %c0_39 = arith.constant 0 : index
      %63 = vector.load %arg7[%c0_38, %c0_39] : memref<1x4xf32, #tpu.memory_space<vmem>>, vector<1x4xf32>
      %64 = vector.broadcast %63 : vector<1x4xf32> to vector<2x4xf32>
      %65 = arith.addf %62, %64 : vector<2x4xf32>
      %cst_40 = arith.constant 0.000000e+00 : f32
      %66 = vector.broadcast %cst_40 : f32 to vector<2x4xf32>
      %67 = arith.maximumf %65, %66 : vector<2x4xf32>
      %c0_41 = arith.constant 0 : index
      %c0_42 = arith.constant 0 : index
      %68 = vector.load %arg8[%c0_41, %c0_42] : memref<4x100xf32, #tpu.memory_space<vmem>>, vector<4x100xf32>
      %cst_43 = arith.constant dense<0.000000e+00> : vector<2x100xf32>
      %69 = tpu.matmul %67, %68, %cst_43 {dimension_numbers = #tpu.dot_dimension_numbers<[1], [0], [0], [1], [0, 0, 1, 1], [], []>} : vector<2x4xf32>, vector<4x100xf32>, vector<2x100xf32> -> vector<2x100xf32>
      %c0_44 = arith.constant 0 : index
      %c0_45 = arith.constant 0 : index
      %70 = vector.load %arg9[%c0_44, %c0_45] : memref<1x100xf32, #tpu.memory_space<vmem>>, vector<1x100xf32>
      %71 = vector.broadcast %70 : vector<1x100xf32> to vector<2x100xf32>
      %72 = arith.addf %69, %71 : vector<2x100xf32>
      %cst_46 = arith.constant 0.000000e+00 : f32
      %73 = vector.broadcast %cst_46 : f32 to vector<2x100xf32>
      %74 = arith.maximumf %72, %73 : vector<2x100xf32>
      %c0_47 = arith.constant 0 : index
      %c0_48 = arith.constant 0 : index
      %75 = vector.load %arg10[%c0_47, %c0_48] : memref<100x4xf32, #tpu.memory_space<vmem>>, vector<100x4xf32>
      %cst_49 = arith.constant dense<0.000000e+00> : vector<2x4xf32>
      %76 = tpu.matmul %74, %75, %cst_49 {dimension_numbers = #tpu.dot_dimension_numbers<[1], [0], [0], [1], [0, 0, 1, 1], [], []>} : vector<2x100xf32>, vector<100x4xf32>, vector<2x4xf32> -> vector<2x4xf32>
      %c0_50 = arith.constant 0 : index
      %c0_51 = arith.constant 0 : index
      %77 = vector.load %arg11[%c0_50, %c0_51] : memref<1x4xf32, #tpu.memory_space<vmem>>, vector<1x4xf32>
      %78 = vector.broadcast %77 : vector<1x4xf32> to vector<2x4xf32>
      %79 = arith.addf %76, %78 : vector<2x4xf32>
      %cst_52 = arith.constant 0.000000e+00 : f32
      %80 = vector.broadcast %cst_52 : f32 to vector<2x4xf32>
      %81 = arith.maximumf %79, %80 : vector<2x4xf32>
      %c0_53 = arith.constant 0 : index
      %c0_54 = arith.constant 0 : index
      %82 = vector.load %arg12[%c0_53, %c0_54] : memref<4x32xf32, #tpu.memory_space<vmem>>, vector<4x32xf32>
      %cst_55 = arith.constant dense<0.000000e+00> : vector<2x32xf32>
      %83 = tpu.matmul %81, %82, %cst_55 {dimension_numbers = #tpu.dot_dimension_numbers<[1], [0], [0], [1], [0, 0, 1, 1], [], []>} : vector<2x4xf32>, vector<4x32xf32>, vector<2x32xf32> -> vector<2x32xf32>
      %c0_56 = arith.constant 0 : index
      %c0_57 = arith.constant 0 : index
      %84 = vector.load %arg13[%c0_56, %c0_57] : memref<1x32xf32, #tpu.memory_space<vmem>>, vector<1x32xf32>
      %85 = vector.broadcast %84 : vector<1x32xf32> to vector<2x32xf32>
      %86 = arith.addf %83, %85 : vector<2x32xf32>
      %cst_58 = arith.constant 0.000000e+00 : f32
      %87 = vector.broadcast %cst_58 : f32 to vector<2x32xf32>
      %88 = arith.maximumf %86, %87 : vector<2x32xf32>
      %c0_59 = arith.constant 0 : index
      %c0_60 = arith.constant 0 : index
      %89 = vector.load %arg14[%c0_59, %c0_60] : memref<32x4xf32, #tpu.memory_space<vmem>>, vector<32x4xf32>
      %cst_61 = arith.constant dense<0.000000e+00> : vector<2x4xf32>
      %90 = tpu.matmul %88, %89, %cst_61 {dimension_numbers = #tpu.dot_dimension_numbers<[1], [0], [0], [1], [0, 0, 1, 1], [], []>} : vector<2x32xf32>, vector<32x4xf32>, vector<2x4xf32> -> vector<2x4xf32>
      %c0_62 = arith.constant 0 : index
      %c0_63 = arith.constant 0 : index
      %91 = vector.load %arg15[%c0_62, %c0_63] : memref<1x4xf32, #tpu.memory_space<vmem>>, vector<1x4xf32>
      %92 = vector.broadcast %91 : vector<1x4xf32> to vector<2x4xf32>
      %93 = arith.addf %90, %92 : vector<2x4xf32>
      %cst_64 = arith.constant 0.000000e+00 : f32
      %94 = vector.broadcast %cst_64 : f32 to vector<2x4xf32>
      %95 = arith.maximumf %93, %94 : vector<2x4xf32>
      %c0_65 = arith.constant 0 : index
      %c0_66 = arith.constant 0 : index
      %96 = vector.load %arg16[%c0_65, %c0_66] : memref<2x4xf32, #tpu.memory_space<vmem>>, vector<2x4xf32>
      tpu.vector_store %arg16[%c0_65, %c0_66], %95 {strides = array<i32>} : memref<2x4xf32, #tpu.memory_space<vmem>>, vector<2x4xf32>,
    } else {
    }
    return
  }
  func.func @transform_0(%arg0: i32) -> (i32, i32, i32) {
    %c0_i32 = arith.constant 0 : i32
    %c0_i32_0 = arith.constant 0 : i32
    %c0_i32_1 = arith.constant 0 : i32
    return %c0_i32, %arg0, %c0_i32_0 : i32, i32, i32
  }
  func.func @transform_1(%arg0: i32) -> (i32, i32, i32) {
    %c0_i32 = arith.constant 0 : i32
    %c0_i32_0 = arith.constant 0 : i32
    %c0_i32_1 = arith.constant 0 : i32
    return %c0_i32, %arg0, %c0_i32_0 : i32, i32, i32
  }
  func.func @transform_2(%arg0: i32) -> (i32, i32) {
    %c0_i32 = arith.constant 0 : i32
    %c0_i32_0 = arith.constant 0 : i32
    %c0_i32_1 = arith.constant 0 : i32
    return %c0_i32, %c0_i32_0 : i32, i32
  }
  func.func @transform_3(%arg0: i32) -> (i32, i32) {
    %c0_i32 = arith.constant 0 : i32
    %c0_i32_0 = arith.constant 0 : i32
    %c0_i32_1 = arith.constant 0 : i32
    return %c0_i32, %c0_i32_0 : i32, i32
  }
  func.func @transform_4(%arg0: i32) -> (i32, i32) {
    %c0_i32 = arith.constant 0 : i32
    %c0_i32_0 = arith.constant 0 : i32
    %c0_i32_1 = arith.constant 0 : i32
    return %c0_i32, %c0_i32_0 : i32, i32
  }
  func.func @transform_5(%arg0: i32) -> (i32, i32) {
    %c0_i32 = arith.constant 0 : i32
    %c0_i32_0 = arith.constant 0 : i32
    %c0_i32_1 = arith.constant 0 : i32
    return %c0_i32, %c0_i32_0 : i32, i32
  }
  func.func @transform_6(%arg0: i32) -> (i32, i32) {
    %c0_i32 = arith.constant 0 : i32
    %c0_i32_0 = arith.constant 0 : i32
    %c0_i32_1 = arith.constant 0 : i32
    return %c0_i32, %c0_i32_0 : i32, i32
  }
  func.func @transform_7(%arg0: i32) -> (i32, i32) {
    %c0_i32 = arith.constant 0 : i32
    %c0_i32_0 = arith.constant 0 : i32
    %c0_i32_1 = arith.constant 0 : i32
    return %c0_i32, %c0_i32_0 : i32, i32
  }
  func.func @transform_8(%arg0: i32) -> (i32, i32) {
    %c0_i32 = arith.constant 0 : i32
    %c0_i32_0 = arith.constant 0 : i32
    %c0_i32_1 = arith.constant 0 : i32
    return %c0_i32, %c0_i32_0 : i32, i32
  }
  func.func @transform_9(%arg0: i32) -> (i32, i32) {
    %c0_i32 = arith.constant 0 : i32
    %c0_i32_0 = arith.constant 0 : i32
    %c0_i32_1 = arith.constant 0 : i32
    return %c0_i32, %c0_i32_0 : i32, i32
  }
  func.func @transform_10(%arg0: i32) -> (i32, i32) {
    %c0_i32 = arith.constant 0 : i32
    %c0_i32_0 = arith.constant 0 : i32
    %c0_i32_1 = arith.constant 0 : i32
    return %c0_i32, %c0_i32_0 : i32, i32
  }
  func.func @transform_11(%arg0: i32) -> (i32, i32) {
    %c0_i32 = arith.constant 0 : i32
    %c0_i32_0 = arith.constant 0 : i32
    %c0_i32_1 = arith.constant 0 : i32
    return %c0_i32, %c0_i32_0 : i32, i32
  }
  func.func @transform_12(%arg0: i32) -> (i32, i32) {
    %c0_i32 = arith.constant 0 : i32
    %c0_i32_0 = arith.constant 0 : i32
    %c0_i32_1 = arith.constant 0 : i32
    return %c0_i32, %c0_i32_0 : i32, i32
  }
  func.func @transform_13(%arg0: i32) -> (i32, i32) {
    %c0_i32 = arith.constant 0 : i32
    %c0_i32_0 = arith.constant 0 : i32
    %c0_i32_1 = arith.constant 0 : i32
    return %c0_i32, %c0_i32_0 : i32, i32
  }
  func.func @transform_14(%arg0: i32) -> (i32, i32) {
    %c0_i32 = arith.constant 0 : i32
    %c0_i32_0 = arith.constant 0 : i32
    %c0_i32_1 = arith.constant 0 : i32
    return %c0_i32, %c0_i32_0 : i32, i32
  }
  func.func @transform_15(%arg0: i32) -> (i32, i32) {
    %c0_i32 = arith.constant 0 : i32
    %c0_i32_0 = arith.constant 0 : i32
    %c0_i32_1 = arith.constant 0 : i32
    return %c0_i32, %c0_i32_0 : i32, i32
  }
}

</mosaic_0001>

<llo_original>
// kernel: tpu_custom_call.1
$region0: #{tpu_custom_call.1}
  #allocation0 [shape = 'u32[]', space=smem, size = 0x4, offset = 0x4, fixed_abs, tag = 'smem constant byte address 0x4 - core index']
  #allocation1 [shape = 'u32[144,128]{1,0:T(1,128)}', space=vmem, size = 0x12000, scoped, tag = 'internal scratch']
  #allocation23 [shape = 's32[]', space=sflag, size = 0x4, offset = 0, fixed_abs, tag = 'sflag constant byte address 0x0 - dummy sync flag']
  #allocation25 [shape = 's32[]', space=sflag, size = 0x4, offset = 0, fixed_abs, tag = 'sflag constant byte address 0x0 - dummy sync flag']
  %s0 = inlined_call_operand.hbm [shape: bf16[2,32,4704], index: 0, kind: input, shape index: {}]
  %s1 = inlined_call_operand.hbm [shape: bf16[4,32,4704], index: 1, kind: input, shape index: {}]
  %s2 = inlined_call_operand.hbm [shape: f32[1,4], index: 2, kind: input, shape index: {}]
  %s3 = inlined_call_operand.hbm [shape: f32[4,50], index: 3, kind: input, shape index: {}]
  %s4 = inlined_call_operand.hbm [shape: f32[1,50], index: 4, kind: input, shape index: {}]
  %s5 = inlined_call_operand.vmem [shape: f32[50,4], index: 5, kind: input, shape index: {}]
  %s6 = inlined_call_operand.hbm [shape: f32[1,4], index: 6, kind: input, shape index: {}]
  %s7 = inlined_call_operand.hbm [shape: f32[4,100], index: 7, kind: input, shape index: {}]
  %s8 = inlined_call_operand.hbm [shape: f32[1,100], index: 8, kind: input, shape index: {}]
  %s9 = inlined_call_operand.vmem [shape: f32[100,4], index: 9, kind: input, shape index: {}]
  %s10 = inlined_call_operand.hbm [shape: f32[1,4], index: 10, kind: input, shape index: {}]
  %s11 = inlined_call_operand.hbm [shape: f32[4,32], index: 11, kind: input, shape index: {}]
  %s12 = inlined_call_operand.hbm [shape: f32[1,32], index: 12, kind: input, shape index: {}]
  %s13 = inlined_call_operand.vmem [shape: f32[32,4], index: 13, kind: input, shape index: {}]
  %s14 = inlined_call_operand.hbm [shape: f32[1,4], index: 14, kind: input, shape index: {}]
  %s15 = inlined_call_operand.hbm [shape: f32[2,4], index: 15, kind: output, shape index: {}]
  %s16 = sld [smem:[#allocation0]]
  $region149: #{tpu_custom_call.1} parent=0
    _
  %s18 = ssub.s32 1, %s16
  %s19 = scalar_select 0, %s18, %s16
  $region1: #{tpu_custom_call.1} parent=0
    #allocation2 [shape = 'u8[606208]{0}', space=vmem, size = 0x94000, scoped, tag = 'input window, operand 0']
    #allocation3 [shape = 's32[2]{0}', space=sflag, size = 0x8, scoped, tag = 'scoped memory for tpu_custom_call.1']
    #allocation4 [shape = 's32[2]{0}', space=sflag, size = 0x8, scoped, tag = 'scoped memory for tpu_custom_call.1']
    #allocation5 [shape = 'u8[1212416]{0}', space=vmem, size = 0x128000, scoped, tag = 'input window, operand 1']
    #allocation6 [shape = 's32[2]{0}', space=sflag, size = 0x8, scoped, tag = 'scoped memory for tpu_custom_call.1']
    #allocation7 [shape = 'u8[512]{0}', space=vmem, size = 0x400, scoped, tag = 'input window, operand 2, single buffered']
    #allocation8 [shape = 'u8[2048]{0}', space=vmem, size = 0x800, scoped, tag = 'input window, operand 3, single buffered']
    #allocation9 [shape = 's32[1]{0}', space=sflag, size = 0x4, scoped, tag = 'scoped memory for tpu_custom_call.1']
    #allocation10 [shape = 'u8[512]{0}', space=vmem, size = 0x400, scoped, tag = 'input window, operand 4, single buffered']
    #allocation11 [shape = 'u8[512]{0}', space=vmem, size = 0x400, scoped, tag = 'input window, operand 6, single buffered']
    #allocation12 [shape = 's32[1]{0}', space=sflag, size = 0x4, scoped, tag = 'scoped memory for tpu_custom_call.1']
    #allocation13 [shape = 'u8[2048]{0}', space=vmem, size = 0x800, scoped, tag = 'input window, operand 7, single buffered']
    #allocation14 [shape = 'u8[512]{0}', space=vmem, size = 0x400, scoped, tag = 'input window, operand 8, single buffered']
    #allocation15 [shape = 's32[1]{0}', space=sflag, size = 0x4, scoped, tag = 'scoped memory for tpu_custom_call.1']
    #allocation16 [shape = 'u8[512]{0}', space=vmem, size = 0x400, scoped, tag = 'input window, operand 10, single buffered']
    #allocation17 [shape = 'u8[2048]{0}', space=vmem, size = 0x800, scoped, tag = 'input window, operand 11, single buffered']
    #allocation18 [shape = 's32[1]{0}', space=sflag, size = 0x4, scoped, tag = 'scoped memory for tpu_custom_call.1']
    #allocation19 [shape = 'u8[512]{0}', space=vmem, size = 0x400, scoped, tag = 'input window, operand 12, single buffered']
    #allocation20 [shape = 'u8[512]{0}', space=vmem, size = 0x400, scoped, tag = 'input window, operand 14, single buffered']
    #allocation21 [shape = 's32[1]{0}', space=sflag, size = 0x4, scoped, tag = 'scoped memory for tpu_custom_call.1']
    #allocation22 [shape = 'u8[1024]{0}', space=vmem, size = 0x400, scoped, tag = 'output window, operand 0, single buffered']
    %20 = vsyncpa [#allocation3], 0
    %s21 = scalar_lea.sflag [#allocation3], 1
    %22 = vsyncpa %s21, 0
    %23 = vsyncpa [#allocation6], 0
    %s24 = scalar_lea.sflag [#allocation6], 1
    %25 = vsyncpa %s24, 0
    %26 = vsyncpa [#allocation9], 0
    %27 = vsyncpa [#allocation12], 0
    %28 = vsyncpa [#allocation15], 0
    %29 = vsyncpa [#allocation18], 0
    %30 = vsyncpa [#allocation21], 0
    %31 = vsyncpa [#allocation4], 0
    loop: start=0, step=1, limit=4
    $region2: #{tpu_custom_call.1} parent=1 // loop_pre_header
      _
    $region3: #{tpu_custom_call.1} parent=1 // loop_header
      %s33 = sphi 0, %s37
      %p34 = scmp.ge.s32.totalorder %s33, 4
      %s43 = sphi 0, %s45
      %s46 = sphi 0, %s43
      %s47 = sphi 0, %s46
      %s63 = sphi 0, %s47
      %s69 = sphi 0, %s71
      %s72 = sphi 0, %s69
      %s73 = sphi 0, %s72
      %s89 = sphi 0, %s73
      %s93 = sphi 0, %s93
      %s95 = sphi 0, %s93
      %s96 = sphi 0, %s95
      %s110 = sphi 0, %s96
      %s114 = sphi 0, %s114
      %s116 = sphi 0, %s114
      %s117 = sphi 0, %s116
      %s131 = sphi 0, %s117
      %s135 = sphi 0, %s135
      %s137 = sphi 0, %s135
      %s138 = sphi 0, %s137
      %s152 = sphi 0, %s138
      %s156 = sphi 0, %s156
      %s158 = sphi 0, %s156
      %s159 = sphi 0, %s158
      %s173 = sphi 0, %s159
      %s177 = sphi 0, %s177
      %s179 = sphi 0, %s177
      %s180 = sphi 0, %s179
      %s194 = sphi 0, %s180
      %s198 = sphi 0, %s198
      %s200 = sphi 0, %s198
      %s201 = sphi 0, %s200
      %s215 = sphi 0, %s201
      %s219 = sphi 0, %s219
      %s221 = sphi 0, %s219
      %s222 = sphi 0, %s221
      %s236 = sphi 0, %s222
      %s240 = sphi 0, %s240
      %s242 = sphi 0, %s240
      %s243 = sphi 0, %s242
      %s257 = sphi 0, %s243
      %s261 = sphi 0, %s261
      %s263 = sphi 0, %s261
      %s264 = sphi 0, %s263
      %s278 = sphi 0, %s264
      %s282 = sphi 0, %s282
      %s284 = sphi 0, %s282
      %s285 = sphi 0, %s284
      %s299 = sphi 0, %s285
      %s303 = sphi 0, %s303
      %s305 = sphi 0, %s303
      %s306 = sphi 0, %s305
      %s320 = sphi 0, %s306
      %s324 = sphi 0, %s324
      %s326 = sphi 0, %s324
      %s327 = sphi 0, %s326
      %s341 = sphi 0, %s327
      %s345 = sphi 0, %s345
      %s347 = sphi 0, %s345
      %s348 = sphi 0, %s347
      %s362 = sphi 0, %s348
      %s366 = sphi 0, %s366
      %s368 = sphi 0, %s366
      %s369 = sphi 0, %s368
      %s383 = sphi 0, %s369
    $region4: #{tpu_custom_call.1} parent=1 // loop_header_branch
      %36 = sbr.rel (%p34) target = $region8
    $region5: #{tpu_custom_call.1} parent=1 // loop_body
      %s38 = ssub.s32 %s33, 1
      %s39 = ssub.s32 %s33, 2
      %s40 = sadd.s32 %s33, 1
      %s41 = ssub.s32 %s33, %s40
      %p42 = scmp.eq.s32.totalorder %s41, 0
      %s44 = sadd.s32 %s43, 1
      %s45 = scalar_select %p42, %s43, %s44
      %p48 = pneg %p42
      %p49 = scmp.eq.s32.totalorder %s33, 1
      %p50 = por %p48, %p49
      %p51 = scmp.ne.s32.totalorder %s43, %s46
      %p52 = scmp.eq.s32.totalorder %s33, 0
      %p53 = por %p51, %p52
      %p54 = scmp.ne.s32.totalorder %s43, %s46
      %p55 = scmp.eq.s32.totalorder %s38, 1
      %p56 = por %p54, %p55
      %p57 = scmp.ne.s32.totalorder %s46, %s47
      %p58 = scmp.eq.s32.totalorder %s38, 0
      %p59 = por %p57, %p58
      %p60 = scmp.ne.s32.totalorder %s46, %s47
      %p61 = scmp.eq.s32.totalorder %s39, 1
      %p62 = por %p60, %p61
      %p64 = scmp.ne.s32.totalorder %s47, %s63
      %p65 = scmp.eq.s32.totalorder %s39, 0
      %p66 = por %p64, %p65
      %s67 = ssub.s32 %s33, %s40
      %p68 = scmp.eq.s32.totalorder %s67, 0
      %s70 = sadd.s32 %s69, 1
      %s71 = scalar_select %p68, %s69, %s70
      %p74 = pneg %p68
      %p75 = scmp.eq.s32.totalorder %s33, 1
      %p76 = por %p74, %p75
      %p77 = scmp.ne.s32.totalorder %s69, %s72
      %p78 = scmp.eq.s32.totalorder %s33, 0
      %p79 = por %p77, %p78
      %p80 = scmp.ne.s32.totalorder %s69, %s72
      %p81 = scmp.eq.s32.totalorder %s38, 1
      %p82 = por %p80, %p81
      %p83 = scmp.ne.s32.totalorder %s72, %s73
      %p84 = scmp.eq.s32.totalorder %s38, 0
      %p85 = por %p83, %p84
      %p86 = scmp.ne.s32.totalorder %s72, %s73
      %p87 = scmp.eq.s32.totalorder %s39, 1
      %p88 = por %p86, %p87
      %p90 = scmp.ne.s32.totalorder %s73, %s89
      %p91 = scmp.eq.s32.totalorder %s39, 0
      %p92 = por %p90, %p91
      %s94 = sadd.s32 %s93, 1
      %p97 = scmp.eq.s32.totalorder %s33, 1
      %p98 = scmp.ne.s32.totalorder %s93, %s95
      %p99 = scmp.eq.s32.totalorder %s33, 0
      %p100 = por %p98, %p99
      %p101 = scmp.ne.s32.totalorder %s93, %s95
      %p102 = scmp.eq.s32.totalorder %s38, 1
      %p103 = por %p101, %p102
      %p104 = scmp.ne.s32.totalorder %s95, %s96
      %p105 = scmp.eq.s32.totalorder %s38, 0
      %p106 = por %p104, %p105
      %p107 = scmp.ne.s32.totalorder %s95, %s96
      %p108 = scmp.eq.s32.totalorder %s39, 1
      %p109 = por %p107, %p108
      %p111 = scmp.ne.s32.totalorder %s96, %s110
      %p112 = scmp.eq.s32.totalorder %s39, 0
      %p113 = por %p111, %p112
      %s115 = sadd.s32 %s114, 1
      %p118 = scmp.eq.s32.totalorder %s33, 1
      %p119 = scmp.ne.s32.totalorder %s114, %s116
      %p120 = scmp.eq.s32.totalorder %s33, 0
      %p121 = por %p119, %p120
      %p122 = scmp.ne.s32.totalorder %s114, %s116
      %p123 = scmp.eq.s32.totalorder %s38, 1
      %p124 = por %p122, %p123
      %p125 = scmp.ne.s32.totalorder %s116, %s117
      %p126 = scmp.eq.s32.totalorder %s38, 0
      %p127 = por %p125, %p126
      %p128 = scmp.ne.s32.totalorder %s116, %s117
      %p129 = scmp.eq.s32.totalorder %s39, 1
      %p130 = por %p128, %p129
      %p132 = scmp.ne.s32.totalorder %s117, %s131
      %p133 = scmp.eq.s32.totalorder %s39, 0
      %p134 = por %p132, %p133
      %s136 = sadd.s32 %s135, 1
      %p139 = scmp.eq.s32.totalorder %s33, 1
      %p140 = scmp.ne.s32.totalorder %s135, %s137
      %p141 = scmp.eq.s32.totalorder %s33, 0
      %p142 = por %p140, %p141
      %p143 = scmp.ne.s32.totalorder %s135, %s137
      %p144 = scmp.eq.s32.totalorder %s38, 1
      %p145 = por %p143, %p144
      %p146 = scmp.ne.s32.totalorder %s137, %s138
      %p147 = scmp.eq.s32.totalorder %s38, 0
      %p148 = por %p146, %p147
      %p149 = scmp.ne.s32.totalorder %s137, %s138
      %p150 = scmp.eq.s32.totalorder %s39, 1
      %p151 = por %p149, %p150
      %p153 = scmp.ne.s32.totalorder %s138, %s152
      %p154 = scmp.eq.s32.totalorder %s39, 0
      %p155 = por %p153, %p154
      %s157 = sadd.s32 %s156, 1
      %p160 = scmp.eq.s32.totalorder %s33, 1
      %p161 = scmp.ne.s32.totalorder %s156, %s158
      %p162 = scmp.eq.s32.totalorder %s33, 0
      %p163 = por %p161, %p162
      %p164 = scmp.ne.s32.totalorder %s156, %s158
      %p165 = scmp.eq.s32.totalorder %s38, 1
      %p166 = por %p164, %p165
      %p167 = scmp.ne.s32.totalorder %s158, %s159
      %p168 = scmp.eq.s32.totalorder %s38, 0
      %p169 = por %p167, %p168
      %p170 = scmp.ne.s32.totalorder %s158, %s159
      %p171 = scmp.eq.s32.totalorder %s39, 1
      %p172 = por %p170, %p171
      %p174 = scmp.ne.s32.totalorder %s159, %s173
      %p175 = scmp.eq.s32.totalorder %s39, 0
      %p176 = por %p174, %p175
      %s178 = sadd.s32 %s177, 1
      %p181 = scmp.eq.s32.totalorder %s33, 1
      %p182 = scmp.ne.s32.totalorder %s177, %s179
      %p183 = scmp.eq.s32.totalorder %s33, 0
      %p184 = por %p182, %p183
      %p185 = scmp.ne.s32.totalorder %s177, %s179
      %p186 = scmp.eq.s32.totalorder %s38, 1
      %p187 = por %p185, %p186
      %p188 = scmp.ne.s32.totalorder %s179, %s180
      %p189 = scmp.eq.s32.totalorder %s38, 0
      %p190 = por %p188, %p189
      %p191 = scmp.ne.s32.totalorder %s179, %s180
      %p192 = scmp.eq.s32.totalorder %s39, 1
      %p193 = por %p191, %p192
      %p195 = scmp.ne.s32.totalorder %s180, %s194
      %p196 = scmp.eq.s32.totalorder %s39, 0
      %p197 = por %p195, %p196
      %s199 = sadd.s32 %s198, 1
      %p202 = scmp.eq.s32.totalorder %s33, 1
      %p203 = scmp.ne.s32.totalorder %s198, %s200
      %p204 = scmp.eq.s32.totalorder %s33, 0
      %p205 = por %p203, %p204
      %p206 = scmp.ne.s32.totalorder %s198, %s200
      %p207 = scmp.eq.s32.totalorder %s38, 1
      %p208 = por %p206, %p207
      %p209 = scmp.ne.s32.totalorder %s200, %s201
      %p210 = scmp.eq.s32.totalorder %s38, 0
      %p211 = por %p209, %p210
      %p212 = scmp.ne.s32.totalorder %s200, %s201
      %p213 = scmp.eq.s32.totalorder %s39, 1
      %p214 = por %p212, %p213
      %p216 = scmp.ne.s32.totalorder %s201, %s215
      %p217 = scmp.eq.s32.totalorder %s39, 0
      %p218 = por %p216, %p217
      %s220 = sadd.s32 %s219, 1
      %p223 = scmp.eq.s32.totalorder %s33, 1
      %p224 = scmp.ne.s32.totalorder %s219, %s221
      %p225 = scmp.eq.s32.totalorder %s33, 0
      %p226 = por %p224, %p225
      %p227 = scmp.ne.s32.totalorder %s219, %s221
      %p228 = scmp.eq.s32.totalorder %s38, 1
      %p229 = por %p227, %p228
      %p230 = scmp.ne.s32.totalorder %s221, %s222
      %p231 = scmp.eq.s32.totalorder %s38, 0
      %p232 = por %p230, %p231
      %p233 = scmp.ne.s32.totalorder %s221, %s222
      %p234 = scmp.eq.s32.totalorder %s39, 1
      %p235 = por %p233, %p234
      %p237 = scmp.ne.s32.totalorder %s222, %s236
      %p238 = scmp.eq.s32.totalorder %s39, 0
      %p239 = por %p237, %p238
      %s241 = sadd.s32 %s240, 1
      %p244 = scmp.eq.s32.totalorder %s33, 1
      %p245 = scmp.ne.s32.totalorder %s240, %s242
      %p246 = scmp.eq.s32.totalorder %s33, 0
      %p247 = por %p245, %p246
      %p248 = scmp.ne.s32.totalorder %s240, %s242
      %p249 = scmp.eq.s32.totalorder %s38, 1
      %p250 = por %p248, %p249
      %p251 = scmp.ne.s32.totalorder %s242, %s243
      %p252 = scmp.eq.s32.totalorder %s38, 0
      %p253 = por %p251, %p252
      %p254 = scmp.ne.s32.totalorder %s242, %s243
      %p255 = scmp.eq.s32.totalorder %s39, 1
      %p256 = por %p254, %p255
      %p258 = scmp.ne.s32.totalorder %s243, %s257
      %p259 = scmp.eq.s32.totalorder %s39, 0
      %p260 = por %p258, %p259
      %s262 = sadd.s32 %s261, 1
      %p265 = scmp.eq.s32.totalorder %s33, 1
      %p266 = scmp.ne.s32.totalorder %s261, %s263
      %p267 = scmp.eq.s32.totalorder %s33, 0
      %p268 = por %p266, %p267
      %p269 = scmp.ne.s32.totalorder %s261, %s263
      %p270 = scmp.eq.s32.totalorder %s38, 1
      %p271 = por %p269, %p270
      %p272 = scmp.ne.s32.totalorder %s263, %s264
      %p273 = scmp.eq.s32.totalorder %s38, 0
      %p274 = por %p272, %p273
      %p275 = scmp.ne.s32.totalorder %s263, %s264
      %p276 = scmp.eq.s32.totalorder %s39, 1
      %p277 = por %p275, %p276
      %p279 = scmp.ne.s32.totalorder %s264, %s278
      %p280 = scmp.eq.s32.totalorder %s39, 0
      %p281 = por %p279, %p280
      %s283 = sadd.s32 %s282, 1
      %p286 = scmp.eq.s32.totalorder %s33, 1
      %p287 = scmp.ne.s32.totalorder %s282, %s284
      %p288 = scmp.eq.s32.totalorder %s33, 0
      %p289 = por %p287, %p288
      %p290 = scmp.ne.s32.totalorder %s282, %s284
      %p291 = scmp.eq.s32.totalorder %s38, 1
      %p292 = por %p290, %p291
      %p293 = scmp.ne.s32.totalorder %s284, %s285
      %p294 = scmp.eq.s32.totalorder %s38, 0
      %p295 = por %p293, %p294
      %p296 = scmp.ne.s32.totalorder %s284, %s285
      %p297 = scmp.eq.s32.totalorder %s39, 1
      %p298 = por %p296, %p297
      %p300 = scmp.ne.s32.totalorder %s285, %s299
      %p301 = scmp.eq.s32.totalorder %s39, 0
      %p302 = por %p300, %p301
      %s304 = sadd.s32 %s303, 1
      %p307 = scmp.eq.s32.totalorder %s33, 1
      %p308 = scmp.ne.s32.totalorder %s303, %s305
      %p309 = scmp.eq.s32.totalorder %s33, 0
      %p310 = por %p308, %p309
      %p311 = scmp.ne.s32.totalorder %s303, %s305
      %p312 = scmp.eq.s32.totalorder %s38, 1
      %p313 = por %p311, %p312
      %p314 = scmp.ne.s32.totalorder %s305, %s306
      %p315 = scmp.eq.s32.totalorder %s38, 0
      %p316 = por %p314, %p315
      %p317 = scmp.ne.s32.totalorder %s305, %s306
      %p318 = scmp.eq.s32.totalorder %s39, 1
      %p319 = por %p317, %p318
      %p321 = scmp.ne.s32.totalorder %s306, %s320
      %p322 = scmp.eq.s32.totalorder %s39, 0
      %p323 = por %p321, %p322
      %s325 = sadd.s32 %s324, 1
      %p328 = scmp.eq.s32.totalorder %s33, 1
      %p329 = scmp.ne.s32.totalorder %s324, %s326
      %p330 = scmp.eq.s32.totalorder %s33, 0
      %p331 = por %p329, %p330
      %p332 = scmp.ne.s32.totalorder %s324, %s326
      %p333 = scmp.eq.s32.totalorder %s38, 1
      %p334 = por %p332, %p333
      %p335 = scmp.ne.s32.totalorder %s326, %s327
      %p336 = scmp.eq.s32.totalorder %s38, 0
      %p337 = por %p335, %p336
      %p338 = scmp.ne.s32.totalorder %s326, %s327
      %p339 = scmp.eq.s32.totalorder %s39, 1
      %p340 = por %p338, %p339
      %p342 = scmp.ne.s32.totalorder %s327, %s341
      %p343 = scmp.eq.s32.totalorder %s39, 0
      %p344 = por %p342, %p343
      %s346 = sadd.s32 %s345, 1
      %p349 = scmp.eq.s32.totalorder %s33, 1
      %p350 = scmp.ne.s32.totalorder %s345, %s347
      %p351 = scmp.eq.s32.totalorder %s33, 0
      %p352 = por %p350, %p351
      %p353 = scmp.ne.s32.totalorder %s345, %s347
      %p354 = scmp.eq.s32.totalorder %s38, 1
      %p355 = por %p353, %p354
      %p356 = scmp.ne.s32.totalorder %s347, %s348
      %p357 = scmp.eq.s32.totalorder %s38, 0
      %p358 = por %p356, %p357
      %p359 = scmp.ne.s32.totalorder %s347, %s348
      %p360 = scmp.eq.s32.totalorder %s39, 1
      %p361 = por %p359, %p360
      %p363 = scmp.ne.s32.totalorder %s348, %s362
      %p364 = scmp.eq.s32.totalorder %s39, 0
      %p365 = por %p363, %p364
      %s367 = sadd.s32 %s366, 1
      %p370 = scmp.eq.s32.totalorder %s33, 1
      %p371 = scmp.ne.s32.totalorder %s366, %s368
      %p372 = scmp.eq.s32.totalorder %s33, 0
      %p373 = por %p371, %p372
      %p374 = scmp.ne.s32.totalorder %s366, %s368
      %p375 = scmp.eq.s32.totalorder %s38, 1
      %p376 = por %p374, %p375
      %p377 = scmp.ne.s32.totalorder %s368, %s369
      %p378 = scmp.eq.s32.totalorder %s38, 0
      %p379 = por %p377, %p378
      %p380 = scmp.ne.s32.totalorder %s368, %s369
      %p381 = scmp.eq.s32.totalorder %s39, 1
      %p382 = por %p380, %p381
      %p384 = scmp.ne.s32.totalorder %s369, %s383
      %p385 = scmp.eq.s32.totalorder %s39, 0
      %p386 = por %p384, %p385
      %p387 = scmp.le.s32.totalorder 1, %s33
      %p388 = scmp.lt.s32.totalorder %s33, 3
      %p389 = pnand %p387, %p388
      %p390 = pneg %p389
      // Predicated region
      $region9: #{tpu_custom_call.1} parent=5 // pred_check
        _
      $region10: #{tpu_custom_call.1} parent=5 // pred_check_branch
        %392 = sbr.rel (%p389) target = $region12
      $region11: #{tpu_custom_call.1} parent=5 // pred_region
        %s393 = ssub.s32 %s33, 1
        // Predicated region
        $region13: #{tpu_custom_call.1} parent=11 // pred_check
          %p394 = pneg %p106
        $region14: #{tpu_custom_call.1} parent=11 // pred_check_branch
          %396 = sbr.rel (%p394) target = $region16
        $region15: #{tpu_custom_call.1} parent=11 // pred_region
          %s398 = ssub.s32 16, 16
          %399 = vsyncadd [#allocation6], %s398
          %s401 = sshll.u32 [#allocation7], 4
          %s402 = int_to_ptr.vmem [resolvable:$true] %s401
          %404 = dma.hbm_to_vmem [thread:$0]  %s2, 16, %s402, [#allocation6]
        $region16: #{tpu_custom_call.1} parent=11 // pred_fallthru
          _
        // Predicated region
        $region17: #{tpu_custom_call.1} parent=11 // pred_check
          %p405 = pneg %p127
        $region18: #{tpu_custom_call.1} parent=11 // pred_check_branch
          %407 = sbr.rel (%p405) target = $region20
        $region19: #{tpu_custom_call.1} parent=11 // pred_region
          %s409 = ssub.s32 64, 64
          %410 = vsyncadd [#allocation9], %s409
          %s412 = sshll.u32 [#allocation8], 4
          %s413 = int_to_ptr.vmem [resolvable:$true] %s412
          %415 = dma.hbm_to_vmem [thread:$0]  %s3, 64, %s413, [#allocation9]
        $region20: #{tpu_custom_call.1} parent=11 // pred_fallthru
          _
        // Predicated region
        $region21: #{tpu_custom_call.1} parent=11 // pred_check
          %p416 = pneg %p148
        $region22: #{tpu_custom_call.1} parent=11 // pred_check_branch
          %418 = sbr.rel (%p416) target = $region24
        $region23: #{tpu_custom_call.1} parent=11 // pred_region
          %s420 = ssub.s32 16, 16
          %421 = vsyncadd [#allocation9], %s420
          %s423 = sshll.u32 [#allocation10], 4
          %s424 = int_to_ptr.vmem [resolvable:$true] %s423
          %426 = dma.hbm_to_vmem [thread:$0]  %s4, 16, %s424, [#allocation9]
        $region24: #{tpu_custom_call.1} parent=11 // pred_fallthru
          _
        // Predicated region
        $region25: #{tpu_custom_call.1} parent=11 // pred_check
          %p427 = pneg %p169
        $region26: #{tpu_custom_call.1} parent=11 // pred_check_branch
          %429 = sbr.rel (%p427) target = $region28
        $region27: #{tpu_custom_call.1} parent=11 // pred_region
          _
        $region28: #{tpu_custom_call.1} parent=11 // pred_fallthru
          _
        // Predicated region
        $region29: #{tpu_custom_call.1} parent=11 // pred_check
          %p430 = pneg %p190
        $region30: #{tpu_custom_call.1} parent=11 // pred_check_branch
          %432 = sbr.rel (%p430) target = $region32
        $region31: #{tpu_custom_call.1} parent=11 // pred_region
          %s434 = ssub.s32 16, 16
          %435 = vsyncadd [#allocation12], %s434
          %s437 = sshll.u32 [#allocation11], 4
          %s438 = int_to_ptr.vmem [resolvable:$true] %s437
          %440 = dma.hbm_to_vmem [thread:$0]  %s6, 16, %s438, [#allocation12]
        $region32: #{tpu_custom_call.1} parent=11 // pred_fallthru
          _
        // Predicated region
        $region33: #{tpu_custom_call.1} parent=11 // pred_check
          %p441 = pneg %p211
        $region34: #{tpu_custom_call.1} parent=11 // pred_check_branch
          %443 = sbr.rel (%p441) target = $region36
        $region35: #{tpu_custom_call.1} parent=11 // pred_region
          %s445 = ssub.s32 64, 64
          %446 = vsyncadd [#allocation12], %s445
          %s448 = sshll.u32 [#allocation13], 4
          %s449 = int_to_ptr.vmem [resolvable:$true] %s448
          %451 = dma.hbm_to_vmem [thread:$0]  %s7, 64, %s449, [#allocation12]
        $region36: #{tpu_custom_call.1} parent=11 // pred_fallthru
          _
        // Predicated region
        $region37: #{tpu_custom_call.1} parent=11 // pred_check
          %p452 = pneg %p232
        $region38: #{tpu_custom_call.1} parent=11 // pred_check_branch
          %454 = sbr.rel (%p452) target = $region40
        $region39: #{tpu_custom_call.1} parent=11 // pred_region
          %s456 = ssub.s32 16, 16
          %457 = vsyncadd [#allocation15], %s456
          %s459 = sshll.u32 [#allocation14], 4
          %s460 = int_to_ptr.vmem [resolvable:$true] %s459
          %462 = dma.hbm_to_vmem [thread:$0]  %s8, 16, %s460, [#allocation15]
        $region40: #{tpu_custom_call.1} parent=11 // pred_fallthru
          _
        // Predicated region
        $region41: #{tpu_custom_call.1} parent=11 // pred_check
          %p463 = pneg %p253
        $region42: #{tpu_custom_call.1} parent=11 // pred_check_branch
          %465 = sbr.rel (%p463) target = $region44
        $region43: #{tpu_custom_call.1} parent=11 // pred_region
          _
        $region44: #{tpu_custom_call.1} parent=11 // pred_fallthru
          _
        // Predicated region
        $region45: #{tpu_custom_call.1} parent=11 // pred_check
          %p466 = pneg %p274
        $region46: #{tpu_custom_call.1} parent=11 // pred_check_branch
          %468 = sbr.rel (%p466) target = $region48
        $region47: #{tpu_custom_call.1} parent=11 // pred_region
          %s470 = ssub.s32 16, 16
          %471 = vsyncadd [#allocation15], %s470
          %s473 = sshll.u32 [#allocation16], 4
          %s474 = int_to_ptr.vmem [resolvable:$true] %s473
          %476 = dma.hbm_to_vmem [thread:$0]  %s10, 16, %s474, [#allocation15]
        $region48: #{tpu_custom_call.1} parent=11 // pred_fallthru
          _
        // Predicated region
        $region49: #{tpu_custom_call.1} parent=11 // pred_check
          %p477 = pneg %p295
        $region50: #{tpu_custom_call.1} parent=11 // pred_check_branch
          %479 = sbr.rel (%p477) target = $region52
        $region51: #{tpu_custom_call.1} parent=11 // pred_region
          %s481 = ssub.s32 64, 64
          %482 = vsyncadd [#allocation18], %s481
          %s484 = sshll.u32 [#allocation17], 4
          %s485 = int_to_ptr.vmem [resolvable:$true] %s484
          %487 = dma.hbm_to_vmem [thread:$0]  %s11, 64, %s485, [#allocation18]
        $region52: #{tpu_custom_call.1} parent=11 // pred_fallthru
          _
        // Predicated region
        $region53: #{tpu_custom_call.1} parent=11 // pred_check
          %p488 = pneg %p316
        $region54: #{tpu_custom_call.1} parent=11 // pred_check_branch
          %490 = sbr.rel (%p488) target = $region56
        $region55: #{tpu_custom_call.1} parent=11 // pred_region
          %s492 = ssub.s32 16, 16
          %493 = vsyncadd [#allocation18], %s492
          %s495 = sshll.u32 [#allocation19], 4
          %s496 = int_to_ptr.vmem [resolvable:$true] %s495
          %498 = dma.hbm_to_vmem [thread:$0]  %s12, 16, %s496, [#allocation18]
        $region56: #{tpu_custom_call.1} parent=11 // pred_fallthru
          _
        // Predicated region
        $region57: #{tpu_custom_call.1} parent=11 // pred_check
          %p499 = pneg %p337
        $region58: #{tpu_custom_call.1} parent=11 // pred_check_branch
          %501 = sbr.rel (%p499) target = $region60
        $region59: #{tpu_custom_call.1} parent=11 // pred_region
          _
        $region60: #{tpu_custom_call.1} parent=11 // pred_fallthru
          _
        // Predicated region
        $region61: #{tpu_custom_call.1} parent=11 // pred_check
          %p502 = pneg %p358
        $region62: #{tpu_custom_call.1} parent=11 // pred_check_branch
          %504 = sbr.rel (%p502) target = $region64
        $region63: #{tpu_custom_call.1} parent=11 // pred_region
          %s506 = ssub.s32 16, 16
          %507 = vsyncadd [#allocation21], %s506
          %s509 = sshll.u32 [#allocation20], 4
          %s510 = int_to_ptr.vmem [resolvable:$true] %s509
          %512 = dma.hbm_to_vmem [thread:$0]  %s14, 16, %s510, [#allocation21]
        $region64: #{tpu_custom_call.1} parent=11 // pred_fallthru
          _
      $region12: #{tpu_custom_call.1} parent=5 // pred_fallthru
        _
      %p513 = scmp.lt.s32.totalorder %s33, 2
      // Predicated region
      $region65: #{tpu_custom_call.1} parent=5 // pred_check
        %p514 = pneg %p513
      $region66: #{tpu_custom_call.1} parent=5 // pred_check_branch
        %516 = sbr.rel (%p514) target = $region68
      $region67: #{tpu_custom_call.1} parent=5 // pred_region
        // Predicated region
        $region69: #{tpu_custom_call.1} parent=67 // pred_check
          %p517 = pneg %p53
        $region70: #{tpu_custom_call.1} parent=67 // pred_check_branch
          %519 = sbr.rel (%p517) target = $region72
        $region71: #{tpu_custom_call.1} parent=67 // pred_region
          #allocation24 [shape = 'u32[6]{0}', space=smem, size = 0x18, scoped, tag = 'DMA stride descriptor']
          %s520 = sand.u32 %s43, 1
          %s521 = scalar_lea.sflag [#allocation3], %s520
          %s522 = sand.u32 %s43, 1
          %s523 = smul.addr %s522, 592
          %s524 = scalar_lea.vmem [#allocation2], %s523
          %s525 = smul.u32 2, %s33
          %s527 = ssub.s32 9472, 9472
          %528 = vsyncadd %s521, %s527
          %s529 = smul.addr %s525, 37
          %s530 = smul.addr %s529, 64
          %s531 = scalar_lea.hbm %s0, %s530
          %s533 = sshll.u32 1, 14
          %s534 = sxor.u32 4294967295, %s533
          %s536 = sld [smem:[#allocation0]]
          %s537 = sadd.s32 2, %s536
          %s539 = sshll.u32 7, 26
          %s540 = sxor.u32 4294967295, %s539
          %s541 = sand.u32 0, %s540
          %s542 = sshll.u32 %s537, 26
          %s543 = sor.u32 %s541, %s542
          %s544 = sshll.u32 %s524, 4
          %s545 = int_to_ptr.vmem [resolvable:$true] %s544
          %551 = sst [smem:[#allocation24]] 9472
          %s552 = scalar_lea.smem [#allocation24], 1
          %553 = sst [smem:[%s552]] 4736
          %s554 = scalar_lea.smem [#allocation24], 2
          %555 = sst [smem:[%s554]] 2
          %s556 = scalar_lea.smem [#allocation24], 3
          %557 = sst [smem:[%s556]] 2368
          %s558 = scalar_lea.smem [#allocation24], 4
          %559 = sst [smem:[%s558]] 2368
          %s560 = scalar_lea.smem [#allocation24], 5
          %561 = sst [smem:[%s560]] 148
          %563 = dma.general %s531, 9472, %s545, %s521, 131072, [#allocation24], %s543, 0
        $region72: #{tpu_custom_call.1} parent=67 // pred_fallthru
          _
        // Predicated region
        $region73: #{tpu_custom_call.1} parent=67 // pred_check
          %p564 = pneg %p79
        $region74: #{tpu_custom_call.1} parent=67 // pred_check_branch
          %566 = sbr.rel (%p564) target = $region76
        $region75: #{tpu_custom_call.1} parent=67 // pred_region
          #allocation26 [shape = 'u32[6]{0}', space=smem, size = 0x18, scoped, tag = 'DMA stride descriptor']
          %s567 = sand.u32 %s33, 1
          %s568 = scalar_lea.sflag [#allocation6], %s567
          %s569 = sand.u32 %s69, 1
          %s570 = smul.addr %s569, 1184
          %s571 = scalar_lea.vmem [#allocation5], %s570
          %s572 = smul.u32 2, %s33
          %s574 = ssub.s32 18944, 18944
          %575 = vsyncadd %s568, %s574
          %s576 = smul.addr %s572, 37
          %s577 = smul.addr %s576, 64
          %s578 = scalar_lea.hbm %s1, %s577
          %s580 = sshll.u32 1, 14
          %s581 = sxor.u32 4294967295, %s580
          %s583 = sld [smem:[#allocation0]]
          %s584 = sadd.s32 2, %s583
          %s586 = sshll.u32 7, 26
          %s587 = sxor.u32 4294967295, %s586
          %s588 = sand.u32 0, %s587
          %s589 = sshll.u32 %s584, 26
          %s590 = sor.u32 %s588, %s589
          %s591 = sshll.u32 %s571, 4
          %s592 = int_to_ptr.vmem [resolvable:$true] %s591
          %598 = sst [smem:[#allocation26]] 9472
          %s599 = scalar_lea.smem [#allocation26], 1
          %600 = sst [smem:[%s599]] 4736
          %s601 = scalar_lea.smem [#allocation26], 2
          %602 = sst [smem:[%s601]] 2
          %s603 = scalar_lea.smem [#allocation26], 3
          %604 = sst [smem:[%s603]] 2368
          %s605 = scalar_lea.smem [#allocation26], 4
          %606 = sst [smem:[%s605]] 2368
          %s607 = scalar_lea.smem [#allocation26], 5
          %608 = sst [smem:[%s607]] 148
          %610 = dma.general %s578, 18944, %s592, %s568, 131072, [#allocation26], %s590, 0
        $region76: #{tpu_custom_call.1} parent=67 // pred_fallthru
          _
      $region68: #{tpu_custom_call.1} parent=5 // pred_fallthru
        _
      %p611 = scmp.le.s32.totalorder 1, %s33
      %p612 = scmp.lt.s32.totalorder %s33, 3
      %p613 = pnand %p611, %p612
      %p614 = pneg %p613
      // Predicated region
      $region77: #{tpu_custom_call.1} parent=5 // pred_check
        _
      $region78: #{tpu_custom_call.1} parent=5 // pred_check_branch
        %616 = sbr.rel (%p613) target = $region80
      $region79: #{tpu_custom_call.1} parent=5 // pred_region
        %s617 = ssub.s32 %s33, 1
        %s618 = sand.u32 %s46, 1
        %s619 = scalar_lea.sflag [#allocation3], %s618
        %s620 = sand.u32 %s46, 1
        %s621 = smul.addr %s620, 592
        %s622 = scalar_lea.vmem [#allocation2], %s621
        // Predicated region
        $region81: #{tpu_custom_call.1} parent=79 // pred_check
          %p623 = pneg %p59
        $region82: #{tpu_custom_call.1} parent=79 // pred_check_branch
          %625 = sbr.rel (%p623) target = $region84
        $region83: #{tpu_custom_call.1} parent=79 // pred_region
          %626 = dma.done %s619, 9472
        $region84: #{tpu_custom_call.1} parent=79 // pred_fallthru
          _
        %s627 = sand.u32 %s38, 1
        %s628 = scalar_lea.sflag [#allocation6], %s627
        %s629 = sand.u32 %s72, 1
        %s630 = smul.addr %s629, 1184
        %s631 = scalar_lea.vmem [#allocation5], %s630
        // Predicated region
        $region85: #{tpu_custom_call.1} parent=79 // pred_check
          %p632 = pneg %p85
        $region86: #{tpu_custom_call.1} parent=79 // pred_check_branch
          %634 = sbr.rel (%p632) target = $region88
        $region87: #{tpu_custom_call.1} parent=79 // pred_region
          %635 = dma.done %s628, 18944
        $region88: #{tpu_custom_call.1} parent=79 // pred_fallthru
          _
        // Predicated region
        $region89: #{tpu_custom_call.1} parent=79 // pred_check
          %p636 = pneg %p106
        $region90: #{tpu_custom_call.1} parent=79 // pred_check_branch
          %638 = sbr.rel (%p636) target = $region92
        $region91: #{tpu_custom_call.1} parent=79 // pred_region
          %639 = dma.done [#allocation6], 16
        $region92: #{tpu_custom_call.1} parent=79 // pred_fallthru
          _
        // Predicated region
        $region93: #{tpu_custom_call.1} parent=79 // pred_check
          %p640 = pneg %p127
        $region94: #{tpu_custom_call.1} parent=79 // pred_check_branch
          %642 = sbr.rel (%p640) target = $region96
        $region95: #{tpu_custom_call.1} parent=79 // pred_region
          %643 = dma.done [#allocation9], 64
        $region96: #{tpu_custom_call.1} parent=79 // pred_fallthru
          _
        // Predicated region
        $region97: #{tpu_custom_call.1} parent=79 // pred_check
          %p644 = pneg %p148
        $region98: #{tpu_custom_call.1} parent=79 // pred_check_branch
          %646 = sbr.rel (%p644) target = $region100
        $region99: #{tpu_custom_call.1} parent=79 // pred_region
          %647 = dma.done [#allocation9], 16
        $region100: #{tpu_custom_call.1} parent=79 // pred_fallthru
          _
        // Predicated region
        $region101: #{tpu_custom_call.1} parent=79 // pred_check
          %p648 = pneg %p190
        $region102: #{tpu_custom_call.1} parent=79 // pred_check_branch
          %650 = sbr.rel (%p648) target = $region104
        $region103: #{tpu_custom_call.1} parent=79 // pred_region
          %651 = dma.done [#allocation12], 16
        $region104: #{tpu_custom_call.1} parent=79 // pred_fallthru
          _
        // Predicated region
        $region105: #{tpu_custom_call.1} parent=79 // pred_check
          %p652 = pneg %p211
        $region106: #{tpu_custom_call.1} parent=79 // pred_check_branch
          %654 = sbr.rel (%p652) target = $region108
        $region107: #{tpu_custom_call.1} parent=79 // pred_region
          %655 = dma.done [#allocation12], 64
        $region108: #{tpu_custom_call.1} parent=79 // pred_fallthru
          _
        // Predicated region
        $region109: #{tpu_custom_call.1} parent=79 // pred_check
          %p656 = pneg %p232
        $region110: #{tpu_custom_call.1} parent=79 // pred_check_branch
          %658 = sbr.rel (%p656) target = $region112
        $region111: #{tpu_custom_call.1} parent=79 // pred_region
          %659 = dma.done [#allocation15], 16
        $region112: #{tpu_custom_call.1} parent=79 // pred_fallthru
          _
        // Predicated region
        $region113: #{tpu_custom_call.1} parent=79 // pred_check
          %p660 = pneg %p274
        $region114: #{tpu_custom_call.1} parent=79 // pred_check_branch
          %662 = sbr.rel (%p660) target = $region116
        $region115: #{tpu_custom_call.1} parent=79 // pred_region
          %663 = dma.done [#allocation15], 16
        $region116: #{tpu_custom_call.1} parent=79 // pred_fallthru
          _
        // Predicated region
        $region117: #{tpu_custom_call.1} parent=79 // pred_check
          %p664 = pneg %p295
        $region118: #{tpu_custom_call.1} parent=79 // pred_check_branch
          %666 = sbr.rel (%p664) target = $region120
        $region119: #{tpu_custom_call.1} parent=79 // pred_region
          %667 = dma.done [#allocation18], 64
        $region120: #{tpu_custom_call.1} parent=79 // pred_fallthru
          _
        // Predicated region
        $region121: #{tpu_custom_call.1} parent=79 // pred_check
          %p668 = pneg %p316
        $region122: #{tpu_custom_call.1} parent=79 // pred_check_branch
          %670 = sbr.rel (%p668) target = $region124
        $region123: #{tpu_custom_call.1} parent=79 // pred_region
          %671 = dma.done [#allocation18], 16
        $region124: #{tpu_custom_call.1} parent=79 // pred_fallthru
          _
        // Predicated region
        $region125: #{tpu_custom_call.1} parent=79 // pred_check
          %p672 = pneg %p358
        $region126: #{tpu_custom_call.1} parent=79 // pred_check_branch
          %674 = sbr.rel (%p672) target = $region128
        $region127: #{tpu_custom_call.1} parent=79 // pred_region
          %675 = dma.done [#allocation21], 16
        $region128: #{tpu_custom_call.1} parent=79 // pred_fallthru
          _
        %s676 = sand.u32 %s46, 1
        %s677 = scalar_lea.sflag [#allocation3], %s676
        %s678 = sand.u32 %s46, 1
        %s679 = smul.addr %s678, 592
        %s680 = scalar_lea.vmem [#allocation2], %s679
        %p681 = pneg %p59
        %p682 = pneg %p56
        %s683 = sand.u32 %s38, 1
        %s684 = scalar_lea.sflag [#allocation6], %s683
        %s685 = sand.u32 %s72, 1
        %s686 = smul.addr %s685, 1184
        %s687 = scalar_lea.vmem [#allocation5], %s686
        %p688 = pneg %p85
        %p689 = pneg %p82
        %p690 = pneg %p106
        %p691 = pneg %p103
        %p692 = pneg %p127
        %p693 = pneg %p124
        %p694 = pneg %p148
        %p695 = pneg %p145
        %p696 = pneg %p169
        %p697 = pneg %p166
        %p698 = pneg %p190
        %p699 = pneg %p187
        %p700 = pneg %p211
        %p701 = pneg %p208
        %p702 = pneg %p232
        %p703 = pneg %p229
        %p704 = pneg %p253
        %p705 = pneg %p250
        %p706 = pneg %p274
        %p707 = pneg %p271
        %p708 = pneg %p295
        %p709 = pneg %p292
        %p710 = pneg %p316
        %p711 = pneg %p313
        %p712 = pneg %p337
        %p713 = pneg %p334
        %p714 = pneg %p358
        %p715 = pneg %p355
        %p716 = pneg %p379
        %p717 = pneg %p376
        %s718 = smul.u32 2, %s38
        %s719 = smul.u32 2, %s38
        %p720 = scmp.eq.s32.totalorder %s38, 0
        // Predicated region
        $region129: #{tpu_custom_call.1} parent=79 // pred_check
          %p721 = pneg %p720
        $region130: #{tpu_custom_call.1} parent=79 // pred_check_branch
          %723 = sbr.rel (%p721) target = $region132
        $region131: #{tpu_custom_call.1} parent=79 // pred_region
          %vm724 = vcmask 25600
          %725 = vst.msk [vmem:[#allocation22] sm:$0x3] %vm724, 0.0
        $region132: #{tpu_custom_call.1} parent=79 // pred_fallthru
          _
        %v726 = vld [vmem:[%s622] sm:$0xff]
        %v727 = vld [vmem:[%s622 + $0x8] sm:$0xff]
        %v728 = vld [vmem:[%s622 + $0x10] sm:$0xff]
        %v729 = vld [vmem:[%s622 + $0x18] sm:$0xff]
        %v730 = vld [vmem:[%s622 + $0x20] sm:$0xff]
        %v731 = vld [vmem:[%s622 + $0x28] sm:$0xff]
        %v732 = vld [vmem:[%s622 + $0x30] sm:$0xff]
        %v733 = vld [vmem:[%s622 + $0x38] sm:$0xff]
        %v734 = vld [vmem:[%s622 + $0x40] sm:$0xff]
        %v735 = vld [vmem:[%s622 + $0x48] sm:$0xff]
        %v736 = vld [vmem:[%s622 + $0x50] sm:$0xff]
        %v737 = vld [vmem:[%s622 + $0x58] sm:$0xff]
        %v738 = vld [vmem:[%s622 + $0x60] sm:$0xff]
        %v739 = vld [vmem:[%s622 + $0x68] sm:$0xff]
        %v740 = vld [vmem:[%s622 + $0x70] sm:$0xff]
        %v741 = vld [vmem:[%s622 + $0x78] sm:$0xff]
        %v742 = vld [vmem:[%s622 + $0x80] sm:$0xff]
        %v743 = vld [vmem:[%s622 + $0x88] sm:$0xff]
        %v744 = vld [vmem:[%s622 + $0x90] sm:$0xf]
        %v745 = vld [vmem:[%s622 + $0x94] sm:$0xff]
        %v746 = vld [vmem:[%s622 + $0x9c] sm:$0xff]
        %v747 = vld [vmem:[%s622 + $0xa4] sm:$0xff]
        %v748 = vld [vmem:[%s622 + $0xac] sm:$0xff]
        %v749 = vld [vmem:[%s622 + $0xb4] sm:$0xff]
        %v750 = vld [vmem:[%s622 + $0xbc] sm:$0xff]
        %v751 = vld [vmem:[%s622 + $0xc4] sm:$0xff]
        %v752 = vld [vmem:[%s622 + $0xcc] sm:$0xff]
        %v753 = vld [vmem:[%s622 + $0xd4] sm:$0xff]
        %v754 = vld [vmem:[%s622 + $0xdc] sm:$0xff]
        %v755 = vld [vmem:[%s622 + $0xe4] sm:$0xff]
        %v756 = vld [vmem:[%s622 + $0xec] sm:$0xff]
        %v757 = vld [vmem:[%s622 + $0xf4] sm:$0xff]
        %v758 = vld [vmem:[%s622 + $0xfc] sm:$0xff]
        %v759 = vld [vmem:[%s622 + $0x104] sm:$0xff]
        %v760 = vld [vmem:[%s622 + $0x10c] sm:$0xff]
        %v761 = vld [vmem:[%s622 + $0x114] sm:$0xff]
        %v762 = vld [vmem:[%s622 + $0x11c] sm:$0xff]
        %v763 = vld [vmem:[%s622 + $0x124] sm:$0xf]
        %v764 = vld [vmem:[%s622 + $0x128] sm:$0xff]
        %v765 = vld [vmem:[%s622 + $0x130] sm:$0xff]
        %v766 = vld [vmem:[%s622 + $0x138] sm:$0xff]
        %v767 = vld [vmem:[%s622 + $0x140] sm:$0xff]
        %v768 = vld [vmem:[%s622 + $0x148] sm:$0xff]
        %v769 = vld [vmem:[%s622 + $0x150] sm:$0xff]
        %v770 = vld [vmem:[%s622 + $0x158] sm:$0xff]
        %v771 = vld [vmem:[%s622 + $0x160] sm:$0xff]
        %v772 = vld [vmem:[%s622 + $0x168] sm:$0xff]
        %v773 = vld [vmem:[%s622 + $0x170] sm:$0xff]
        %v774 = vld [vmem:[%s622 + $0x178] sm:$0xff]
        %v775 = vld [vmem:[%s622 + $0x180] sm:$0xff]
        %v776 = vld [vmem:[%s622 + $0x188] sm:$0xff]
        %v777 = vld [vmem:[%s622 + $0x190] sm:$0xff]
        %v778 = vld [vmem:[%s622 + $0x198] sm:$0xff]
        %v779 = vld [vmem:[%s622 + $0x1a0] sm:$0xff]
        %v780 = vld [vmem:[%s622 + $0x1a8] sm:$0xff]
        %v781 = vld [vmem:[%s622 + $0x1b0] sm:$0xff]
        %v782 = vld [vmem:[%s622 + $0x1b8] sm:$0xf]
        %v783 = vld [vmem:[%s622 + $0x1bc] sm:$0xff]
        %v784 = vld [vmem:[%s622 + $0x1c4] sm:$0xff]
        %v785 = vld [vmem:[%s622 + $0x1cc] sm:$0xff]
        %v786 = vld [vmem:[%s622 + $0x1d4] sm:$0xff]
        %v787 = vld [vmem:[%s622 + $0x1dc] sm:$0xff]
        %v788 = vld [vmem:[%s622 + $0x1e4] sm:$0xff]
        %v789 = vld [vmem:[%s622 + $0x1ec] sm:$0xff]
        %v790 = vld [vmem:[%s622 + $0x1f4] sm:$0xff]
        %v791 = vld [vmem:[%s622 + $0x1fc] sm:$0xff]
        %v792 = vld [vmem:[%s622 + $0x204] sm:$0xff]
        %v793 = vld [vmem:[%s622 + $0x20c] sm:$0xff]
        %v794 = vld [vmem:[%s622 + $0x214] sm:$0xff]
        %v795 = vld [vmem:[%s622 + $0x21c] sm:$0xff]
        %v796 = vld [vmem:[%s622 + $0x224] sm:$0xff]
        %v797 = vld [vmem:[%s622 + $0x22c] sm:$0xff]
        %v798 = vld [vmem:[%s622 + $0x234] sm:$0xff]
        %v799 = vld [vmem:[%s622 + $0x23c] sm:$0xff]
        %v800 = vld [vmem:[%s622 + $0x244] sm:$0xff]
        %v801 = vld [vmem:[%s622 + $0x24c] sm:$0xf]
        %v802 = vunpack.c.l.bf16 %v726
        %v803 = vunpack.c.h.bf16 %v726
        %v804 = vunpack.c.l.bf16 %v727
        %v805 = vunpack.c.h.bf16 %v727
        %v806 = vunpack.c.l.bf16 %v728
        %v807 = vunpack.c.h.bf16 %v728
        %v808 = vunpack.c.l.bf16 %v729
        %v809 = vunpack.c.h.bf16 %v729
        %v810 = vunpack.c.l.bf16 %v730
        %v811 = vunpack.c.h.bf16 %v730
        %v812 = vunpack.c.l.bf16 %v731
        %v813 = vunpack.c.h.bf16 %v731
        %v814 = vunpack.c.l.bf16 %v732
        %v815 = vunpack.c.h.bf16 %v732
        %v816 = vunpack.c.l.bf16 %v733
        %v817 = vunpack.c.h.bf16 %v733
        %v818 = vunpack.c.l.bf16 %v734
        %v819 = vunpack.c.h.bf16 %v734
        %v820 = vunpack.c.l.bf16 %v735
        %v821 = vunpack.c.h.bf16 %v735
        %v822 = vunpack.c.l.bf16 %v736
        %v823 = vunpack.c.h.bf16 %v736
        %v824 = vunpack.c.l.bf16 %v737
        %v825 = vunpack.c.h.bf16 %v737
        %v826 = vunpack.c.l.bf16 %v738
        %v827 = vunpack.c.h.bf16 %v738
        %v828 = vunpack.c.l.bf16 %v739
        %v829 = vunpack.c.h.bf16 %v739
        %v830 = vunpack.c.l.bf16 %v740
        %v831 = vunpack.c.h.bf16 %v740
        %v832 = vunpack.c.l.bf16 %v741
        %v833 = vunpack.c.h.bf16 %v741
        %v834 = vunpack.c.l.bf16 %v742
        %v835 = vunpack.c.h.bf16 %v742
        %v836 = vunpack.c.l.bf16 %v743
        %v837 = vunpack.c.h.bf16 %v743
        %v838 = vunpack.c.l.bf16 %v744
        %v839 = vunpack.c.l.bf16 %v745
        %v840 = vunpack.c.h.bf16 %v745
        %v841 = vunpack.c.l.bf16 %v746
        %v842 = vunpack.c.h.bf16 %v746
        %v843 = vunpack.c.l.bf16 %v747
        %v844 = vunpack.c.h.bf16 %v747
        %v845 = vunpack.c.l.bf16 %v748
        %v846 = vunpack.c.h.bf16 %v748
        %v847 = vunpack.c.l.bf16 %v749
        %v848 = vunpack.c.h.bf16 %v749
        %v849 = vunpack.c.l.bf16 %v750
        %v850 = vunpack.c.h.bf16 %v750
        %v851 = vunpack.c.l.bf16 %v751
        %v852 = vunpack.c.h.bf16 %v751
        %v853 = vunpack.c.l.bf16 %v752
        %v854 = vunpack.c.h.bf16 %v752
        %v855 = vunpack.c.l.bf16 %v753
        %v856 = vunpack.c.h.bf16 %v753
        %v857 = vunpack.c.l.bf16 %v754
        %v858 = vunpack.c.h.bf16 %v754
        %v859 = vunpack.c.l.bf16 %v755
        %v860 = vunpack.c.h.bf16 %v755
        %v861 = vunpack.c.l.bf16 %v756
        %v862 = vunpack.c.h.bf16 %v756
        %v863 = vunpack.c.l.bf16 %v757
        %v864 = vunpack.c.h.bf16 %v757
        %v865 = vunpack.c.l.bf16 %v758
        %v866 = vunpack.c.h.bf16 %v758
        %v867 = vunpack.c.l.bf16 %v759
        %v868 = vunpack.c.h.bf16 %v759
        %v869 = vunpack.c.l.bf16 %v760
        %v870 = vunpack.c.h.bf16 %v760
        %v871 = vunpack.c.l.bf16 %v761
        %v872 = vunpack.c.h.bf16 %v761
        %v873 = vunpack.c.l.bf16 %v762
        %v874 = vunpack.c.h.bf16 %v762
        %v875 = vunpack.c.l.bf16 %v763
        %v876 = vunpack.c.l.bf16 %v764
        %v877 = vunpack.c.h.bf16 %v764
        %v878 = vunpack.c.l.bf16 %v765
        %v879 = vunpack.c.h.bf16 %v765
        %v880 = vunpack.c.l.bf16 %v766
        %v881 = vunpack.c.h.bf16 %v766
        %v882 = vunpack.c.l.bf16 %v767
        %v883 = vunpack.c.h.bf16 %v767
        %v884 = vunpack.c.l.bf16 %v768
        %v885 = vunpack.c.h.bf16 %v768
        %v886 = vunpack.c.l.bf16 %v769
        %v887 = vunpack.c.h.bf16 %v769
        %v888 = vunpack.c.l.bf16 %v770
        %v889 = vunpack.c.h.bf16 %v770
        %v890 = vunpack.c.l.bf16 %v771
        %v891 = vunpack.c.h.bf16 %v771
        %v892 = vunpack.c.l.bf16 %v772
        %v893 = vunpack.c.h.bf16 %v772
        %v894 = vunpack.c.l.bf16 %v773
        %v895 = vunpack.c.h.bf16 %v773
        %v896 = vunpack.c.l.bf16 %v774
        %v897 = vunpack.c.h.bf16 %v774
        %v898 = vunpack.c.l.bf16 %v775
        %v899 = vunpack.c.h.bf16 %v775
        %v900 = vunpack.c.l.bf16 %v776
        %v901 = vunpack.c.h.bf16 %v776
        %v902 = vunpack.c.l.bf16 %v777
        %v903 = vunpack.c.h.bf16 %v777
        %v904 = vunpack.c.l.bf16 %v778
        %v905 = vunpack.c.h.bf16 %v778
        %v906 = vunpack.c.l.bf16 %v779
        %v907 = vunpack.c.h.bf16 %v779
        %v908 = vunpack.c.l.bf16 %v780
        %v909 = vunpack.c.h.bf16 %v780
        %v910 = vunpack.c.l.bf16 %v781
        %v911 = vunpack.c.h.bf16 %v781
        %v912 = vunpack.c.l.bf16 %v782
        %v913 = vunpack.c.l.bf16 %v783
        %v914 = vunpack.c.h.bf16 %v783
        %v915 = vunpack.c.l.bf16 %v784
        %v916 = vunpack.c.h.bf16 %v784
        %v917 = vunpack.c.l.bf16 %v785
        %v918 = vunpack.c.h.bf16 %v785
        %v919 = vunpack.c.l.bf16 %v786
        %v920 = vunpack.c.h.bf16 %v786
        %v921 = vunpack.c.l.bf16 %v787
        %v922 = vunpack.c.h.bf16 %v787
        %v923 = vunpack.c.l.bf16 %v788
        %v924 = vunpack.c.h.bf16 %v788
        %v925 = vunpack.c.l.bf16 %v789
        %v926 = vunpack.c.h.bf16 %v789
        %v927 = vunpack.c.l.bf16 %v790
        %v928 = vunpack.c.h.bf16 %v790
        %v929 = vunpack.c.l.bf16 %v791
        %v930 = vunpack.c.h.bf16 %v791
        %v931 = vunpack.c.l.bf16 %v792
        %v932 = vunpack.c.h.bf16 %v792
        %v933 = vunpack.c.l.bf16 %v793
        %v934 = vunpack.c.h.bf16 %v793
        %v935 = vunpack.c.l.bf16 %v794
        %v936 = vunpack.c.h.bf16 %v794
        %v937 = vunpack.c.l.bf16 %v795
        %v938 = vunpack.c.h.bf16 %v795
        %v939 = vunpack.c.l.bf16 %v796
        %v940 = vunpack.c.h.bf16 %v796
        %v941 = vunpack.c.l.bf16 %v797
        %v942 = vunpack.c.h.bf16 %v797
        %v943 = vunpack.c.l.bf16 %v798
        %v944 = vunpack.c.h.bf16 %v798
        %v945 = vunpack.c.l.bf16 %v799
        %v946 = vunpack.c.h.bf16 %v799
        %v947 = vunpack.c.l.bf16 %v800
        %v948 = vunpack.c.h.bf16 %v800
        %v949 = vunpack.c.l.bf16 %v801
        %v950 = vld [vmem:[%s631] sm:$0xff]
        %v951 = vld [vmem:[%s631 + $0x8] sm:$0xff]
        %v952 = vld [vmem:[%s631 + $0x10] sm:$0xff]
        %v953 = vld [vmem:[%s631 + $0x18] sm:$0xff]
        %v954 = vld [vmem:[%s631 + $0x20] sm:$0xff]
        %v955 = vld [vmem:[%s631 + $0x28] sm:$0xff]
        %v956 = vld [vmem:[%s631 + $0x30] sm:$0xff]
        %v957 = vld [vmem:[%s631 + $0x38] sm:$0xff]
        %v958 = vld [vmem:[%s631 + $0x40] sm:$0xff]
        %v959 = vld [vmem:[%s631 + $0x48] sm:$0xff]
        %v960 = vld [vmem:[%s631 + $0x50] sm:$0xff]
        %v961 = vld [vmem:[%s631 + $0x58] sm:$0xff]
        %v962 = vld [vmem:[%s631 + $0x60] sm:$0xff]
        %v963 = vld [vmem:[%s631 + $0x68] sm:$0xff]
        %v964 = vld [vmem:[%s631 + $0x70] sm:$0xff]
        %v965 = vld [vmem:[%s631 + $0x78] sm:$0xff]
        %v966 = vld [vmem:[%s631 + $0x80] sm:$0xff]
        %v967 = vld [vmem:[%s631 + $0x88] sm:$0xff]
        %v968 = vld [vmem:[%s631 + $0x90] sm:$0xf]
        %v969 = vld [vmem:[%s631 + $0x94] sm:$0xff]
        %v970 = vld [vmem:[%s631 + $0x9c] sm:$0xff]
        %v971 = vld [vmem:[%s631 + $0xa4] sm:$0xff]
        %v972 = vld [vmem:[%s631 + $0xac] sm:$0xff]
        %v973 = vld [vmem:[%s631 + $0xb4] sm:$0xff]
        %v974 = vld [vmem:[%s631 + $0xbc] sm:$0xff]
        %v975 = vld [vmem:[%s631 + $0xc4] sm:$0xff]
        %v976 = vld [vmem:[%s631 + $0xcc] sm:$0xff]
        %v977 = vld [vmem:[%s631 + $0xd4] sm:$0xff]
        %v978 = vld [vmem:[%s631 + $0xdc] sm:$0xff]
        %v979 = vld [vmem:[%s631 + $0xe4] sm:$0xff]
        %v980 = vld [vmem:[%s631 + $0xec] sm:$0xff]
        %v981 = vld [vmem:[%s631 + $0xf4] sm:$0xff]
        %v982 = vld [vmem:[%s631 + $0xfc] sm:$0xff]
        %v983 = vld [vmem:[%s631 + $0x104] sm:$0xff]
        %v984 = vld [vmem:[%s631 + $0x10c] sm:$0xff]
        %v985 = vld [vmem:[%s631 + $0x114] sm:$0xff]
        %v986 = vld [vmem:[%s631 + $0x11c] sm:$0xff]
        %v987 = vld [vmem:[%s631 + $0x124] sm:$0xf]
        %v988 = vunpack.c.l.bf16 %v950
        %v989 = vunpack.c.h.bf16 %v950
        %v990 = vunpack.c.l.bf16 %v951
        %v991 = vunpack.c.h.bf16 %v951
        %v992 = vunpack.c.l.bf16 %v952
        %v993 = vunpack.c.h.bf16 %v952
        %v994 = vunpack.c.l.bf16 %v953
        %v995 = vunpack.c.h.bf16 %v953
        %v996 = vunpack.c.l.bf16 %v954
        %v997 = vunpack.c.h.bf16 %v954
        %v998 = vunpack.c.l.bf16 %v955
        %v999 = vunpack.c.h.bf16 %v955
        %v1000 = vunpack.c.l.bf16 %v956
        %v1001 = vunpack.c.h.bf16 %v956
        %v1002 = vunpack.c.l.bf16 %v957
        %v1003 = vunpack.c.h.bf16 %v957
        %v1004 = vunpack.c.l.bf16 %v958
        %v1005 = vunpack.c.h.bf16 %v958
        %v1006 = vunpack.c.l.bf16 %v959
        %v1007 = vunpack.c.h.bf16 %v959
        %v1008 = vunpack.c.l.bf16 %v960
        %v1009 = vunpack.c.h.bf16 %v960
        %v1010 = vunpack.c.l.bf16 %v961
        %v1011 = vunpack.c.h.bf16 %v961
        %v1012 = vunpack.c.l.bf16 %v962
        %v1013 = vunpack.c.h.bf16 %v962
        %v1014 = vunpack.c.l.bf16 %v963
        %v1015 = vunpack.c.h.bf16 %v963
        %v1016 = vunpack.c.l.bf16 %v964
        %v1017 = vunpack.c.h.bf16 %v964
        %v1018 = vunpack.c.l.bf16 %v965
        %v1019 = vunpack.c.h.bf16 %v965
        %v1020 = vunpack.c.l.bf16 %v966
        %v1021 = vunpack.c.h.bf16 %v966
        %v1022 = vunpack.c.l.bf16 %v967
        %v1023 = vunpack.c.h.bf16 %v967
        %v1024 = vunpack.c.l.bf16 %v968
        %v1025 = vunpack.c.l.bf16 %v969
        %v1026 = vunpack.c.h.bf16 %v969
        %v1027 = vunpack.c.l.bf16 %v970
        %v1028 = vunpack.c.h.bf16 %v970
        %v1029 = vunpack.c.l.bf16 %v971
        %v1030 = vunpack.c.h.bf16 %v971
        %v1031 = vunpack.c.l.bf16 %v972
        %v1032 = vunpack.c.h.bf16 %v972
        %v1033 = vunpack.c.l.bf16 %v973
        %v1034 = vunpack.c.h.bf16 %v973
        %v1035 = vunpack.c.l.bf16 %v974
        %v1036 = vunpack.c.h.bf16 %v974
        %v1037 = vunpack.c.l.bf16 %v975
        %v1038 = vunpack.c.h.bf16 %v975
        %v1039 = vunpack.c.l.bf16 %v976
        %v1040 = vunpack.c.h.bf16 %v976
        %v1041 = vunpack.c.l.bf16 %v977
        %v1042 = vunpack.c.h.bf16 %v977
        %v1043 = vunpack.c.l.bf16 %v978
        %v1044 = vunpack.c.h.bf16 %v978
        %v1045 = vunpack.c.l.bf16 %v979
        %v1046 = vunpack.c.h.bf16 %v979
        %v1047 = vunpack.c.l.bf16 %v980
        %v1048 = vunpack.c.h.bf16 %v980
        %v1049 = vunpack.c.l.bf16 %v981
        %v1050 = vunpack.c.h.bf16 %v981
        %v1051 = vunpack.c.l.bf16 %v982
        %v1052 = vunpack.c.h.bf16 %v982
        %v1053 = vunpack.c.l.bf16 %v983
        %v1054 = vunpack.c.h.bf16 %v983
        %v1055 = vunpack.c.l.bf16 %v984
        %v1056 = vunpack.c.h.bf16 %v984
        %v1057 = vunpack.c.l.bf16 %v985
        %v1058 = vunpack.c.h.bf16 %v985
        %v1059 = vunpack.c.l.bf16 %v986
        %v1060 = vunpack.c.h.bf16 %v986
        %v1061 = vunpack.c.l.bf16 %v987
        %v1062 = vmul.f32 %v802, %v988
        %v1063 = vmul.f32 %v803, %v989
        %v1064 = vmul.f32 %v804, %v990
        %v1065 = vmul.f32 %v805, %v991
        %v1066 = vmul.f32 %v806, %v992
        %v1067 = vmul.f32 %v807, %v993
        %v1068 = vmul.f32 %v808, %v994
        %v1069 = vmul.f32 %v809, %v995
        %v1070 = vmul.f32 %v810, %v996
        %v1071 = vmul.f32 %v811, %v997
        %v1072 = vmul.f32 %v812, %v998
        %v1073 = vmul.f32 %v813, %v999
        %v1074 = vmul.f32 %v814, %v1000
        %v1075 = vmul.f32 %v815, %v1001
        %v1076 = vmul.f32 %v816, %v1002
        %v1077 = vmul.f32 %v817, %v1003
        %v1078 = vmul.f32 %v818, %v1004
        %v1079 = vmul.f32 %v819, %v1005
        %v1080 = vmul.f32 %v820, %v1006
        %v1081 = vmul.f32 %v821, %v1007
        %v1082 = vmul.f32 %v822, %v1008
        %v1083 = vmul.f32 %v823, %v1009
        %v1084 = vmul.f32 %v824, %v1010
        %v1085 = vmul.f32 %v825, %v1011
        %v1086 = vmul.f32 %v826, %v1012
        %v1087 = vmul.f32 %v827, %v1013
        %v1088 = vmul.f32 %v828, %v1014
        %v1089 = vmul.f32 %v829, %v1015
        %v1090 = vmul.f32 %v830, %v1016
        %v1091 = vmul.f32 %v831, %v1017
        %v1092 = vmul.f32 %v832, %v1018
        %v1093 = vmul.f32 %v833, %v1019
        %v1094 = vmul.f32 %v834, %v1020
        %v1095 = vmul.f32 %v835, %v1021
        %v1096 = vmul.f32 %v836, %v1022
        %v1097 = vmul.f32 %v837, %v1023
        %v1098 = vmul.f32 %v838, %v1024
        %v1099 = vmul.f32 %v839, %v1025
        %v1100 = vmul.f32 %v840, %v1026
        %v1101 = vmul.f32 %v841, %v1027
        %v1102 = vmul.f32 %v842, %v1028
        %v1103 = vmul.f32 %v843, %v1029
        %v1104 = vmul.f32 %v844, %v1030
        %v1105 = vmul.f32 %v845, %v1031
        %v1106 = vmul.f32 %v846, %v1032
        %v1107 = vmul.f32 %v847, %v1033
        %v1108 = vmul.f32 %v848, %v1034
        %v1109 = vmul.f32 %v849, %v1035
        %v1110 = vmul.f32 %v850, %v1036
        %v1111 = vmul.f32 %v851, %v1037
        %v1112 = vmul.f32 %v852, %v1038
        %v1113 = vmul.f32 %v853, %v1039
        %v1114 = vmul.f32 %v854, %v1040
        %v1115 = vmul.f32 %v855, %v1041
        %v1116 = vmul.f32 %v856, %v1042
        %v1117 = vmul.f32 %v857, %v1043
        %v1118 = vmul.f32 %v858, %v1044
        %v1119 = vmul.f32 %v859, %v1045
        %v1120 = vmul.f32 %v860, %v1046
        %v1121 = vmul.f32 %v861, %v1047
        %v1122 = vmul.f32 %v862, %v1048
        %v1123 = vmul.f32 %v863, %v1049
        %v1124 = vmul.f32 %v864, %v1050
        %v1125 = vmul.f32 %v865, %v1051
        %v1126 = vmul.f32 %v866, %v1052
        %v1127 = vmul.f32 %v867, %v1053
        %v1128 = vmul.f32 %v868, %v1054
        %v1129 = vmul.f32 %v869, %v1055
        %v1130 = vmul.f32 %v870, %v1056
        %v1131 = vmul.f32 %v871, %v1057
        %v1132 = vmul.f32 %v872, %v1058
        %v1133 = vmul.f32 %v873, %v1059
        %v1134 = vmul.f32 %v874, %v1060
        %v1135 = vmul.f32 %v875, %v1061
        %v1136 = vmul.f32 %v876, %v988
        %v1137 = vmul.f32 %v877, %v989
        %v1138 = vmul.f32 %v878, %v990
        %v1139 = vmul.f32 %v879, %v991
        %v1140 = vmul.f32 %v880, %v992
        %v1141 = vmul.f32 %v881, %v993
        %v1142 = vmul.f32 %v882, %v994
        %v1143 = vmul.f32 %v883, %v995
        %v1144 = vmul.f32 %v884, %v996
        %v1145 = vmul.f32 %v885, %v997
        %v1146 = vmul.f32 %v886, %v998
        %v1147 = vmul.f32 %v887, %v999
        %v1148 = vmul.f32 %v888, %v1000
        %v1149 = vmul.f32 %v889, %v1001
        %v1150 = vmul.f32 %v890, %v1002
        %v1151 = vmul.f32 %v891, %v1003
        %v1152 = vmul.f32 %v892, %v1004
        %v1153 = vmul.f32 %v893, %v1005
        %v1154 = vmul.f32 %v894, %v1006
        %v1155 = vmul.f32 %v895, %v1007
        %v1156 = vmul.f32 %v896, %v1008
        %v1157 = vmul.f32 %v897, %v1009
        %v1158 = vmul.f32 %v898, %v1010
        %v1159 = vmul.f32 %v899, %v1011
        %v1160 = vmul.f32 %v900, %v1012
        %v1161 = vmul.f32 %v901, %v1013
        %v1162 = vmul.f32 %v902, %v1014
        %v1163 = vmul.f32 %v903, %v1015
        %v1164 = vmul.f32 %v904, %v1016
        %v1165 = vmul.f32 %v905, %v1017
        %v1166 = vmul.f32 %v906, %v1018
        %v1167 = vmul.f32 %v907, %v1019
        %v1168 = vmul.f32 %v908, %v1020
        %v1169 = vmul.f32 %v909, %v1021
        %v1170 = vmul.f32 %v910, %v1022
        %v1171 = vmul.f32 %v911, %v1023
        %v1172 = vmul.f32 %v912, %v1024
        %v1173 = vmul.f32 %v913, %v1025
        %v1174 = vmul.f32 %v914, %v1026
        %v1175 = vmul.f32 %v915, %v1027
        %v1176 = vmul.f32 %v916, %v1028
        %v1177 = vmul.f32 %v917, %v1029
        %v1178 = vmul.f32 %v918, %v1030
        %v1179 = vmul.f32 %v919, %v1031
        %v1180 = vmul.f32 %v920, %v1032
        %v1181 = vmul.f32 %v921, %v1033
        %v1182 = vmul.f32 %v922, %v1034
        %v1183 = vmul.f32 %v923, %v1035
        %v1184 = vmul.f32 %v924, %v1036
        %v1185 = vmul.f32 %v925, %v1037
        %v1186 = vmul.f32 %v926, %v1038
        %v1187 = vmul.f32 %v927, %v1039
        %v1188 = vmul.f32 %v928, %v1040
        %v1189 = vmul.f32 %v929, %v1041
        %v1190 = vmul.f32 %v930, %v1042
        %v1191 = vmul.f32 %v931, %v1043
        %v1192 = vmul.f32 %v932, %v1044
        %v1193 = vmul.f32 %v933, %v1045
        %v1194 = vmul.f32 %v934, %v1046
        %v1195 = vmul.f32 %v935, %v1047
        %v1196 = vmul.f32 %v936, %v1048
        %v1197 = vmul.f32 %v937, %v1049
        %v1198 = vmul.f32 %v938, %v1050
        %v1199 = vmul.f32 %v939, %v1051
        %v1200 = vmul.f32 %v940, %v1052
        %v1201 = vmul.f32 %v941, %v1053
        %v1202 = vmul.f32 %v942, %v1054
        %v1203 = vmul.f32 %v943, %v1055
        %v1204 = vmul.f32 %v944, %v1056
        %v1205 = vmul.f32 %v945, %v1057
        %v1206 = vmul.f32 %v946, %v1058
        %v1207 = vmul.f32 %v947, %v1059
        %v1208 = vmul.f32 %v948, %v1060
        %v1209 = vmul.f32 %v949, %v1061
        %v1210 = vadd.f32 %v1062, %v1063
        %v1211 = vadd.f32 %v1210, %v1064
        %v1212 = vadd.f32 %v1211, %v1065
        %v1213 = vadd.f32 %v1212, %v1066
        %v1214 = vadd.f32 %v1213, %v1067
        %v1215 = vadd.f32 %v1214, %v1068
        %v1216 = vadd.f32 %v1215, %v1069
        %v1217 = vadd.f32 %v1216, %v1070
        %v1218 = vadd.f32 %v1217, %v1071
        %v1219 = vadd.f32 %v1218, %v1072
        %v1220 = vadd.f32 %v1219, %v1073
        %v1221 = vadd.f32 %v1220, %v1074
        %v1222 = vadd.f32 %v1221, %v1075
        %v1223 = vadd.f32 %v1222, %v1076
        %v1224 = vadd.f32 %v1223, %v1077
        %v1225 = vadd.f32 %v1224, %v1078
        %v1226 = vadd.f32 %v1225, %v1079
        %v1227 = vadd.f32 %v1226, %v1080
        %v1228 = vadd.f32 %v1227, %v1081
        %v1229 = vadd.f32 %v1228, %v1082
        %v1230 = vadd.f32 %v1229, %v1083
        %v1231 = vadd.f32 %v1230, %v1084
        %v1232 = vadd.f32 %v1231, %v1085
        %v1233 = vadd.f32 %v1232, %v1086
        %v1234 = vadd.f32 %v1233, %v1087
        %v1235 = vadd.f32 %v1234, %v1088
        %v1236 = vadd.f32 %v1235, %v1089
        %v1237 = vadd.f32 %v1236, %v1090
        %v1238 = vadd.f32 %v1237, %v1091
        %v1239 = vadd.f32 %v1238, %v1092
        %v1240 = vadd.f32 %v1239, %v1093
        %v1241 = vadd.f32 %v1240, %v1094
        %v1242 = vadd.f32 %v1241, %v1095
        %v1243 = vadd.f32 %v1242, %v1096
        %v1244 = vadd.f32 %v1243, %v1097
        %vm1245 = vcmask 785408
        %v1246 = vsel %vm1245, %v1098, 0.0
        %v1247 = vadd.f32 %v1244, %v1246
        %1248 = vadd.xlane.f32.xlu0 %v1247
        %v1249 = vpop.xlane.xlu0 %1248
        %v1250 = vadd.f32 %v1099, %v1100
        %v1251 = vadd.f32 %v1250, %v1101
        %v1252 = vadd.f32 %v1251, %v1102
        %v1253 = vadd.f32 %v1252, %v1103
        %v1254 = vadd.f32 %v1253, %v1104
        %v1255 = vadd.f32 %v1254, %v1105
        %v1256 = vadd.f32 %v1255, %v1106
        %v1257 = vadd.f32 %v1256, %v1107
        %v1258 = vadd.f32 %v1257, %v1108
        %v1259 = vadd.f32 %v1258, %v1109
        %v1260 = vadd.f32 %v1259, %v1110
        %v1261 = vadd.f32 %v1260, %v1111
        %v1262 = vadd.f32 %v1261, %v1112
        %v1263 = vadd.f32 %v1262, %v1113
        %v1264 = vadd.f32 %v1263, %v1114
        %v1265 = vadd.f32 %v1264, %v1115
        %v1266 = vadd.f32 %v1265, %v1116
        %v1267 = vadd.f32 %v1266, %v1117
        %v1268 = vadd.f32 %v1267, %v1118
        %v1269 = vadd.f32 %v1268, %v1119
        %v1270 = vadd.f32 %v1269, %v1120
        %v1271 = vadd.f32 %v1270, %v1121
        %v1272 = vadd.f32 %v1271, %v1122
        %v1273 = vadd.f32 %v1272, %v1123
        %v1274 = vadd.f32 %v1273, %v1124
        %v1275 = vadd.f32 %v1274, %v1125
        %v1276 = vadd.f32 %v1275, %v1126
        %v1277 = vadd.f32 %v1276, %v1127
        %v1278 = vadd.f32 %v1277, %v1128
        %v1279 = vadd.f32 %v1278, %v1129
        %v1280 = vadd.f32 %v1279, %v1130
        %v1281 = vadd.f32 %v1280, %v1131
        %v1282 = vadd.f32 %v1281, %v1132
        %v1283 = vadd.f32 %v1282, %v1133
        %v1284 = vadd.f32 %v1283, %v1134
        %v1285 = vsel %vm1245, %v1135, 0.0
        %v1286 = vadd.f32 %v1284, %v1285
        %1287 = vadd.xlane.f32.xlu0 %v1286
        %v1288 = vpop.xlane.xlu0 %1287
        %v1289 = vadd.f32 %v1136, %v1137
        %v1290 = vadd.f32 %v1289, %v1138
        %v1291 = vadd.f32 %v1290, %v1139
        %v1292 = vadd.f32 %v1291, %v1140
        %v1293 = vadd.f32 %v1292, %v1141
        %v1294 = vadd.f32 %v1293, %v1142
        %v1295 = vadd.f32 %v1294, %v1143
        %v1296 = vadd.f32 %v1295, %v1144
        %v1297 = vadd.f32 %v1296, %v1145
        %v1298 = vadd.f32 %v1297, %v1146
        %v1299 = vadd.f32 %v1298, %v1147
        %v1300 = vadd.f32 %v1299, %v1148
        %v1301 = vadd.f32 %v1300, %v1149
        %v1302 = vadd.f32 %v1301, %v1150
        %v1303 = vadd.f32 %v1302, %v1151
        %v1304 = vadd.f32 %v1303, %v1152
        %v1305 = vadd.f32 %v1304, %v1153
        %v1306 = vadd.f32 %v1305, %v1154
        %v1307 = vadd.f32 %v1306, %v1155
        %v1308 = vadd.f32 %v1307, %v1156
        %v1309 = vadd.f32 %v1308, %v1157
        %v1310 = vadd.f32 %v1309, %v1158
        %v1311 = vadd.f32 %v1310, %v1159
        %v1312 = vadd.f32 %v1311, %v1160
        %v1313 = vadd.f32 %v1312, %v1161
        %v1314 = vadd.f32 %v1313, %v1162
        %v1315 = vadd.f32 %v1314, %v1163
        %v1316 = vadd.f32 %v1315, %v1164
        %v1317 = vadd.f32 %v1316, %v1165
        %v1318 = vadd.f32 %v1317, %v1166
        %v1319 = vadd.f32 %v1318, %v1167
        %v1320 = vadd.f32 %v1319, %v1168
        %v1321 = vadd.f32 %v1320, %v1169
        %v1322 = vadd.f32 %v1321, %v1170
        %v1323 = vadd.f32 %v1322, %v1171
        %v1324 = vsel %vm1245, %v1172, 0.0
        %v1325 = vadd.f32 %v1323, %v1324
        %1326 = vadd.xlane.f32.xlu0 %v1325
        %v1327 = vpop.xlane.xlu0 %1326
        %v1328 = vadd.f32 %v1173, %v1174
        %v1329 = vadd.f32 %v1328, %v1175
        %v1330 = vadd.f32 %v1329, %v1176
        %v1331 = vadd.f32 %v1330, %v1177
        %v1332 = vadd.f32 %v1331, %v1178
        %v1333 = vadd.f32 %v1332, %v1179
        %v1334 = vadd.f32 %v1333, %v1180
        %v1335 = vadd.f32 %v1334, %v1181
        %v1336 = vadd.f32 %v1335, %v1182
        %v1337 = vadd.f32 %v1336, %v1183
        %v1338 = vadd.f32 %v1337, %v1184
        %v1339 = vadd.f32 %v1338, %v1185
        %v1340 = vadd.f32 %v1339, %v1186
        %v1341 = vadd.f32 %v1340, %v1187
        %v1342 = vadd.f32 %v1341, %v1188
        %v1343 = vadd.f32 %v1342, %v1189
        %v1344 = vadd.f32 %v1343, %v1190
        %v1345 = vadd.f32 %v1344, %v1191
        %v1346 = vadd.f32 %v1345, %v1192
        %v1347 = vadd.f32 %v1346, %v1193
        %v1348 = vadd.f32 %v1347, %v1194
        %v1349 = vadd.f32 %v1348, %v1195
        %v1350 = vadd.f32 %v1349, %v1196
        %v1351 = vadd.f32 %v1350, %v1197
        %v1352 = vadd.f32 %v1351, %v1198
        %v1353 = vadd.f32 %v1352, %v1199
        %v1354 = vadd.f32 %v1353, %v1200
        %v1355 = vadd.f32 %v1354, %v1201
        %v1356 = vadd.f32 %v1355, %v1202
        %v1357 = vadd.f32 %v1356, %v1203
        %v1358 = vadd.f32 %v1357, %v1204
        %v1359 = vadd.f32 %v1358, %v1205
        %v1360 = vadd.f32 %v1359, %v1206
        %v1361 = vadd.f32 %v1360, %v1207
        %v1362 = vadd.f32 %v1361, %v1208
        %v1363 = vsel %vm1245, %v1209, 0.0
        %v1364 = vadd.f32 %v1362, %v1363
        %1365 = vadd.xlane.f32.xlu0 %v1364
        %v1366 = vpop.xlane.xlu0 %1365
        %v1371 = vlaneseq
        %v1372 = vand.u32 %v1371, 127
        %v1373 = vlaneseq
        %v1374 = vshrl.u32 %v1373, 7
        %v1375 = vsub.s32 %v1372, %v1374
        %v1376 = vrot.slane %v1249, %v1375
        %v1377 = vadd.s32 %v1372, 4294967288
        %v1378 = vlaneseq
        %v1379 = vshrl.u32 %v1378, 7
        %v1380 = vsub.s32 %v1377, %v1379
        %v1381 = vrot.slane %v1288, %v1380
        %vm1382 = vcmask 130112
        %v1383 = vsel %vm1382, %v1381, %v1376
        %v1384 = vlaneseq
        %v1385 = vshrl.u32 %v1384, 7
        %v1386 = vsub.s32 %v1372, %v1385
        %v1387 = vrot.slane %v1327, %v1386
        %v1388 = vlaneseq
        %v1389 = vshrl.u32 %v1388, 7
        %v1390 = vsub.s32 %v1377, %v1389
        %v1391 = vrot.slane %v1366, %v1390
        %v1392 = vsel %vm1382, %v1391, %v1387
        %vm1393 = vcmask 1041409
        %v1394 = vsel %vm1393, %v1392, %v1383
        %vm1396 = vcmask 123904
        %v1397 = vsel %vm1396, %v1394, 0.0
        %1398 = vadd.xlane.f32.xlu0 %v1397
        %v1399 = vpop.xlane.xlu0 %1398
        %s1400 = scalar_lea.vmem %s631, 296 [#allocation5]
        %v1401 = vld [vmem:[%s1400] sm:$0xff]
        %v1402 = vld [vmem:[%s1400 + $0x8] sm:$0xff]
        %v1403 = vld [vmem:[%s1400 + $0x10] sm:$0xff]
        %v1404 = vld [vmem:[%s1400 + $0x18] sm:$0xff]
        %v1405 = vld [vmem:[%s1400 + $0x20] sm:$0xff]
        %v1406 = vld [vmem:[%s1400 + $0x28] sm:$0xff]
        %v1407 = vld [vmem:[%s1400 + $0x30] sm:$0xff]
        %v1408 = vld [vmem:[%s1400 + $0x38] sm:$0xff]
        %v1409 = vld [vmem:[%s1400 + $0x40] sm:$0xff]
        %v1410 = vld [vmem:[%s1400 + $0x48] sm:$0xff]
        %v1411 = vld [vmem:[%s1400 + $0x50] sm:$0xff]
        %v1412 = vld [vmem:[%s1400 + $0x58] sm:$0xff]
        %v1413 = vld [vmem:[%s1400 + $0x60] sm:$0xff]
        %v1414 = vld [vmem:[%s1400 + $0x68] sm:$0xff]
        %v1415 = vld [vmem:[%s1400 + $0x70] sm:$0xff]
        %v1416 = vld [vmem:[%s1400 + $0x78] sm:$0xff]
        %v1417 = vld [vmem:[%s1400 + $0x80] sm:$0xff]
        %v1418 = vld [vmem:[%s1400 + $0x88] sm:$0xff]
        %v1419 = vld [vmem:[%s1400 + $0x90] sm:$0xf]
        %v1420 = vld [vmem:[%s1400 + $0x94] sm:$0xff]
        %v1421 = vld [vmem:[%s1400 + $0x9c] sm:$0xff]
        %v1422 = vld [vmem:[%s1400 + $0xa4] sm:$0xff]
        %v1423 = vld [vmem:[%s1400 + $0xac] sm:$0xff]
        %v1424 = vld [vmem:[%s1400 + $0xb4] sm:$0xff]
        %v1425 = vld [vmem:[%s1400 + $0xbc] sm:$0xff]
        %v1426 = vld [vmem:[%s1400 + $0xc4] sm:$0xff]
        %v1427 = vld [vmem:[%s1400 + $0xcc] sm:$0xff]
        %v1428 = vld [vmem:[%s1400 + $0xd4] sm:$0xff]
        %v1429 = vld [vmem:[%s1400 + $0xdc] sm:$0xff]
        %v1430 = vld [vmem:[%s1400 + $0xe4] sm:$0xff]
        %v1431 = vld [vmem:[%s1400 + $0xec] sm:$0xff]
        %v1432 = vld [vmem:[%s1400 + $0xf4] sm:$0xff]
        %v1433 = vld [vmem:[%s1400 + $0xfc] sm:$0xff]
        %v1434 = vld [vmem:[%s1400 + $0x104] sm:$0xff]
        %v1435 = vld [vmem:[%s1400 + $0x10c] sm:$0xff]
        %v1436 = vld [vmem:[%s1400 + $0x114] sm:$0xff]
        %v1437 = vld [vmem:[%s1400 + $0x11c] sm:$0xff]
        %v1438 = vld [vmem:[%s1400 + $0x124] sm:$0xf]
        %v1439 = vunpack.c.l.bf16 %v1401
        %v1440 = vunpack.c.h.bf16 %v1401
        %v1441 = vunpack.c.l.bf16 %v1402
        %v1442 = vunpack.c.h.bf16 %v1402
        %v1443 = vunpack.c.l.bf16 %v1403
        %v1444 = vunpack.c.h.bf16 %v1403
        %v1445 = vunpack.c.l.bf16 %v1404
        %v1446 = vunpack.c.h.bf16 %v1404
        %v1447 = vunpack.c.l.bf16 %v1405
        %v1448 = vunpack.c.h.bf16 %v1405
        %v1449 = vunpack.c.l.bf16 %v1406
        %v1450 = vunpack.c.h.bf16 %v1406
        %v1451 = vunpack.c.l.bf16 %v1407
        %v1452 = vunpack.c.h.bf16 %v1407
        %v1453 = vunpack.c.l.bf16 %v1408
        %v1454 = vunpack.c.h.bf16 %v1408
        %v1455 = vunpack.c.l.bf16 %v1409
        %v1456 = vunpack.c.h.bf16 %v1409
        %v1457 = vunpack.c.l.bf16 %v1410
        %v1458 = vunpack.c.h.bf16 %v1410
        %v1459 = vunpack.c.l.bf16 %v1411
        %v1460 = vunpack.c.h.bf16 %v1411
        %v1461 = vunpack.c.l.bf16 %v1412
        %v1462 = vunpack.c.h.bf16 %v1412
        %v1463 = vunpack.c.l.bf16 %v1413
        %v1464 = vunpack.c.h.bf16 %v1413
        %v1465 = vunpack.c.l.bf16 %v1414
        %v1466 = vunpack.c.h.bf16 %v1414
        %v1467 = vunpack.c.l.bf16 %v1415
        %v1468 = vunpack.c.h.bf16 %v1415
        %v1469 = vunpack.c.l.bf16 %v1416
        %v1470 = vunpack.c.h.bf16 %v1416
        %v1471 = vunpack.c.l.bf16 %v1417
        %v1472 = vunpack.c.h.bf16 %v1417
        %v1473 = vunpack.c.l.bf16 %v1418
        %v1474 = vunpack.c.h.bf16 %v1418
        %v1475 = vunpack.c.l.bf16 %v1419
        %v1476 = vunpack.c.l.bf16 %v1420
        %v1477 = vunpack.c.h.bf16 %v1420
        %v1478 = vunpack.c.l.bf16 %v1421
        %v1479 = vunpack.c.h.bf16 %v1421
        %v1480 = vunpack.c.l.bf16 %v1422
        %v1481 = vunpack.c.h.bf16 %v1422
        %v1482 = vunpack.c.l.bf16 %v1423
        %v1483 = vunpack.c.h.bf16 %v1423
        %v1484 = vunpack.c.l.bf16 %v1424
        %v1485 = vunpack.c.h.bf16 %v1424
        %v1486 = vunpack.c.l.bf16 %v1425
        %v1487 = vunpack.c.h.bf16 %v1425
        %v1488 = vunpack.c.l.bf16 %v1426
        %v1489 = vunpack.c.h.bf16 %v1426
        %v1490 = vunpack.c.l.bf16 %v1427
        %v1491 = vunpack.c.h.bf16 %v1427
        %v1492 = vunpack.c.l.bf16 %v1428
        %v1493 = vunpack.c.h.bf16 %v1428
        %v1494 = vunpack.c.l.bf16 %v1429
        %v1495 = vunpack.c.h.bf16 %v1429
        %v1496 = vunpack.c.l.bf16 %v1430
        %v1497 = vunpack.c.h.bf16 %v1430
        %v1498 = vunpack.c.l.bf16 %v1431
        %v1499 = vunpack.c.h.bf16 %v1431
        %v1500 = vunpack.c.l.bf16 %v1432
        %v1501 = vunpack.c.h.bf16 %v1432
        %v1502 = vunpack.c.l.bf16 %v1433
        %v1503 = vunpack.c.h.bf16 %v1433
        %v1504 = vunpack.c.l.bf16 %v1434
        %v1505 = vunpack.c.h.bf16 %v1434
        %v1506 = vunpack.c.l.bf16 %v1435
        %v1507 = vunpack.c.h.bf16 %v1435
        %v1508 = vunpack.c.l.bf16 %v1436
        %v1509 = vunpack.c.h.bf16 %v1436
        %v1510 = vunpack.c.l.bf16 %v1437
        %v1511 = vunpack.c.h.bf16 %v1437
        %v1512 = vunpack.c.l.bf16 %v1438
        %v1513 = vmul.f32 %v802, %v1439
        %v1514 = vmul.f32 %v803, %v1440
        %v1515 = vmul.f32 %v804, %v1441
        %v1516 = vmul.f32 %v805, %v1442
        %v1517 = vmul.f32 %v806, %v1443
        %v1518 = vmul.f32 %v807, %v1444
        %v1519 = vmul.f32 %v808, %v1445
        %v1520 = vmul.f32 %v809, %v1446
        %v1521 = vmul.f32 %v810, %v1447
        %v1522 = vmul.f32 %v811, %v1448
        %v1523 = vmul.f32 %v812, %v1449
        %v1524 = vmul.f32 %v813, %v1450
        %v1525 = vmul.f32 %v814, %v1451
        %v1526 = vmul.f32 %v815, %v1452
        %v1527 = vmul.f32 %v816, %v1453
        %v1528 = vmul.f32 %v817, %v1454
        %v1529 = vmul.f32 %v818, %v1455
        %v1530 = vmul.f32 %v819, %v1456
        %v1531 = vmul.f32 %v820, %v1457
        %v1532 = vmul.f32 %v821, %v1458
        %v1533 = vmul.f32 %v822, %v1459
        %v1534 = vmul.f32 %v823, %v1460
        %v1535 = vmul.f32 %v824, %v1461
        %v1536 = vmul.f32 %v825, %v1462
        %v1537 = vmul.f32 %v826, %v1463
        %v1538 = vmul.f32 %v827, %v1464
        %v1539 = vmul.f32 %v828, %v1465
        %v1540 = vmul.f32 %v829, %v1466
        %v1541 = vmul.f32 %v830, %v1467
        %v1542 = vmul.f32 %v831, %v1468
        %v1543 = vmul.f32 %v832, %v1469
        %v1544 = vmul.f32 %v833, %v1470
        %v1545 = vmul.f32 %v834, %v1471
        %v1546 = vmul.f32 %v835, %v1472
        %v1547 = vmul.f32 %v836, %v1473
        %v1548 = vmul.f32 %v837, %v1474
        %v1549 = vmul.f32 %v838, %v1475
        %v1550 = vmul.f32 %v839, %v1476
        %v1551 = vmul.f32 %v840, %v1477
        %v1552 = vmul.f32 %v841, %v1478
        %v1553 = vmul.f32 %v842, %v1479
        %v1554 = vmul.f32 %v843, %v1480
        %v1555 = vmul.f32 %v844, %v1481
        %v1556 = vmul.f32 %v845, %v1482
        %v1557 = vmul.f32 %v846, %v1483
        %v1558 = vmul.f32 %v847, %v1484
        %v1559 = vmul.f32 %v848, %v1485
        %v1560 = vmul.f32 %v849, %v1486
        %v1561 = vmul.f32 %v850, %v1487
        %v1562 = vmul.f32 %v851, %v1488
        %v1563 = vmul.f32 %v852, %v1489
        %v1564 = vmul.f32 %v853, %v1490
        %v1565 = vmul.f32 %v854, %v1491
        %v1566 = vmul.f32 %v855, %v1492
        %v1567 = vmul.f32 %v856, %v1493
        %v1568 = vmul.f32 %v857, %v1494
        %v1569 = vmul.f32 %v858, %v1495
        %v1570 = vmul.f32 %v859, %v1496
        %v1571 = vmul.f32 %v860, %v1497
        %v1572 = vmul.f32 %v861, %v1498
        %v1573 = vmul.f32 %v862, %v1499
        %v1574 = vmul.f32 %v863, %v1500
        %v1575 = vmul.f32 %v864, %v1501
        %v1576 = vmul.f32 %v865, %v1502
        %v1577 = vmul.f32 %v866, %v1503
        %v1578 = vmul.f32 %v867, %v1504
        %v1579 = vmul.f32 %v868, %v1505
        %v1580 = vmul.f32 %v869, %v1506
        %v1581 = vmul.f32 %v870, %v1507
        %v1582 = vmul.f32 %v871, %v1508
        %v1583 = vmul.f32 %v872, %v1509
        %v1584 = vmul.f32 %v873, %v1510
        %v1585 = vmul.f32 %v874, %v1511
        %v1586 = vmul.f32 %v875, %v1512
        %v1587 = vmul.f32 %v876, %v1439
        %v1588 = vmul.f32 %v877, %v1440
        %v1589 = vmul.f32 %v878, %v1441
        %v1590 = vmul.f32 %v879, %v1442
        %v1591 = vmul.f32 %v880, %v1443
        %v1592 = vmul.f32 %v881, %v1444
        %v1593 = vmul.f32 %v882, %v1445
        %v1594 = vmul.f32 %v883, %v1446
        %v1595 = vmul.f32 %v884, %v1447
        %v1596 = vmul.f32 %v885, %v1448
        %v1597 = vmul.f32 %v886, %v1449
        %v1598 = vmul.f32 %v887, %v1450
        %v1599 = vmul.f32 %v888, %v1451
        %v1600 = vmul.f32 %v889, %v1452
        %v1601 = vmul.f32 %v890, %v1453
        %v1602 = vmul.f32 %v891, %v1454
        %v1603 = vmul.f32 %v892, %v1455
        %v1604 = vmul.f32 %v893, %v1456
        %v1605 = vmul.f32 %v894, %v1457
        %v1606 = vmul.f32 %v895, %v1458
        %v1607 = vmul.f32 %v896, %v1459
        %v1608 = vmul.f32 %v897, %v1460
        %v1609 = vmul.f32 %v898, %v1461
        %v1610 = vmul.f32 %v899, %v1462
        %v1611 = vmul.f32 %v900, %v1463
        %v1612 = vmul.f32 %v901, %v1464
        %v1613 = vmul.f32 %v902, %v1465
        %v1614 = vmul.f32 %v903, %v1466
        %v1615 = vmul.f32 %v904, %v1467
        %v1616 = vmul.f32 %v905, %v1468
        %v1617 = vmul.f32 %v906, %v1469
        %v1618 = vmul.f32 %v907, %v1470
        %v1619 = vmul.f32 %v908, %v1471
        %v1620 = vmul.f32 %v909, %v1472
        %v1621 = vmul.f32 %v910, %v1473
        %v1622 = vmul.f32 %v911, %v1474
        %v1623 = vmul.f32 %v912, %v1475
        %v1624 = vmul.f32 %v913, %v1476
        %v1625 = vmul.f32 %v914, %v1477
        %v1626 = vmul.f32 %v915, %v1478
        %v1627 = vmul.f32 %v916, %v1479
        %v1628 = vmul.f32 %v917, %v1480
        %v1629 = vmul.f32 %v918, %v1481
        %v1630 = vmul.f32 %v919, %v1482
        %v1631 = vmul.f32 %v920, %v1483
        %v1632 = vmul.f32 %v921, %v1484
        %v1633 = vmul.f32 %v922, %v1485
        %v1634 = vmul.f32 %v923, %v1486
        %v1635 = vmul.f32 %v924, %v1487
        %v1636 = vmul.f32 %v925, %v1488
        %v1637 = vmul.f32 %v926, %v1489
        %v1638 = vmul.f32 %v927, %v1490
        %v1639 = vmul.f32 %v928, %v1491
        %v1640 = vmul.f32 %v929, %v1492
        %v1641 = vmul.f32 %v930, %v1493
        %v1642 = vmul.f32 %v931, %v1494
        %v1643 = vmul.f32 %v932, %v1495
        %v1644 = vmul.f32 %v933, %v1496
        %v1645 = vmul.f32 %v934, %v1497
        %v1646 = vmul.f32 %v935, %v1498
        %v1647 = vmul.f32 %v936, %v1499
        %v1648 = vmul.f32 %v937, %v1500
        %v1649 = vmul.f32 %v938, %v1501
        %v1650 = vmul.f32 %v939, %v1502
        %v1651 = vmul.f32 %v940, %v1503
        %v1652 = vmul.f32 %v941, %v1504
        %v1653 = vmul.f32 %v942, %v1505
        %v1654 = vmul.f32 %v943, %v1506
        %v1655 = vmul.f32 %v944, %v1507
        %v1656 = vmul.f32 %v945, %v1508
        %v1657 = vmul.f32 %v946, %v1509
        %v1658 = vmul.f32 %v947, %v1510
        %v1659 = vmul.f32 %v948, %v1511
        %v1660 = vmul.f32 %v949, %v1512
        %v1661 = vadd.f32 %v1513, %v1514
        %v1662 = vadd.f32 %v1661, %v1515
        %v1663 = vadd.f32 %v1662, %v1516
        %v1664 = vadd.f32 %v1663, %v1517
        %v1665 = vadd.f32 %v1664, %v1518
        %v1666 = vadd.f32 %v1665, %v1519
        %v1667 = vadd.f32 %v1666, %v1520
        %v1668 = vadd.f32 %v1667, %v1521
        %v1669 = vadd.f32 %v1668, %v1522
        %v1670 = vadd.f32 %v1669, %v1523
        %v1671 = vadd.f32 %v1670, %v1524
        %v1672 = vadd.f32 %v1671, %v1525
        %v1673 = vadd.f32 %v1672, %v1526
        %v1674 = vadd.f32 %v1673, %v1527
        %v1675 = vadd.f32 %v1674, %v1528
        %v1676 = vadd.f32 %v1675, %v1529
        %v1677 = vadd.f32 %v1676, %v1530
        %v1678 = vadd.f32 %v1677, %v1531
        %v1679 = vadd.f32 %v1678, %v1532
        %v1680 = vadd.f32 %v1679, %v1533
        %v1681 = vadd.f32 %v1680, %v1534
        %v1682 = vadd.f32 %v1681, %v1535
        %v1683 = vadd.f32 %v1682, %v1536
        %v1684 = vadd.f32 %v1683, %v1537
        %v1685 = vadd.f32 %v1684, %v1538
        %v1686 = vadd.f32 %v1685, %v1539
        %v1687 = vadd.f32 %v1686, %v1540
        %v1688 = vadd.f32 %v1687, %v1541
        %v1689 = vadd.f32 %v1688, %v1542
        %v1690 = vadd.f32 %v1689, %v1543
        %v1691 = vadd.f32 %v1690, %v1544
        %v1692 = vadd.f32 %v1691, %v1545
        %v1693 = vadd.f32 %v1692, %v1546
        %v1694 = vadd.f32 %v1693, %v1547
        %v1695 = vadd.f32 %v1694, %v1548
        %v1696 = vsel %vm1245, %v1549, 0.0
        %v1697 = vadd.f32 %v1695, %v1696
        %1698 = vadd.xlane.f32.xlu0 %v1697
        %v1699 = vpop.xlane.xlu0 %1698
        %v1700 = vadd.f32 %v1550, %v1551
        %v1701 = vadd.f32 %v1700, %v1552
        %v1702 = vadd.f32 %v1701, %v1553
        %v1703 = vadd.f32 %v1702, %v1554
        %v1704 = vadd.f32 %v1703, %v1555
        %v1705 = vadd.f32 %v1704, %v1556
        %v1706 = vadd.f32 %v1705, %v1557
        %v1707 = vadd.f32 %v1706, %v1558
        %v1708 = vadd.f32 %v1707, %v1559
        %v1709 = vadd.f32 %v1708, %v1560
        %v1710 = vadd.f32 %v1709, %v1561
        %v1711 = vadd.f32 %v1710, %v1562
        %v1712 = vadd.f32 %v1711, %v1563
        %v1713 = vadd.f32 %v1712, %v1564
        %v1714 = vadd.f32 %v1713, %v1565
        %v1715 = vadd.f32 %v1714, %v1566
        %v1716 = vadd.f32 %v1715, %v1567
        %v1717 = vadd.f32 %v1716, %v1568
        %v1718 = vadd.f32 %v1717, %v1569
        %v1719 = vadd.f32 %v1718, %v1570
        %v1720 = vadd.f32 %v1719, %v1571
        %v1721 = vadd.f32 %v1720, %v1572
        %v1722 = vadd.f32 %v1721, %v1573
        %v1723 = vadd.f32 %v1722, %v1574
        %v1724 = vadd.f32 %v1723, %v1575
        %v1725 = vadd.f32 %v1724, %v1576
        %v1726 = vadd.f32 %v1725, %v1577
        %v1727 = vadd.f32 %v1726, %v1578
        %v1728 = vadd.f32 %v1727, %v1579
        %v1729 = vadd.f32 %v1728, %v1580
        %v1730 = vadd.f32 %v1729, %v1581
        %v1731 = vadd.f32 %v1730, %v1582
        %v1732 = vadd.f32 %v1731, %v1583
        %v1733 = vadd.f32 %v1732, %v1584
        %v1734 = vadd.f32 %v1733, %v1585
        %v1735 = vsel %vm1245, %v1586, 0.0
        %v1736 = vadd.f32 %v1734, %v1735
        %1737 = vadd.xlane.f32.xlu0 %v1736
        %v1738 = vpop.xlane.xlu0 %1737
        %v1739 = vadd.f32 %v1587, %v1588
        %v1740 = vadd.f32 %v1739, %v1589
        %v1741 = vadd.f32 %v1740, %v1590
        %v1742 = vadd.f32 %v1741, %v1591
        %v1743 = vadd.f32 %v1742, %v1592
        %v1744 = vadd.f32 %v1743, %v1593
        %v1745 = vadd.f32 %v1744, %v1594
        %v1746 = vadd.f32 %v1745, %v1595
        %v1747 = vadd.f32 %v1746, %v1596
        %v1748 = vadd.f32 %v1747, %v1597
        %v1749 = vadd.f32 %v1748, %v1598
        %v1750 = vadd.f32 %v1749, %v1599
        %v1751 = vadd.f32 %v1750, %v1600
        %v1752 = vadd.f32 %v1751, %v1601
        %v1753 = vadd.f32 %v1752, %v1602
        %v1754 = vadd.f32 %v1753, %v1603
        %v1755 = vadd.f32 %v1754, %v1604
        %v1756 = vadd.f32 %v1755, %v1605
        %v1757 = vadd.f32 %v1756, %v1606
        %v1758 = vadd.f32 %v1757, %v1607
        %v1759 = vadd.f32 %v1758, %v1608
        %v1760 = vadd.f32 %v1759, %v1609
        %v1761 = vadd.f32 %v1760, %v1610
        %v1762 = vadd.f32 %v1761, %v1611
        %v1763 = vadd.f32 %v1762, %v1612
        %v1764 = vadd.f32 %v1763, %v1613
        %v1765 = vadd.f32 %v1764, %v1614
        %v1766 = vadd.f32 %v1765, %v1615
        %v1767 = vadd.f32 %v1766, %v1616
        %v1768 = vadd.f32 %v1767, %v1617
        %v1769 = vadd.f32 %v1768, %v1618
        %v1770 = vadd.f32 %v1769, %v1619
        %v1771 = vadd.f32 %v1770, %v1620
        %v1772 = vadd.f32 %v1771, %v1621
        %v1773 = vadd.f32 %v1772, %v1622
        %v1774 = vsel %vm1245, %v1623, 0.0
        %v1775 = vadd.f32 %v1773, %v1774
        %1776 = vadd.xlane.f32.xlu0 %v1775
        %v1777 = vpop.xlane.xlu0 %1776
        %v1778 = vadd.f32 %v1624, %v1625
        %v1779 = vadd.f32 %v1778, %v1626
        %v1780 = vadd.f32 %v1779, %v1627
        %v1781 = vadd.f32 %v1780, %v1628
        %v1782 = vadd.f32 %v1781, %v1629
        %v1783 = vadd.f32 %v1782, %v1630
        %v1784 = vadd.f32 %v1783, %v1631
        %v1785 = vadd.f32 %v1784, %v1632
        %v1786 = vadd.f32 %v1785, %v1633
        %v1787 = vadd.f32 %v1786, %v1634
        %v1788 = vadd.f32 %v1787, %v1635
        %v1789 = vadd.f32 %v1788, %v1636
        %v1790 = vadd.f32 %v1789, %v1637
        %v1791 = vadd.f32 %v1790, %v1638
        %v1792 = vadd.f32 %v1791, %v1639
        %v1793 = vadd.f32 %v1792, %v1640
        %v1794 = vadd.f32 %v1793, %v1641
        %v1795 = vadd.f32 %v1794, %v1642
        %v1796 = vadd.f32 %v1795, %v1643
        %v1797 = vadd.f32 %v1796, %v1644
        %v1798 = vadd.f32 %v1797, %v1645
        %v1799 = vadd.f32 %v1798, %v1646
        %v1800 = vadd.f32 %v1799, %v1647
        %v1801 = vadd.f32 %v1800, %v1648
        %v1802 = vadd.f32 %v1801, %v1649
        %v1803 = vadd.f32 %v1802, %v1650
        %v1804 = vadd.f32 %v1803, %v1651
        %v1805 = vadd.f32 %v1804, %v1652
        %v1806 = vadd.f32 %v1805, %v1653
        %v1807 = vadd.f32 %v1806, %v1654
        %v1808 = vadd.f32 %v1807, %v1655
        %v1809 = vadd.f32 %v1808, %v1656
        %v1810 = vadd.f32 %v1809, %v1657
        %v1811 = vadd.f32 %v1810, %v1658
        %v1812 = vadd.f32 %v1811, %v1659
        %v1813 = vsel %vm1245, %v1660, 0.0
        %v1814 = vadd.f32 %v1812, %v1813
        %1815 = vadd.xlane.f32.xlu0 %v1814
        %v1816 = vpop.xlane.xlu0 %1815
        %v1821 = vlaneseq
        %v1822 = vshrl.u32 %v1821, 7
        %v1823 = vsub.s32 %v1372, %v1822
        %v1824 = vrot.slane %v1699, %v1823
        %v1825 = vlaneseq
        %v1826 = vshrl.u32 %v1825, 7
        %v1827 = vsub.s32 %v1377, %v1826
        %v1828 = vrot.slane %v1738, %v1827
        %v1829 = vsel %vm1382, %v1828, %v1824
        %v1830 = vlaneseq
        %v1831 = vshrl.u32 %v1830, 7
        %v1832 = vsub.s32 %v1372, %v1831
        %v1833 = vrot.slane %v1777, %v1832
        %v1834 = vlaneseq
        %v1835 = vshrl.u32 %v1834, 7
        %v1836 = vsub.s32 %v1377, %v1835
        %v1837 = vrot.slane %v1816, %v1836
        %v1838 = vsel %vm1382, %v1837, %v1833
        %v1839 = vsel %vm1393, %v1838, %v1829
        %v1841 = vsel %vm1396, %v1839, 0.0
        %1842 = vadd.xlane.f32.xlu0 %v1841
        %v1843 = vpop.xlane.xlu0 %1842
        %s1844 = scalar_lea.vmem %s631, 592 [#allocation5]
        %v1845 = vld [vmem:[%s1844] sm:$0xff]
        %v1846 = vld [vmem:[%s1844 + $0x8] sm:$0xff]
        %v1847 = vld [vmem:[%s1844 + $0x10] sm:$0xff]
        %v1848 = vld [vmem:[%s1844 + $0x18] sm:$0xff]
        %v1849 = vld [vmem:[%s1844 + $0x20] sm:$0xff]
        %v1850 = vld [vmem:[%s1844 + $0x28] sm:$0xff]
        %v1851 = vld [vmem:[%s1844 + $0x30] sm:$0xff]
        %v1852 = vld [vmem:[%s1844 + $0x38] sm:$0xff]
        %v1853 = vld [vmem:[%s1844 + $0x40] sm:$0xff]
        %v1854 = vld [vmem:[%s1844 + $0x48] sm:$0xff]
        %v1855 = vld [vmem:[%s1844 + $0x50] sm:$0xff]
        %v1856 = vld [vmem:[%s1844 + $0x58] sm:$0xff]
        %v1857 = vld [vmem:[%s1844 + $0x60] sm:$0xff]
        %v1858 = vld [vmem:[%s1844 + $0x68] sm:$0xff]
        %v1859 = vld [vmem:[%s1844 + $0x70] sm:$0xff]
        %v1860 = vld [vmem:[%s1844 + $0x78] sm:$0xff]
        %v1861 = vld [vmem:[%s1844 + $0x80] sm:$0xff]
        %v1862 = vld [vmem:[%s1844 + $0x88] sm:$0xff]
        %v1863 = vld [vmem:[%s1844 + $0x90] sm:$0xf]
        %v1864 = vld [vmem:[%s1844 + $0x94] sm:$0xff]
        %v1865 = vld [vmem:[%s1844 + $0x9c] sm:$0xff]
        %v1866 = vld [vmem:[%s1844 + $0xa4] sm:$0xff]
        %v1867 = vld [vmem:[%s1844 + $0xac] sm:$0xff]
        %v1868 = vld [vmem:[%s1844 + $0xb4] sm:$0xff]
        %v1869 = vld [vmem:[%s1844 + $0xbc] sm:$0xff]
        %v1870 = vld [vmem:[%s1844 + $0xc4] sm:$0xff]
        %v1871 = vld [vmem:[%s1844 + $0xcc] sm:$0xff]
        %v1872 = vld [vmem:[%s1844 + $0xd4] sm:$0xff]
        %v1873 = vld [vmem:[%s1844 + $0xdc] sm:$0xff]
        %v1874 = vld [vmem:[%s1844 + $0xe4] sm:$0xff]
        %v1875 = vld [vmem:[%s1844 + $0xec] sm:$0xff]
        %v1876 = vld [vmem:[%s1844 + $0xf4] sm:$0xff]
        %v1877 = vld [vmem:[%s1844 + $0xfc] sm:$0xff]
        %v1878 = vld [vmem:[%s1844 + $0x104] sm:$0xff]
        %v1879 = vld [vmem:[%s1844 + $0x10c] sm:$0xff]
        %v1880 = vld [vmem:[%s1844 + $0x114] sm:$0xff]
        %v1881 = vld [vmem:[%s1844 + $0x11c] sm:$0xff]
        %v1882 = vld [vmem:[%s1844 + $0x124] sm:$0xf]
        %v1883 = vunpack.c.l.bf16 %v1845
        %v1884 = vunpack.c.h.bf16 %v1845
        %v1885 = vunpack.c.l.bf16 %v1846
        %v1886 = vunpack.c.h.bf16 %v1846
        %v1887 = vunpack.c.l.bf16 %v1847
        %v1888 = vunpack.c.h.bf16 %v1847
        %v1889 = vunpack.c.l.bf16 %v1848
        %v1890 = vunpack.c.h.bf16 %v1848
        %v1891 = vunpack.c.l.bf16 %v1849
        %v1892 = vunpack.c.h.bf16 %v1849
        %v1893 = vunpack.c.l.bf16 %v1850
        %v1894 = vunpack.c.h.bf16 %v1850
        %v1895 = vunpack.c.l.bf16 %v1851
        %v1896 = vunpack.c.h.bf16 %v1851
        %v1897 = vunpack.c.l.bf16 %v1852
        %v1898 = vunpack.c.h.bf16 %v1852
        %v1899 = vunpack.c.l.bf16 %v1853
        %v1900 = vunpack.c.h.bf16 %v1853
        %v1901 = vunpack.c.l.bf16 %v1854
        %v1902 = vunpack.c.h.bf16 %v1854
        %v1903 = vunpack.c.l.bf16 %v1855
        %v1904 = vunpack.c.h.bf16 %v1855
        %v1905 = vunpack.c.l.bf16 %v1856
        %v1906 = vunpack.c.h.bf16 %v1856
        %v1907 = vunpack.c.l.bf16 %v1857
        %v1908 = vunpack.c.h.bf16 %v1857
        %v1909 = vunpack.c.l.bf16 %v1858
        %v1910 = vunpack.c.h.bf16 %v1858
        %v1911 = vunpack.c.l.bf16 %v1859
        %v1912 = vunpack.c.h.bf16 %v1859
        %v1913 = vunpack.c.l.bf16 %v1860
        %v1914 = vunpack.c.h.bf16 %v1860
        %v1915 = vunpack.c.l.bf16 %v1861
        %v1916 = vunpack.c.h.bf16 %v1861
        %v1917 = vunpack.c.l.bf16 %v1862
        %v1918 = vunpack.c.h.bf16 %v1862
        %v1919 = vunpack.c.l.bf16 %v1863
        %v1920 = vunpack.c.l.bf16 %v1864
        %v1921 = vunpack.c.h.bf16 %v1864
        %v1922 = vunpack.c.l.bf16 %v1865
        %v1923 = vunpack.c.h.bf16 %v1865
        %v1924 = vunpack.c.l.bf16 %v1866
        %v1925 = vunpack.c.h.bf16 %v1866
        %v1926 = vunpack.c.l.bf16 %v1867
        %v1927 = vunpack.c.h.bf16 %v1867
        %v1928 = vunpack.c.l.bf16 %v1868
        %v1929 = vunpack.c.h.bf16 %v1868
        %v1930 = vunpack.c.l.bf16 %v1869
        %v1931 = vunpack.c.h.bf16 %v1869
        %v1932 = vunpack.c.l.bf16 %v1870
        %v1933 = vunpack.c.h.bf16 %v1870
        %v1934 = vunpack.c.l.bf16 %v1871
        %v1935 = vunpack.c.h.bf16 %v1871
        %v1936 = vunpack.c.l.bf16 %v1872
        %v1937 = vunpack.c.h.bf16 %v1872
        %v1938 = vunpack.c.l.bf16 %v1873
        %v1939 = vunpack.c.h.bf16 %v1873
        %v1940 = vunpack.c.l.bf16 %v1874
        %v1941 = vunpack.c.h.bf16 %v1874
        %v1942 = vunpack.c.l.bf16 %v1875
        %v1943 = vunpack.c.h.bf16 %v1875
        %v1944 = vunpack.c.l.bf16 %v1876
        %v1945 = vunpack.c.h.bf16 %v1876
        %v1946 = vunpack.c.l.bf16 %v1877
        %v1947 = vunpack.c.h.bf16 %v1877
        %v1948 = vunpack.c.l.bf16 %v1878
        %v1949 = vunpack.c.h.bf16 %v1878
        %v1950 = vunpack.c.l.bf16 %v1879
        %v1951 = vunpack.c.h.bf16 %v1879
        %v1952 = vunpack.c.l.bf16 %v1880
        %v1953 = vunpack.c.h.bf16 %v1880
        %v1954 = vunpack.c.l.bf16 %v1881
        %v1955 = vunpack.c.h.bf16 %v1881
        %v1956 = vunpack.c.l.bf16 %v1882
        %v1957 = vmul.f32 %v802, %v1883
        %v1958 = vmul.f32 %v803, %v1884
        %v1959 = vmul.f32 %v804, %v1885
        %v1960 = vmul.f32 %v805, %v1886
        %v1961 = vmul.f32 %v806, %v1887
        %v1962 = vmul.f32 %v807, %v1888
        %v1963 = vmul.f32 %v808, %v1889
        %v1964 = vmul.f32 %v809, %v1890
        %v1965 = vmul.f32 %v810, %v1891
        %v1966 = vmul.f32 %v811, %v1892
        %v1967 = vmul.f32 %v812, %v1893
        %v1968 = vmul.f32 %v813, %v1894
        %v1969 = vmul.f32 %v814, %v1895
        %v1970 = vmul.f32 %v815, %v1896
        %v1971 = vmul.f32 %v816, %v1897
        %v1972 = vmul.f32 %v817, %v1898
        %v1973 = vmul.f32 %v818, %v1899
        %v1974 = vmul.f32 %v819, %v1900
        %v1975 = vmul.f32 %v820, %v1901
        %v1976 = vmul.f32 %v821, %v1902
        %v1977 = vmul.f32 %v822, %v1903
        %v1978 = vmul.f32 %v823, %v1904
        %v1979 = vmul.f32 %v824, %v1905
        %v1980 = vmul.f32 %v825, %v1906
        %v1981 = vmul.f32 %v826, %v1907
        %v1982 = vmul.f32 %v827, %v1908
        %v1983 = vmul.f32 %v828, %v1909
        %v1984 = vmul.f32 %v829, %v1910
        %v1985 = vmul.f32 %v830, %v1911
        %v1986 = vmul.f32 %v831, %v1912
        %v1987 = vmul.f32 %v832, %v1913
        %v1988 = vmul.f32 %v833, %v1914
        %v1989 = vmul.f32 %v834, %v1915
        %v1990 = vmul.f32 %v835, %v1916
        %v1991 = vmul.f32 %v836, %v1917
        %v1992 = vmul.f32 %v837, %v1918
        %v1993 = vmul.f32 %v838, %v1919
        %v1994 = vmul.f32 %v839, %v1920
        %v1995 = vmul.f32 %v840, %v1921
        %v1996 = vmul.f32 %v841, %v1922
        %v1997 = vmul.f32 %v842, %v1923
        %v1998 = vmul.f32 %v843, %v1924
        %v1999 = vmul.f32 %v844, %v1925
        %v2000 = vmul.f32 %v845, %v1926
        %v2001 = vmul.f32 %v846, %v1927
        %v2002 = vmul.f32 %v847, %v1928
        %v2003 = vmul.f32 %v848, %v1929
        %v2004 = vmul.f32 %v849, %v1930
        %v2005 = vmul.f32 %v850, %v1931
        %v2006 = vmul.f32 %v851, %v1932
        %v2007 = vmul.f32 %v852, %v1933
        %v2008 = vmul.f32 %v853, %v1934
        %v2009 = vmul.f32 %v854, %v1935
        %v2010 = vmul.f32 %v855, %v1936
        %v2011 = vmul.f32 %v856, %v1937
        %v2012 = vmul.f32 %v857, %v1938
        %v2013 = vmul.f32 %v858, %v1939
        %v2014 = vmul.f32 %v859, %v1940
        %v2015 = vmul.f32 %v860, %v1941
        %v2016 = vmul.f32 %v861, %v1942
        %v2017 = vmul.f32 %v862, %v1943
        %v2018 = vmul.f32 %v863, %v1944
        %v2019 = vmul.f32 %v864, %v1945
        %v2020 = vmul.f32 %v865, %v1946
        %v2021 = vmul.f32 %v866, %v1947
        %v2022 = vmul.f32 %v867, %v1948
        %v2023 = vmul.f32 %v868, %v1949
        %v2024 = vmul.f32 %v869, %v1950
        %v2025 = vmul.f32 %v870, %v1951
        %v2026 = vmul.f32 %v871, %v1952
        %v2027 = vmul.f32 %v872, %v1953
        %v2028 = vmul.f32 %v873, %v1954
        %v2029 = vmul.f32 %v874, %v1955
        %v2030 = vmul.f32 %v875, %v1956
        %v2031 = vmul.f32 %v876, %v1883
        %v2032 = vmul.f32 %v877, %v1884
        %v2033 = vmul.f32 %v878, %v1885
        %v2034 = vmul.f32 %v879, %v1886
        %v2035 = vmul.f32 %v880, %v1887
        %v2036 = vmul.f32 %v881, %v1888
        %v2037 = vmul.f32 %v882, %v1889
        %v2038 = vmul.f32 %v883, %v1890
        %v2039 = vmul.f32 %v884, %v1891
        %v2040 = vmul.f32 %v885, %v1892
        %v2041 = vmul.f32 %v886, %v1893
        %v2042 = vmul.f32 %v887, %v1894
        %v2043 = vmul.f32 %v888, %v1895
        %v2044 = vmul.f32 %v889, %v1896
        %v2045 = vmul.f32 %v890, %v1897
        %v2046 = vmul.f32 %v891, %v1898
        %v2047 = vmul.f32 %v892, %v1899
        %v2048 = vmul.f32 %v893, %v1900
        %v2049 = vmul.f32 %v894, %v1901
        %v2050 = vmul.f32 %v895, %v1902
        %v2051 = vmul.f32 %v896, %v1903
        %v2052 = vmul.f32 %v897, %v1904
        %v2053 = vmul.f32 %v898, %v1905
        %v2054 = vmul.f32 %v899, %v1906
        %v2055 = vmul.f32 %v900, %v1907
        %v2056 = vmul.f32 %v901, %v1908
        %v2057 = vmul.f32 %v902, %v1909
        %v2058 = vmul.f32 %v903, %v1910
        %v2059 = vmul.f32 %v904, %v1911
        %v2060 = vmul.f32 %v905, %v1912
        %v2061 = vmul.f32 %v906, %v1913
        %v2062 = vmul.f32 %v907, %v1914
        %v2063 = vmul.f32 %v908, %v1915
        %v2064 = vmul.f32 %v909, %v1916
        %v2065 = vmul.f32 %v910, %v1917
        %v2066 = vmul.f32 %v911, %v1918
        %v2067 = vmul.f32 %v912, %v1919
        %v2068 = vmul.f32 %v913, %v1920
        %v2069 = vmul.f32 %v914, %v1921
        %v2070 = vmul.f32 %v915, %v1922
        %v2071 = vmul.f32 %v916, %v1923
        %v2072 = vmul.f32 %v917, %v1924
        %v2073 = vmul.f32 %v918, %v1925
        %v2074 = vmul.f32 %v919, %v1926
        %v2075 = vmul.f32 %v920, %v1927
        %v2076 = vmul.f32 %v921, %v1928
        %v2077 = vmul.f32 %v922, %v1929
        %v2078 = vmul.f32 %v923, %v1930
        %v2079 = vmul.f32 %v924, %v1931
        %v2080 = vmul.f32 %v925, %v1932
        %v2081 = vmul.f32 %v926, %v1933
        %v2082 = vmul.f32 %v927, %v1934
        %v2083 = vmul.f32 %v928, %v1935
        %v2084 = vmul.f32 %v929, %v1936
        %v2085 = vmul.f32 %v930, %v1937
        %v2086 = vmul.f32 %v931, %v1938
        %v2087 = vmul.f32 %v932, %v1939
        %v2088 = vmul.f32 %v933, %v1940
        %v2089 = vmul.f32 %v934, %v1941
        %v2090 = vmul.f32 %v935, %v1942
        %v2091 = vmul.f32 %v936, %v1943
        %v2092 = vmul.f32 %v937, %v1944
        %v2093 = vmul.f32 %v938, %v1945
        %v2094 = vmul.f32 %v939, %v1946
        %v2095 = vmul.f32 %v940, %v1947
        %v2096 = vmul.f32 %v941, %v1948
        %v2097 = vmul.f32 %v942, %v1949
        %v2098 = vmul.f32 %v943, %v1950
        %v2099 = vmul.f32 %v944, %v1951
        %v2100 = vmul.f32 %v945, %v1952
        %v2101 = vmul.f32 %v946, %v1953
        %v2102 = vmul.f32 %v947, %v1954
        %v2103 = vmul.f32 %v948, %v1955
        %v2104 = vmul.f32 %v949, %v1956
        %v2105 = vadd.f32 %v1957, %v1958
        %v2106 = vadd.f32 %v2105, %v1959
        %v2107 = vadd.f32 %v2106, %v1960
        %v2108 = vadd.f32 %v2107, %v1961
        %v2109 = vadd.f32 %v2108, %v1962
        %v2110 = vadd.f32 %v2109, %v1963
        %v2111 = vadd.f32 %v2110, %v1964
        %v2112 = vadd.f32 %v2111, %v1965
        %v2113 = vadd.f32 %v2112, %v1966
        %v2114 = vadd.f32 %v2113, %v1967
        %v2115 = vadd.f32 %v2114, %v1968
        %v2116 = vadd.f32 %v2115, %v1969
        %v2117 = vadd.f32 %v2116, %v1970
        %v2118 = vadd.f32 %v2117, %v1971
        %v2119 = vadd.f32 %v2118, %v1972
        %v2120 = vadd.f32 %v2119, %v1973
        %v2121 = vadd.f32 %v2120, %v1974
        %v2122 = vadd.f32 %v2121, %v1975
        %v2123 = vadd.f32 %v2122, %v1976
        %v2124 = vadd.f32 %v2123, %v1977
        %v2125 = vadd.f32 %v2124, %v1978
        %v2126 = vadd.f32 %v2125, %v1979
        %v2127 = vadd.f32 %v2126, %v1980
        %v2128 = vadd.f32 %v2127, %v1981
        %v2129 = vadd.f32 %v2128, %v1982
        %v2130 = vadd.f32 %v2129, %v1983
        %v2131 = vadd.f32 %v2130, %v1984
        %v2132 = vadd.f32 %v2131, %v1985
        %v2133 = vadd.f32 %v2132, %v1986
        %v2134 = vadd.f32 %v2133, %v1987
        %v2135 = vadd.f32 %v2134, %v1988
        %v2136 = vadd.f32 %v2135, %v1989
        %v2137 = vadd.f32 %v2136, %v1990
        %v2138 = vadd.f32 %v2137, %v1991
        %v2139 = vadd.f32 %v2138, %v1992
        %v2140 = vsel %vm1245, %v1993, 0.0
        %v2141 = vadd.f32 %v2139, %v2140
        %2142 = vadd.xlane.f32.xlu0 %v2141
        %v2143 = vpop.xlane.xlu0 %2142
        %v2144 = vadd.f32 %v1994, %v1995
        %v2145 = vadd.f32 %v2144, %v1996
        %v2146 = vadd.f32 %v2145, %v1997
        %v2147 = vadd.f32 %v2146, %v1998
        %v2148 = vadd.f32 %v2147, %v1999
        %v2149 = vadd.f32 %v2148, %v2000
        %v2150 = vadd.f32 %v2149, %v2001
        %v2151 = vadd.f32 %v2150, %v2002
        %v2152 = vadd.f32 %v2151, %v2003
        %v2153 = vadd.f32 %v2152, %v2004
        %v2154 = vadd.f32 %v2153, %v2005
        %v2155 = vadd.f32 %v2154, %v2006
        %v2156 = vadd.f32 %v2155, %v2007
        %v2157 = vadd.f32 %v2156, %v2008
        %v2158 = vadd.f32 %v2157, %v2009
        %v2159 = vadd.f32 %v2158, %v2010
        %v2160 = vadd.f32 %v2159, %v2011
        %v2161 = vadd.f32 %v2160, %v2012
        %v2162 = vadd.f32 %v2161, %v2013
        %v2163 = vadd.f32 %v2162, %v2014
        %v2164 = vadd.f32 %v2163, %v2015
        %v2165 = vadd.f32 %v2164, %v2016
        %v2166 = vadd.f32 %v2165, %v2017
        %v2167 = vadd.f32 %v2166, %v2018
        %v2168 = vadd.f32 %v2167, %v2019
        %v2169 = vadd.f32 %v2168, %v2020
        %v2170 = vadd.f32 %v2169, %v2021
        %v2171 = vadd.f32 %v2170, %v2022
        %v2172 = vadd.f32 %v2171, %v2023
        %v2173 = vadd.f32 %v2172, %v2024
        %v2174 = vadd.f32 %v2173, %v2025
        %v2175 = vadd.f32 %v2174, %v2026
        %v2176 = vadd.f32 %v2175, %v2027
        %v2177 = vadd.f32 %v2176, %v2028
        %v2178 = vadd.f32 %v2177, %v2029
        %v2179 = vsel %vm1245, %v2030, 0.0
        %v2180 = vadd.f32 %v2178, %v2179
        %2181 = vadd.xlane.f32.xlu0 %v2180
        %v2182 = vpop.xlane.xlu0 %2181
        %v2183 = vadd.f32 %v2031, %v2032
        %v2184 = vadd.f32 %v2183, %v2033
        %v2185 = vadd.f32 %v2184, %v2034
        %v2186 = vadd.f32 %v2185, %v2035
        %v2187 = vadd.f32 %v2186, %v2036
        %v2188 = vadd.f32 %v2187, %v2037
        %v2189 = vadd.f32 %v2188, %v2038
        %v2190 = vadd.f32 %v2189, %v2039
        %v2191 = vadd.f32 %v2190, %v2040
        %v2192 = vadd.f32 %v2191, %v2041
        %v2193 = vadd.f32 %v2192, %v2042
        %v2194 = vadd.f32 %v2193, %v2043
        %v2195 = vadd.f32 %v2194, %v2044
        %v2196 = vadd.f32 %v2195, %v2045
        %v2197 = vadd.f32 %v2196, %v2046
        %v2198 = vadd.f32 %v2197, %v2047
        %v2199 = vadd.f32 %v2198, %v2048
        %v2200 = vadd.f32 %v2199, %v2049
        %v2201 = vadd.f32 %v2200, %v2050
        %v2202 = vadd.f32 %v2201, %v2051
        %v2203 = vadd.f32 %v2202, %v2052
        %v2204 = vadd.f32 %v2203, %v2053
        %v2205 = vadd.f32 %v2204, %v2054
        %v2206 = vadd.f32 %v2205, %v2055
        %v2207 = vadd.f32 %v2206, %v2056
        %v2208 = vadd.f32 %v2207, %v2057
        %v2209 = vadd.f32 %v2208, %v2058
        %v2210 = vadd.f32 %v2209, %v2059
        %v2211 = vadd.f32 %v2210, %v2060
        %v2212 = vadd.f32 %v2211, %v2061
        %v2213 = vadd.f32 %v2212, %v2062
        %v2214 = vadd.f32 %v2213, %v2063
        %v2215 = vadd.f32 %v2214, %v2064
        %v2216 = vadd.f32 %v2215, %v2065
        %v2217 = vadd.f32 %v2216, %v2066
        %v2218 = vsel %vm1245, %v2067, 0.0
        %v2219 = vadd.f32 %v2217, %v2218
        %2220 = vadd.xlane.f32.xlu0 %v2219
        %v2221 = vpop.xlane.xlu0 %2220
        %v2222 = vadd.f32 %v2068, %v2069
        %v2223 = vadd.f32 %v2222, %v2070
        %v2224 = vadd.f32 %v2223, %v2071
        %v2225 = vadd.f32 %v2224, %v2072
        %v2226 = vadd.f32 %v2225, %v2073
        %v2227 = vadd.f32 %v2226, %v2074
        %v2228 = vadd.f32 %v2227, %v2075
        %v2229 = vadd.f32 %v2228, %v2076
        %v2230 = vadd.f32 %v2229, %v2077
        %v2231 = vadd.f32 %v2230, %v2078
        %v2232 = vadd.f32 %v2231, %v2079
        %v2233 = vadd.f32 %v2232, %v2080
        %v2234 = vadd.f32 %v2233, %v2081
        %v2235 = vadd.f32 %v2234, %v2082
        %v2236 = vadd.f32 %v2235, %v2083
        %v2237 = vadd.f32 %v2236, %v2084
        %v2238 = vadd.f32 %v2237, %v2085
        %v2239 = vadd.f32 %v2238, %v2086
        %v2240 = vadd.f32 %v2239, %v2087
        %v2241 = vadd.f32 %v2240, %v2088
        %v2242 = vadd.f32 %v2241, %v2089
        %v2243 = vadd.f32 %v2242, %v2090
        %v2244 = vadd.f32 %v2243, %v2091
        %v2245 = vadd.f32 %v2244, %v2092
        %v2246 = vadd.f32 %v2245, %v2093
        %v2247 = vadd.f32 %v2246, %v2094
        %v2248 = vadd.f32 %v2247, %v2095
        %v2249 = vadd.f32 %v2248, %v2096
        %v2250 = vadd.f32 %v2249, %v2097
        %v2251 = vadd.f32 %v2250, %v2098
        %v2252 = vadd.f32 %v2251, %v2099
        %v2253 = vadd.f32 %v2252, %v2100
        %v2254 = vadd.f32 %v2253, %v2101
        %v2255 = vadd.f32 %v2254, %v2102
        %v2256 = vadd.f32 %v2255, %v2103
        %v2257 = vsel %vm1245, %v2104, 0.0
        %v2258 = vadd.f32 %v2256, %v2257
        %2259 = vadd.xlane.f32.xlu0 %v2258
        %v2260 = vpop.xlane.xlu0 %2259
        %v2265 = vlaneseq
        %v2266 = vshrl.u32 %v2265, 7
        %v2267 = vsub.s32 %v1372, %v2266
        %v2268 = vrot.slane %v2143, %v2267
        %v2269 = vlaneseq
        %v2270 = vshrl.u32 %v2269, 7
        %v2271 = vsub.s32 %v1377, %v2270
        %v2272 = vrot.slane %v2182, %v2271
        %v2273 = vsel %vm1382, %v2272, %v2268
        %v2274 = vlaneseq
        %v2275 = vshrl.u32 %v2274, 7
        %v2276 = vsub.s32 %v1372, %v2275
        %v2277 = vrot.slane %v2221, %v2276
        %v2278 = vlaneseq
        %v2279 = vshrl.u32 %v2278, 7
        %v2280 = vsub.s32 %v1377, %v2279
        %v2281 = vrot.slane %v2260, %v2280
        %v2282 = vsel %vm1382, %v2281, %v2277
        %v2283 = vsel %vm1393, %v2282, %v2273
        %v2285 = vsel %vm1396, %v2283, 0.0
        %2286 = vadd.xlane.f32.xlu0 %v2285
        %v2287 = vpop.xlane.xlu0 %2286
        %s2288 = scalar_lea.vmem %s631, 888 [#allocation5]
        %v2289 = vld [vmem:[%s2288] sm:$0xff]
        %v2290 = vld [vmem:[%s2288 + $0x8] sm:$0xff]
        %v2291 = vld [vmem:[%s2288 + $0x10] sm:$0xff]
        %v2292 = vld [vmem:[%s2288 + $0x18] sm:$0xff]
        %v2293 = vld [vmem:[%s2288 + $0x20] sm:$0xff]
        %v2294 = vld [vmem:[%s2288 + $0x28] sm:$0xff]
        %v2295 = vld [vmem:[%s2288 + $0x30] sm:$0xff]
        %v2296 = vld [vmem:[%s2288 + $0x38] sm:$0xff]
        %v2297 = vld [vmem:[%s2288 + $0x40] sm:$0xff]
        %v2298 = vld [vmem:[%s2288 + $0x48] sm:$0xff]
        %v2299 = vld [vmem:[%s2288 + $0x50] sm:$0xff]
        %v2300 = vld [vmem:[%s2288 + $0x58] sm:$0xff]
        %v2301 = vld [vmem:[%s2288 + $0x60] sm:$0xff]
        %v2302 = vld [vmem:[%s2288 + $0x68] sm:$0xff]
        %v2303 = vld [vmem:[%s2288 + $0x70] sm:$0xff]
        %v2304 = vld [vmem:[%s2288 + $0x78] sm:$0xff]
        %v2305 = vld [vmem:[%s2288 + $0x80] sm:$0xff]
        %v2306 = vld [vmem:[%s2288 + $0x88] sm:$0xff]
        %v2307 = vld [vmem:[%s2288 + $0x90] sm:$0xf]
        %v2308 = vld [vmem:[%s2288 + $0x94] sm:$0xff]
        %v2309 = vld [vmem:[%s2288 + $0x9c] sm:$0xff]
        %v2310 = vld [vmem:[%s2288 + $0xa4] sm:$0xff]
        %v2311 = vld [vmem:[%s2288 + $0xac] sm:$0xff]
        %v2312 = vld [vmem:[%s2288 + $0xb4] sm:$0xff]
        %v2313 = vld [vmem:[%s2288 + $0xbc] sm:$0xff]
        %v2314 = vld [vmem:[%s2288 + $0xc4] sm:$0xff]
        %v2315 = vld [vmem:[%s2288 + $0xcc] sm:$0xff]
        %v2316 = vld [vmem:[%s2288 + $0xd4] sm:$0xff]
        %v2317 = vld [vmem:[%s2288 + $0xdc] sm:$0xff]
        %v2318 = vld [vmem:[%s2288 + $0xe4] sm:$0xff]
        %v2319 = vld [vmem:[%s2288 + $0xec] sm:$0xff]
        %v2320 = vld [vmem:[%s2288 + $0xf4] sm:$0xff]
        %v2321 = vld [vmem:[%s2288 + $0xfc] sm:$0xff]
        %v2322 = vld [vmem:[%s2288 + $0x104] sm:$0xff]
        %v2323 = vld [vmem:[%s2288 + $0x10c] sm:$0xff]
        %v2324 = vld [vmem:[%s2288 + $0x114] sm:$0xff]
        %v2325 = vld [vmem:[%s2288 + $0x11c] sm:$0xff]
        %v2326 = vld [vmem:[%s2288 + $0x124] sm:$0xf]
        %v2327 = vunpack.c.l.bf16 %v2289
        %v2328 = vunpack.c.h.bf16 %v2289
        %v2329 = vunpack.c.l.bf16 %v2290
        %v2330 = vunpack.c.h.bf16 %v2290
        %v2331 = vunpack.c.l.bf16 %v2291
        %v2332 = vunpack.c.h.bf16 %v2291
        %v2333 = vunpack.c.l.bf16 %v2292
        %v2334 = vunpack.c.h.bf16 %v2292
        %v2335 = vunpack.c.l.bf16 %v2293
        %v2336 = vunpack.c.h.bf16 %v2293
        %v2337 = vunpack.c.l.bf16 %v2294
        %v2338 = vunpack.c.h.bf16 %v2294
        %v2339 = vunpack.c.l.bf16 %v2295
        %v2340 = vunpack.c.h.bf16 %v2295
        %v2341 = vunpack.c.l.bf16 %v2296
        %v2342 = vunpack.c.h.bf16 %v2296
        %v2343 = vunpack.c.l.bf16 %v2297
        %v2344 = vunpack.c.h.bf16 %v2297
        %v2345 = vunpack.c.l.bf16 %v2298
        %v2346 = vunpack.c.h.bf16 %v2298
        %v2347 = vunpack.c.l.bf16 %v2299
        %v2348 = vunpack.c.h.bf16 %v2299
        %v2349 = vunpack.c.l.bf16 %v2300
        %v2350 = vunpack.c.h.bf16 %v2300
        %v2351 = vunpack.c.l.bf16 %v2301
        %v2352 = vunpack.c.h.bf16 %v2301
        %v2353 = vunpack.c.l.bf16 %v2302
        %v2354 = vunpack.c.h.bf16 %v2302
        %v2355 = vunpack.c.l.bf16 %v2303
        %v2356 = vunpack.c.h.bf16 %v2303
        %v2357 = vunpack.c.l.bf16 %v2304
        %v2358 = vunpack.c.h.bf16 %v2304
        %v2359 = vunpack.c.l.bf16 %v2305
        %v2360 = vunpack.c.h.bf16 %v2305
        %v2361 = vunpack.c.l.bf16 %v2306
        %v2362 = vunpack.c.h.bf16 %v2306
        %v2363 = vunpack.c.l.bf16 %v2307
        %v2364 = vunpack.c.l.bf16 %v2308
        %v2365 = vunpack.c.h.bf16 %v2308
        %v2366 = vunpack.c.l.bf16 %v2309
        %v2367 = vunpack.c.h.bf16 %v2309
        %v2368 = vunpack.c.l.bf16 %v2310
        %v2369 = vunpack.c.h.bf16 %v2310
        %v2370 = vunpack.c.l.bf16 %v2311
        %v2371 = vunpack.c.h.bf16 %v2311
        %v2372 = vunpack.c.l.bf16 %v2312
        %v2373 = vunpack.c.h.bf16 %v2312
        %v2374 = vunpack.c.l.bf16 %v2313
        %v2375 = vunpack.c.h.bf16 %v2313
        %v2376 = vunpack.c.l.bf16 %v2314
        %v2377 = vunpack.c.h.bf16 %v2314
        %v2378 = vunpack.c.l.bf16 %v2315
        %v2379 = vunpack.c.h.bf16 %v2315
        %v2380 = vunpack.c.l.bf16 %v2316
        %v2381 = vunpack.c.h.bf16 %v2316
        %v2382 = vunpack.c.l.bf16 %v2317
        %v2383 = vunpack.c.h.bf16 %v2317
        %v2384 = vunpack.c.l.bf16 %v2318
        %v2385 = vunpack.c.h.bf16 %v2318
        %v2386 = vunpack.c.l.bf16 %v2319
        %v2387 = vunpack.c.h.bf16 %v2319
        %v2388 = vunpack.c.l.bf16 %v2320
        %v2389 = vunpack.c.h.bf16 %v2320
        %v2390 = vunpack.c.l.bf16 %v2321
        %v2391 = vunpack.c.h.bf16 %v2321
        %v2392 = vunpack.c.l.bf16 %v2322
        %v2393 = vunpack.c.h.bf16 %v2322
        %v2394 = vunpack.c.l.bf16 %v2323
        %v2395 = vunpack.c.h.bf16 %v2323
        %v2396 = vunpack.c.l.bf16 %v2324
        %v2397 = vunpack.c.h.bf16 %v2324
        %v2398 = vunpack.c.l.bf16 %v2325
        %v2399 = vunpack.c.h.bf16 %v2325
        %v2400 = vunpack.c.l.bf16 %v2326
        %v2401 = vmul.f32 %v802, %v2327
        %v2402 = vmul.f32 %v803, %v2328
        %v2403 = vmul.f32 %v804, %v2329
        %v2404 = vmul.f32 %v805, %v2330
        %v2405 = vmul.f32 %v806, %v2331
        %v2406 = vmul.f32 %v807, %v2332
        %v2407 = vmul.f32 %v808, %v2333
        %v2408 = vmul.f32 %v809, %v2334
        %v2409 = vmul.f32 %v810, %v2335
        %v2410 = vmul.f32 %v811, %v2336
        %v2411 = vmul.f32 %v812, %v2337
        %v2412 = vmul.f32 %v813, %v2338
        %v2413 = vmul.f32 %v814, %v2339
        %v2414 = vmul.f32 %v815, %v2340
        %v2415 = vmul.f32 %v816, %v2341
        %v2416 = vmul.f32 %v817, %v2342
        %v2417 = vmul.f32 %v818, %v2343
        %v2418 = vmul.f32 %v819, %v2344
        %v2419 = vmul.f32 %v820, %v2345
        %v2420 = vmul.f32 %v821, %v2346
        %v2421 = vmul.f32 %v822, %v2347
        %v2422 = vmul.f32 %v823, %v2348
        %v2423 = vmul.f32 %v824, %v2349
        %v2424 = vmul.f32 %v825, %v2350
        %v2425 = vmul.f32 %v826, %v2351
        %v2426 = vmul.f32 %v827, %v2352
        %v2427 = vmul.f32 %v828, %v2353
        %v2428 = vmul.f32 %v829, %v2354
        %v2429 = vmul.f32 %v830, %v2355
        %v2430 = vmul.f32 %v831, %v2356
        %v2431 = vmul.f32 %v832, %v2357
        %v2432 = vmul.f32 %v833, %v2358
        %v2433 = vmul.f32 %v834, %v2359
        %v2434 = vmul.f32 %v835, %v2360
        %v2435 = vmul.f32 %v836, %v2361
        %v2436 = vmul.f32 %v837, %v2362
        %v2437 = vmul.f32 %v838, %v2363
        %v2438 = vmul.f32 %v839, %v2364
        %v2439 = vmul.f32 %v840, %v2365
        %v2440 = vmul.f32 %v841, %v2366
        %v2441 = vmul.f32 %v842, %v2367
        %v2442 = vmul.f32 %v843, %v2368
        %v2443 = vmul.f32 %v844, %v2369
        %v2444 = vmul.f32 %v845, %v2370
        %v2445 = vmul.f32 %v846, %v2371
        %v2446 = vmul.f32 %v847, %v2372
        %v2447 = vmul.f32 %v848, %v2373
        %v2448 = vmul.f32 %v849, %v2374
        %v2449 = vmul.f32 %v850, %v2375
        %v2450 = vmul.f32 %v851, %v2376
        %v2451 = vmul.f32 %v852, %v2377
        %v2452 = vmul.f32 %v853, %v2378
        %v2453 = vmul.f32 %v854, %v2379
        %v2454 = vmul.f32 %v855, %v2380
        %v2455 = vmul.f32 %v856, %v2381
        %v2456 = vmul.f32 %v857, %v2382
        %v2457 = vmul.f32 %v858, %v2383
        %v2458 = vmul.f32 %v859, %v2384
        %v2459 = vmul.f32 %v860, %v2385
        %v2460 = vmul.f32 %v861, %v2386
        %v2461 = vmul.f32 %v862, %v2387
        %v2462 = vmul.f32 %v863, %v2388
        %v2463 = vmul.f32 %v864, %v2389
        %v2464 = vmul.f32 %v865, %v2390
        %v2465 = vmul.f32 %v866, %v2391
        %v2466 = vmul.f32 %v867, %v2392
        %v2467 = vmul.f32 %v868, %v2393
        %v2468 = vmul.f32 %v869, %v2394
        %v2469 = vmul.f32 %v870, %v2395
        %v2470 = vmul.f32 %v871, %v2396
        %v2471 = vmul.f32 %v872, %v2397
        %v2472 = vmul.f32 %v873, %v2398
        %v2473 = vmul.f32 %v874, %v2399
        %v2474 = vmul.f32 %v875, %v2400
        %v2475 = vmul.f32 %v876, %v2327
        %v2476 = vmul.f32 %v877, %v2328
        %v2477 = vmul.f32 %v878, %v2329
        %v2478 = vmul.f32 %v879, %v2330
        %v2479 = vmul.f32 %v880, %v2331
        %v2480 = vmul.f32 %v881, %v2332
        %v2481 = vmul.f32 %v882, %v2333
        %v2482 = vmul.f32 %v883, %v2334
        %v2483 = vmul.f32 %v884, %v2335
        %v2484 = vmul.f32 %v885, %v2336
        %v2485 = vmul.f32 %v886, %v2337
        %v2486 = vmul.f32 %v887, %v2338
        %v2487 = vmul.f32 %v888, %v2339
        %v2488 = vmul.f32 %v889, %v2340
        %v2489 = vmul.f32 %v890, %v2341
        %v2490 = vmul.f32 %v891, %v2342
        %v2491 = vmul.f32 %v892, %v2343
        %v2492 = vmul.f32 %v893, %v2344
        %v2493 = vmul.f32 %v894, %v2345
        %v2494 = vmul.f32 %v895, %v2346
        %v2495 = vmul.f32 %v896, %v2347
        %v2496 = vmul.f32 %v897, %v2348
        %v2497 = vmul.f32 %v898, %v2349
        %v2498 = vmul.f32 %v899, %v2350
        %v2499 = vmul.f32 %v900, %v2351
        %v2500 = vmul.f32 %v901, %v2352
        %v2501 = vmul.f32 %v902, %v2353
        %v2502 = vmul.f32 %v903, %v2354
        %v2503 = vmul.f32 %v904, %v2355
        %v2504 = vmul.f32 %v905, %v2356
        %v2505 = vmul.f32 %v906, %v2357
        %v2506 = vmul.f32 %v907, %v2358
        %v2507 = vmul.f32 %v908, %v2359
        %v2508 = vmul.f32 %v909, %v2360
        %v2509 = vmul.f32 %v910, %v2361
        %v2510 = vmul.f32 %v911, %v2362
        %v2511 = vmul.f32 %v912, %v2363
        %v2512 = vmul.f32 %v913, %v2364
        %v2513 = vmul.f32 %v914, %v2365
        %v2514 = vmul.f32 %v915, %v2366
        %v2515 = vmul.f32 %v916, %v2367
        %v2516 = vmul.f32 %v917, %v2368
        %v2517 = vmul.f32 %v918, %v2369
        %v2518 = vmul.f32 %v919, %v2370
        %v2519 = vmul.f32 %v920, %v2371
        %v2520 = vmul.f32 %v921, %v2372
        %v2521 = vmul.f32 %v922, %v2373
        %v2522 = vmul.f32 %v923, %v2374
        %v2523 = vmul.f32 %v924, %v2375
        %v2524 = vmul.f32 %v925, %v2376
        %v2525 = vmul.f32 %v926, %v2377
        %v2526 = vmul.f32 %v927, %v2378
        %v2527 = vmul.f32 %v928, %v2379
        %v2528 = vmul.f32 %v929, %v2380
        %v2529 = vmul.f32 %v930, %v2381
        %v2530 = vmul.f32 %v931, %v2382
        %v2531 = vmul.f32 %v932, %v2383
        %v2532 = vmul.f32 %v933, %v2384
        %v2533 = vmul.f32 %v934, %v2385
        %v2534 = vmul.f32 %v935, %v2386
        %v2535 = vmul.f32 %v936, %v2387
        %v2536 = vmul.f32 %v937, %v2388
        %v2537 = vmul.f32 %v938, %v2389
        %v2538 = vmul.f32 %v939, %v2390
        %v2539 = vmul.f32 %v940, %v2391
        %v2540 = vmul.f32 %v941, %v2392
        %v2541 = vmul.f32 %v942, %v2393
        %v2542 = vmul.f32 %v943, %v2394
        %v2543 = vmul.f32 %v944, %v2395
        %v2544 = vmul.f32 %v945, %v2396
        %v2545 = vmul.f32 %v946, %v2397
        %v2546 = vmul.f32 %v947, %v2398
        %v2547 = vmul.f32 %v948, %v2399
        %v2548 = vmul.f32 %v949, %v2400
        %v2549 = vadd.f32 %v2401, %v2402
        %v2550 = vadd.f32 %v2549, %v2403
        %v2551 = vadd.f32 %v2550, %v2404
        %v2552 = vadd.f32 %v2551, %v2405
        %v2553 = vadd.f32 %v2552, %v2406
        %v2554 = vadd.f32 %v2553, %v2407
        %v2555 = vadd.f32 %v2554, %v2408
        %v2556 = vadd.f32 %v2555, %v2409
        %v2557 = vadd.f32 %v2556, %v2410
        %v2558 = vadd.f32 %v2557, %v2411
        %v2559 = vadd.f32 %v2558, %v2412
        %v2560 = vadd.f32 %v2559, %v2413
        %v2561 = vadd.f32 %v2560, %v2414
        %v2562 = vadd.f32 %v2561, %v2415
        %v2563 = vadd.f32 %v2562, %v2416
        %v2564 = vadd.f32 %v2563, %v2417
        %v2565 = vadd.f32 %v2564, %v2418
        %v2566 = vadd.f32 %v2565, %v2419
        %v2567 = vadd.f32 %v2566, %v2420
        %v2568 = vadd.f32 %v2567, %v2421
        %v2569 = vadd.f32 %v2568, %v2422
        %v2570 = vadd.f32 %v2569, %v2423
        %v2571 = vadd.f32 %v2570, %v2424
        %v2572 = vadd.f32 %v2571, %v2425
        %v2573 = vadd.f32 %v2572, %v2426
        %v2574 = vadd.f32 %v2573, %v2427
        %v2575 = vadd.f32 %v2574, %v2428
        %v2576 = vadd.f32 %v2575, %v2429
        %v2577 = vadd.f32 %v2576, %v2430
        %v2578 = vadd.f32 %v2577, %v2431
        %v2579 = vadd.f32 %v2578, %v2432
        %v2580 = vadd.f32 %v2579, %v2433
        %v2581 = vadd.f32 %v2580, %v2434
        %v2582 = vadd.f32 %v2581, %v2435
        %v2583 = vadd.f32 %v2582, %v2436
        %v2584 = vsel %vm1245, %v2437, 0.0
        %v2585 = vadd.f32 %v2583, %v2584
        %2586 = vadd.xlane.f32.xlu0 %v2585
        %v2587 = vpop.xlane.xlu0 %2586
        %v2588 = vadd.f32 %v2438, %v2439
        %v2589 = vadd.f32 %v2588, %v2440
        %v2590 = vadd.f32 %v2589, %v2441
        %v2591 = vadd.f32 %v2590, %v2442
        %v2592 = vadd.f32 %v2591, %v2443
        %v2593 = vadd.f32 %v2592, %v2444
        %v2594 = vadd.f32 %v2593, %v2445
        %v2595 = vadd.f32 %v2594, %v2446
        %v2596 = vadd.f32 %v2595, %v2447
        %v2597 = vadd.f32 %v2596, %v2448
        %v2598 = vadd.f32 %v2597, %v2449
        %v2599 = vadd.f32 %v2598, %v2450
        %v2600 = vadd.f32 %v2599, %v2451
        %v2601 = vadd.f32 %v2600, %v2452
        %v2602 = vadd.f32 %v2601, %v2453
        %v2603 = vadd.f32 %v2602, %v2454
        %v2604 = vadd.f32 %v2603, %v2455
        %v2605 = vadd.f32 %v2604, %v2456
        %v2606 = vadd.f32 %v2605, %v2457
        %v2607 = vadd.f32 %v2606, %v2458
        %v2608 = vadd.f32 %v2607, %v2459
        %v2609 = vadd.f32 %v2608, %v2460
        %v2610 = vadd.f32 %v2609, %v2461
        %v2611 = vadd.f32 %v2610, %v2462
        %v2612 = vadd.f32 %v2611, %v2463
        %v2613 = vadd.f32 %v2612, %v2464
        %v2614 = vadd.f32 %v2613, %v2465
        %v2615 = vadd.f32 %v2614, %v2466
        %v2616 = vadd.f32 %v2615, %v2467
        %v2617 = vadd.f32 %v2616, %v2468
        %v2618 = vadd.f32 %v2617, %v2469
        %v2619 = vadd.f32 %v2618, %v2470
        %v2620 = vadd.f32 %v2619, %v2471
        %v2621 = vadd.f32 %v2620, %v2472
        %v2622 = vadd.f32 %v2621, %v2473
        %v2623 = vsel %vm1245, %v2474, 0.0
        %v2624 = vadd.f32 %v2622, %v2623
        %2625 = vadd.xlane.f32.xlu0 %v2624
        %v2626 = vpop.xlane.xlu0 %2625
        %v2627 = vadd.f32 %v2475, %v2476
        %v2628 = vadd.f32 %v2627, %v2477
        %v2629 = vadd.f32 %v2628, %v2478
        %v2630 = vadd.f32 %v2629, %v2479
        %v2631 = vadd.f32 %v2630, %v2480
        %v2632 = vadd.f32 %v2631, %v2481
        %v2633 = vadd.f32 %v2632, %v2482
        %v2634 = vadd.f32 %v2633, %v2483
        %v2635 = vadd.f32 %v2634, %v2484
        %v2636 = vadd.f32 %v2635, %v2485
        %v2637 = vadd.f32 %v2636, %v2486
        %v2638 = vadd.f32 %v2637, %v2487
        %v2639 = vadd.f32 %v2638, %v2488
        %v2640 = vadd.f32 %v2639, %v2489
        %v2641 = vadd.f32 %v2640, %v2490
        %v2642 = vadd.f32 %v2641, %v2491
        %v2643 = vadd.f32 %v2642, %v2492
        %v2644 = vadd.f32 %v2643, %v2493
        %v2645 = vadd.f32 %v2644, %v2494
        %v2646 = vadd.f32 %v2645, %v2495
        %v2647 = vadd.f32 %v2646, %v2496
        %v2648 = vadd.f32 %v2647, %v2497
        %v2649 = vadd.f32 %v2648, %v2498
        %v2650 = vadd.f32 %v2649, %v2499
        %v2651 = vadd.f32 %v2650, %v2500
        %v2652 = vadd.f32 %v2651, %v2501
        %v2653 = vadd.f32 %v2652, %v2502
        %v2654 = vadd.f32 %v2653, %v2503
        %v2655 = vadd.f32 %v2654, %v2504
        %v2656 = vadd.f32 %v2655, %v2505
        %v2657 = vadd.f32 %v2656, %v2506
        %v2658 = vadd.f32 %v2657, %v2507
        %v2659 = vadd.f32 %v2658, %v2508
        %v2660 = vadd.f32 %v2659, %v2509
        %v2661 = vadd.f32 %v2660, %v2510
        %v2662 = vsel %vm1245, %v2511, 0.0
        %v2663 = vadd.f32 %v2661, %v2662
        %2664 = vadd.xlane.f32.xlu0 %v2663
        %v2665 = vpop.xlane.xlu0 %2664
        %v2666 = vadd.f32 %v2512, %v2513
        %v2667 = vadd.f32 %v2666, %v2514
        %v2668 = vadd.f32 %v2667, %v2515
        %v2669 = vadd.f32 %v2668, %v2516
        %v2670 = vadd.f32 %v2669, %v2517
        %v2671 = vadd.f32 %v2670, %v2518
        %v2672 = vadd.f32 %v2671, %v2519
        %v2673 = vadd.f32 %v2672, %v2520
        %v2674 = vadd.f32 %v2673, %v2521
        %v2675 = vadd.f32 %v2674, %v2522
        %v2676 = vadd.f32 %v2675, %v2523
        %v2677 = vadd.f32 %v2676, %v2524
        %v2678 = vadd.f32 %v2677, %v2525
        %v2679 = vadd.f32 %v2678, %v2526
        %v2680 = vadd.f32 %v2679, %v2527
        %v2681 = vadd.f32 %v2680, %v2528
        %v2682 = vadd.f32 %v2681, %v2529
        %v2683 = vadd.f32 %v2682, %v2530
        %v2684 = vadd.f32 %v2683, %v2531
        %v2685 = vadd.f32 %v2684, %v2532
        %v2686 = vadd.f32 %v2685, %v2533
        %v2687 = vadd.f32 %v2686, %v2534
        %v2688 = vadd.f32 %v2687, %v2535
        %v2689 = vadd.f32 %v2688, %v2536
        %v2690 = vadd.f32 %v2689, %v2537
        %v2691 = vadd.f32 %v2690, %v2538
        %v2692 = vadd.f32 %v2691, %v2539
        %v2693 = vadd.f32 %v2692, %v2540
        %v2694 = vadd.f32 %v2693, %v2541
        %v2695 = vadd.f32 %v2694, %v2542
        %v2696 = vadd.f32 %v2695, %v2543
        %v2697 = vadd.f32 %v2696, %v2544
        %v2698 = vadd.f32 %v2697, %v2545
        %v2699 = vadd.f32 %v2698, %v2546
        %v2700 = vadd.f32 %v2699, %v2547
        %v2701 = vsel %vm1245, %v2548, 0.0
        %v2702 = vadd.f32 %v2700, %v2701
        %2703 = vadd.xlane.f32.xlu0 %v2702
        %v2704 = vpop.xlane.xlu0 %2703
        %v2709 = vlaneseq
        %v2710 = vshrl.u32 %v2709, 7
        %v2711 = vsub.s32 %v1372, %v2710
        %v2712 = vrot.slane %v2587, %v2711
        %v2713 = vlaneseq
        %v2714 = vshrl.u32 %v2713, 7
        %v2715 = vsub.s32 %v1377, %v2714
        %v2716 = vrot.slane %v2626, %v2715
        %v2717 = vsel %vm1382, %v2716, %v2712
        %v2718 = vlaneseq
        %v2719 = vshrl.u32 %v2718, 7
        %v2720 = vsub.s32 %v1372, %v2719
        %v2721 = vrot.slane %v2665, %v2720
        %v2722 = vlaneseq
        %v2723 = vshrl.u32 %v2722, 7
        %v2724 = vsub.s32 %v1377, %v2723
        %v2725 = vrot.slane %v2704, %v2724
        %v2726 = vsel %vm1382, %v2725, %v2721
        %v2727 = vsel %vm1393, %v2726, %v2717
        %v2729 = vsel %vm1396, %v2727, 0.0
        %2730 = vadd.xlane.f32.xlu0 %v2729
        %v2731 = vpop.xlane.xlu0 %2730
        %v2732 = vld [vmem:[#allocation22] sm:$0x3]
        %vm2733 = vcmask 7168
        %v2734 = vsel %vm2733, %v1399, %v1843
        %vm2735 = vcmask 15360
        %v2736 = vsel %vm2735, %v2734, %v2287
        %vm2737 = vcmask 23552
        %v2738 = vsel %vm2737, %v2736, %v2731
        %v2739 = vadd.f32 %v2732, %v2738
        %vm2740 = vcmask 25600
        %2741 = vst.msk [vmem:[#allocation22] sm:$0x3] %vm2740, %v2739
        %p2742 = scmp.eq.s32.totalorder %s38, 1
        // Predicated region
        $region133: #{tpu_custom_call.1} parent=79 // pred_check
          %p2743 = pneg %p2742
        $region134: #{tpu_custom_call.1} parent=79 // pred_check_branch
          %2745 = sbr.rel (%p2743) target = $region136
        $region135: #{tpu_custom_call.1} parent=79 // pred_region
          %v2746 = vld [vmem:[#allocation22] sm:$0x3]
          %v2747 = vld [vmem:[#allocation7] sm:$0x1]
          %v2749 = vlaneseq
          %v2750 = vshrl.u32 %v2749, 7
          %v2751 = vsub.s32 0, %v2750
          %v2752 = vrot.slane %v2747, %v2751
          %v2754 = vadd.f32 %v2746, %v2752
          %v2755 = vmax.f32 %v2754, 0.0
          %v2756 = vld [vmem:[#allocation8] sm:$0xf]
          %v2757 = vld [vmem:[#allocation10] sm:$0x1]
          %v2759 = vlaneseq
          %v2760 = vshrl.u32 %v2759, 7
          %v2761 = vsub.s32 0, %v2760
          %v2762 = vrot.slane %v2757, %v2761
          %vm2764 = vcmask 31744
          %v2766 = vsel %vm2764, %v2755, 0
          %vm2768 = vcmask 1043456
          %v2770 = vsel %vm2768, %v2756, 0
          %2772 = vmatprep.subr.mxu0 0.0
          %2773 = vmatpush1.msra.mxu0 0.0
          %2774 = vmatprep.subr.mxu0 0.0
          %2775 = vmatpush1.msra.mxu0 0.0
          %2776 = vmatprep.subr.mxu0 0.0
          %2777 = vmatpush1.msra.mxu0 0.0
          %2778 = vmatprep.subr.mxu0 0.0
          %2779 = vmatpush1.msra.mxu0 0.0
          %2780 = vmatprep.subr.mxu0 0.0
          %2781 = vmatpush1.msra.mxu0 0.0
          %2782 = vmatprep.subr.mxu0 0.0
          %2783 = vmatpush1.msra.mxu0 0.0
          %2784 = vmatprep.subr.mxu0 0.0
          %2785 = vmatpush1.msra.mxu0 0.0
          %2786 = vmatprep.subr.mxu0 0.0
          %2787 = vmatpush1.msra.mxu0 0.0
          %2788 = vmatprep.subr.mxu0 0.0
          %2789 = vmatpush1.msra.mxu0 0.0
          %2790 = vmatprep.subr.mxu0 0.0
          %2791 = vmatpush1.msra.mxu0 0.0
          %2792 = vmatprep.subr.mxu0 0.0
          %2793 = vmatpush1.msra.mxu0 0.0
          %2794 = vmatprep.subr.mxu0 0.0
          %2795 = vmatpush1.msra.mxu0 0.0
          %2796 = vmatprep.subr.mxu0 0.0
          %2797 = vmatpush1.msra.mxu0 0.0
          %2798 = vmatprep.subr.mxu0 0.0
          %2799 = vmatpush1.msra.mxu0 0.0
          %2800 = vmatprep.subr.mxu0 0.0
          %2801 = vmatpush1.msra.mxu0 0.0
          %2802 = vmatprep.subr.mxu0 0.0
          %2803 = vmatpush1.msra.mxu0 %v2770
          %2804 = vmatprep.subr.mxu0 0.0
          %2805 = vmatpush2.msra.mxu0 0.0
          %2806 = vmatprep.subr.mxu0 0.0
          %2807 = vmatpush2.msra.mxu0 0.0
          %2808 = vmatprep.subr.mxu0 0.0
          %2809 = vmatpush2.msra.mxu0 0.0
          %2810 = vmatprep.subr.mxu0 0.0
          %2811 = vmatpush2.msra.mxu0 0.0
          %2812 = vmatprep.subr.mxu0 0.0
          %2813 = vmatpush2.msra.mxu0 0.0
          %2814 = vmatprep.subr.mxu0 0.0
          %2815 = vmatpush2.msra.mxu0 0.0
          %2816 = vmatprep.subr.mxu0 0.0
          %2817 = vmatpush2.msra.mxu0 0.0
          %2818 = vmatprep.subr.mxu0 0.0
          %2819 = vmatpush2.msra.mxu0 0.0
          %2820 = vmatprep.subr.mxu0 0.0
          %2821 = vmatpush2.msra.mxu0 0.0
          %2822 = vmatprep.subr.mxu0 0.0
          %2823 = vmatpush2.msra.mxu0 0.0
          %2824 = vmatprep.subr.mxu0 0.0
          %2825 = vmatpush2.msra.mxu0 0.0
          %2826 = vmatprep.subr.mxu0 0.0
          %2827 = vmatpush2.msra.mxu0 0.0
          %2828 = vmatprep.subr.mxu0 0.0
          %2829 = vmatpush2.msra.mxu0 0.0
          %2830 = vmatprep.subr.mxu0 0.0
          %2831 = vmatpush2.msra.mxu0 0.0
          %2832 = vmatprep.subr.mxu0 0.0
          %2833 = vmatpush2.msra.mxu0 0.0
          %2834 = vmatprep.subr.mxu0 0.0
          %2835 = vmatpush2.msra.mxu0 0.0
          %2836 = vmatprep.mubr.f32.mxu0 0.0
          %2837 = vmatmul.mubr.f32.gmra.mxu0 %v2766
          %v2838 = vpop.f32.mrf.mxu0
          %v2839 = vadd.f32 %v2762, %v2838
          %v2840 = vpop.f32.mrf.mxu0
          %2841 = vdwg.mxu0
          %v2842 = vmax.f32 %v2839, 0.0
          %v2843 = vld [vmem:[%s5] sm:$0xff]
          %v2844 = vld [vmem:[%s5 + $0x8] sm:$0xff]
          %v2845 = vld [vmem:[%s5 + $0x10] sm:$0xff]
          %v2846 = vld [vmem:[%s5 + $0x18] sm:$0xff]
          %v2847 = vld [vmem:[%s5 + $0x20] sm:$0xff]
          %v2848 = vld [vmem:[%s5 + $0x28] sm:$0xff]
          %v2849 = vld [vmem:[%s5 + $0x30] sm:$0x3]
          %v2850 = vld [vmem:[#allocation11] sm:$0x1]
          %v2852 = vlaneseq
          %v2853 = vshrl.u32 %v2852, 7
          %v2854 = vsub.s32 0, %v2853
          %v2855 = vrot.slane %v2850, %v2854
          %vm2857 = vcmask 408576
          %v2859 = vsel %vm2857, %v2842, 0
          %vm2861 = vcmask 1041408
          %v2863 = vsel %vm2861, %v2849, 0
          %2865 = vmatprep.subr.mxu0 0.0
          %2866 = vmatpush1.msra.mxu0 0.0
          %2867 = vmatprep.subr.mxu0 0.0
          %2868 = vmatpush1.msra.mxu0 0.0
          %2869 = vmatprep.subr.mxu0 0.0
          %2870 = vmatpush1.msra.mxu0 0.0
          %2871 = vmatprep.subr.mxu0 0.0
          %2872 = vmatpush1.msra.mxu0 0.0
          %2873 = vmatprep.subr.mxu0 0.0
          %2874 = vmatpush1.msra.mxu0 0.0
          %2875 = vmatprep.subr.mxu0 0.0
          %2876 = vmatpush1.msra.mxu0 0.0
          %2877 = vmatprep.subr.mxu0 0.0
          %2878 = vmatpush1.msra.mxu0 0.0
          %2879 = vmatprep.subr.mxu0 0.0
          %2880 = vmatpush1.msra.mxu0 0.0
          %2881 = vmatprep.subr.mxu0 0.0
          %2882 = vmatpush1.msra.mxu0 0.0
          %2883 = vmatprep.subr.mxu0 0.0
          %2884 = vmatpush1.msra.mxu0 %v2863
          %2885 = vmatprep.subr.mxu0 0.0
          %2886 = vmatpush1.msra.mxu0 %v2848
          %2887 = vmatprep.subr.mxu0 0.0
          %2888 = vmatpush1.msra.mxu0 %v2847
          %2889 = vmatprep.subr.mxu0 0.0
          %2890 = vmatpush1.msra.mxu0 %v2846
          %2891 = vmatprep.subr.mxu0 0.0
          %2892 = vmatpush1.msra.mxu0 %v2845
          %2893 = vmatprep.subr.mxu0 0.0
          %2894 = vmatpush1.msra.mxu0 %v2844
          %2895 = vmatprep.subr.mxu0 0.0
          %2896 = vmatpush1.msra.mxu0 %v2843
          %2897 = vmatprep.subr.mxu0 0.0
          %2898 = vmatpush2.msra.mxu0 0.0
          %2899 = vmatprep.subr.mxu0 0.0
          %2900 = vmatpush2.msra.mxu0 0.0
          %2901 = vmatprep.subr.mxu0 0.0
          %2902 = vmatpush2.msra.mxu0 0.0
          %2903 = vmatprep.subr.mxu0 0.0
          %2904 = vmatpush2.msra.mxu0 0.0
          %2905 = vmatprep.subr.mxu0 0.0
          %2906 = vmatpush2.msra.mxu0 0.0
          %2907 = vmatprep.subr.mxu0 0.0
          %2908 = vmatpush2.msra.mxu0 0.0
          %2909 = vmatprep.subr.mxu0 0.0
          %2910 = vmatpush2.msra.mxu0 0.0
          %2911 = vmatprep.subr.mxu0 0.0
          %2912 = vmatpush2.msra.mxu0 0.0
          %2913 = vmatprep.subr.mxu0 0.0
          %2914 = vmatpush2.msra.mxu0 0.0
          %2915 = vmatprep.subr.mxu0 0.0
          %2916 = vmatpush2.msra.mxu0 0.0
          %2917 = vmatprep.subr.mxu0 0.0
          %2918 = vmatpush2.msra.mxu0 0.0
          %2919 = vmatprep.subr.mxu0 0.0
          %2920 = vmatpush2.msra.mxu0 0.0
          %2921 = vmatprep.subr.mxu0 0.0
          %2922 = vmatpush2.msra.mxu0 0.0
          %2923 = vmatprep.subr.mxu0 0.0
          %2924 = vmatpush2.msra.mxu0 0.0
          %2925 = vmatprep.subr.mxu0 0.0
          %2926 = vmatpush2.msra.mxu0 0.0
          %2927 = vmatprep.subr.mxu0 0.0
          %2928 = vmatpush2.msra.mxu0 0.0
          %2929 = vmatprep.mubr.f32.mxu0 0.0
          %2930 = vmatmul.mubr.f32.gmra.mxu0 %v2859
          %v2931 = vpop.f32.mrf.mxu0
          %v2932 = vadd.f32 %v2855, %v2931
          %v2933 = vpop.f32.mrf.mxu0
          %2934 = vdwg.mxu0
          %v2935 = vmax.f32 %v2932, 0.0
          %v2936 = vld [vmem:[#allocation13] sm:$0xf]
          %v2937 = vld [vmem:[#allocation14] sm:$0x1]
          %v2939 = vlaneseq
          %v2940 = vshrl.u32 %v2939, 7
          %v2941 = vsub.s32 0, %v2940
          %v2942 = vrot.slane %v2937, %v2941
          %v2945 = vsel %vm2764, %v2935, 0
          %v2948 = vsel %vm2768, %v2936, 0
          %2950 = vmatprep.subr.mxu0 0.0
          %2951 = vmatpush1.msra.mxu0 0.0
          %2952 = vmatprep.subr.mxu0 0.0
          %2953 = vmatpush1.msra.mxu0 0.0
          %2954 = vmatprep.subr.mxu0 0.0
          %2955 = vmatpush1.msra.mxu0 0.0
          %2956 = vmatprep.subr.mxu0 0.0
          %2957 = vmatpush1.msra.mxu0 0.0
          %2958 = vmatprep.subr.mxu0 0.0
          %2959 = vmatpush1.msra.mxu0 0.0
          %2960 = vmatprep.subr.mxu0 0.0
          %2961 = vmatpush1.msra.mxu0 0.0
          %2962 = vmatprep.subr.mxu0 0.0
          %2963 = vmatpush1.msra.mxu0 0.0
          %2964 = vmatprep.subr.mxu0 0.0
          %2965 = vmatpush1.msra.mxu0 0.0
          %2966 = vmatprep.subr.mxu0 0.0
          %2967 = vmatpush1.msra.mxu0 0.0
          %2968 = vmatprep.subr.mxu0 0.0
          %2969 = vmatpush1.msra.mxu0 0.0
          %2970 = vmatprep.subr.mxu0 0.0
          %2971 = vmatpush1.msra.mxu0 0.0
          %2972 = vmatprep.subr.mxu0 0.0
          %2973 = vmatpush1.msra.mxu0 0.0
          %2974 = vmatprep.subr.mxu0 0.0
          %2975 = vmatpush1.msra.mxu0 0.0
          %2976 = vmatprep.subr.mxu0 0.0
          %2977 = vmatpush1.msra.mxu0 0.0
          %2978 = vmatprep.subr.mxu0 0.0
          %2979 = vmatpush1.msra.mxu0 0.0
          %2980 = vmatprep.subr.mxu0 0.0
          %2981 = vmatpush1.msra.mxu0 %v2948
          %2982 = vmatprep.subr.mxu0 0.0
          %2983 = vmatpush2.msra.mxu0 0.0
          %2984 = vmatprep.subr.mxu0 0.0
          %2985 = vmatpush2.msra.mxu0 0.0
          %2986 = vmatprep.subr.mxu0 0.0
          %2987 = vmatpush2.msra.mxu0 0.0
          %2988 = vmatprep.subr.mxu0 0.0
          %2989 = vmatpush2.msra.mxu0 0.0
          %2990 = vmatprep.subr.mxu0 0.0
          %2991 = vmatpush2.msra.mxu0 0.0
          %2992 = vmatprep.subr.mxu0 0.0
          %2993 = vmatpush2.msra.mxu0 0.0
          %2994 = vmatprep.subr.mxu0 0.0
          %2995 = vmatpush2.msra.mxu0 0.0
          %2996 = vmatprep.subr.mxu0 0.0
          %2997 = vmatpush2.msra.mxu0 0.0
          %2998 = vmatprep.subr.mxu0 0.0
          %2999 = vmatpush2.msra.mxu0 0.0
          %3000 = vmatprep.subr.mxu0 0.0
          %3001 = vmatpush2.msra.mxu0 0.0
          %3002 = vmatprep.subr.mxu0 0.0
          %3003 = vmatpush2.msra.mxu0 0.0
          %3004 = vmatprep.subr.mxu0 0.0
          %3005 = vmatpush2.msra.mxu0 0.0
          %3006 = vmatprep.subr.mxu0 0.0
          %3007 = vmatpush2.msra.mxu0 0.0
          %3008 = vmatprep.subr.mxu0 0.0
          %3009 = vmatpush2.msra.mxu0 0.0
          %3010 = vmatprep.subr.mxu0 0.0
          %3011 = vmatpush2.msra.mxu0 0.0
          %3012 = vmatprep.subr.mxu0 0.0
          %3013 = vmatpush2.msra.mxu0 0.0
          %3014 = vmatprep.mubr.f32.mxu0 0.0
          %3015 = vmatmul.mubr.f32.gmra.mxu0 %v2945
          %v3016 = vpop.f32.mrf.mxu0
          %v3017 = vadd.f32 %v2942, %v3016
          %v3018 = vpop.f32.mrf.mxu0
          %3019 = vdwg.mxu0
          %v3020 = vmax.f32 %v3017, 0.0
          %v3021 = vld [vmem:[%s9] sm:$0xff]
          %v3022 = vld [vmem:[%s9 + $0x8] sm:$0xff]
          %v3023 = vld [vmem:[%s9 + $0x10] sm:$0xff]
          %v3024 = vld [vmem:[%s9 + $0x18] sm:$0xff]
          %v3025 = vld [vmem:[%s9 + $0x20] sm:$0xff]
          %v3026 = vld [vmem:[%s9 + $0x28] sm:$0xff]
          %v3027 = vld [vmem:[%s9 + $0x30] sm:$0xff]
          %v3028 = vld [vmem:[%s9 + $0x38] sm:$0xff]
          %v3029 = vld [vmem:[%s9 + $0x40] sm:$0xff]
          %v3030 = vld [vmem:[%s9 + $0x48] sm:$0xff]
          %v3031 = vld [vmem:[%s9 + $0x50] sm:$0xff]
          %v3032 = vld [vmem:[%s9 + $0x58] sm:$0xff]
          %v3033 = vld [vmem:[%s9 + $0x60] sm:$0xf]
          %v3034 = vld [vmem:[#allocation16] sm:$0x1]
          %v3036 = vlaneseq
          %v3037 = vshrl.u32 %v3036, 7
          %v3038 = vsub.s32 0, %v3037
          %v3039 = vrot.slane %v3034, %v3038
          %vm3041 = vcmask 818176
          %v3043 = vsel %vm3041, %v3020, 0
          %v3046 = vsel %vm2768, %v3033, 0
          %3048 = vmatprep.subr.mxu0 0.0
          %3049 = vmatpush1.msra.mxu0 0.0
          %3050 = vmatprep.subr.mxu0 0.0
          %3051 = vmatpush1.msra.mxu0 0.0
          %3052 = vmatprep.subr.mxu0 0.0
          %3053 = vmatpush1.msra.mxu0 0.0
          %3054 = vmatprep.subr.mxu0 0.0
          %3055 = vmatpush1.msra.mxu0 %v3046
          %3056 = vmatprep.subr.mxu0 0.0
          %3057 = vmatpush1.msra.mxu0 %v3032
          %3058 = vmatprep.subr.mxu0 0.0
          %3059 = vmatpush1.msra.mxu0 %v3031
          %3060 = vmatprep.subr.mxu0 0.0
          %3061 = vmatpush1.msra.mxu0 %v3030
          %3062 = vmatprep.subr.mxu0 0.0
          %3063 = vmatpush1.msra.mxu0 %v3029
          %3064 = vmatprep.subr.mxu0 0.0
          %3065 = vmatpush1.msra.mxu0 %v3028
          %3066 = vmatprep.subr.mxu0 0.0
          %3067 = vmatpush1.msra.mxu0 %v3027
          %3068 = vmatprep.subr.mxu0 0.0
          %3069 = vmatpush1.msra.mxu0 %v3026
          %3070 = vmatprep.subr.mxu0 0.0
          %3071 = vmatpush1.msra.mxu0 %v3025
          %3072 = vmatprep.subr.mxu0 0.0
          %3073 = vmatpush1.msra.mxu0 %v3024
          %3074 = vmatprep.subr.mxu0 0.0
          %3075 = vmatpush1.msra.mxu0 %v3023
          %3076 = vmatprep.subr.mxu0 0.0
          %3077 = vmatpush1.msra.mxu0 %v3022
          %3078 = vmatprep.subr.mxu0 0.0
          %3079 = vmatpush1.msra.mxu0 %v3021
          %3080 = vmatprep.subr.mxu0 0.0
          %3081 = vmatpush2.msra.mxu0 0.0
          %3082 = vmatprep.subr.mxu0 0.0
          %3083 = vmatpush2.msra.mxu0 0.0
          %3084 = vmatprep.subr.mxu0 0.0
          %3085 = vmatpush2.msra.mxu0 0.0
          %3086 = vmatprep.subr.mxu0 0.0
          %3087 = vmatpush2.msra.mxu0 0.0
          %3088 = vmatprep.subr.mxu0 0.0
          %3089 = vmatpush2.msra.mxu0 0.0
          %3090 = vmatprep.subr.mxu0 0.0
          %3091 = vmatpush2.msra.mxu0 0.0
          %3092 = vmatprep.subr.mxu0 0.0
          %3093 = vmatpush2.msra.mxu0 0.0
          %3094 = vmatprep.subr.mxu0 0.0
          %3095 = vmatpush2.msra.mxu0 0.0
          %3096 = vmatprep.subr.mxu0 0.0
          %3097 = vmatpush2.msra.mxu0 0.0
          %3098 = vmatprep.subr.mxu0 0.0
          %3099 = vmatpush2.msra.mxu0 0.0
          %3100 = vmatprep.subr.mxu0 0.0
          %3101 = vmatpush2.msra.mxu0 0.0
          %3102 = vmatprep.subr.mxu0 0.0
          %3103 = vmatpush2.msra.mxu0 0.0
          %3104 = vmatprep.subr.mxu0 0.0
          %3105 = vmatpush2.msra.mxu0 0.0
          %3106 = vmatprep.subr.mxu0 0.0
          %3107 = vmatpush2.msra.mxu0 0.0
          %3108 = vmatprep.subr.mxu0 0.0
          %3109 = vmatpush2.msra.mxu0 0.0
          %3110 = vmatprep.subr.mxu0 0.0
          %3111 = vmatpush2.msra.mxu0 0.0
          %3112 = vmatprep.mubr.f32.mxu0 0.0
          %3113 = vmatmul.mubr.f32.gmra.mxu0 %v3043
          %v3114 = vpop.f32.mrf.mxu0
          %v3115 = vadd.f32 %v3039, %v3114
          %v3116 = vpop.f32.mrf.mxu0
          %3117 = vdwg.mxu0
          %v3118 = vmax.f32 %v3115, 0.0
          %v3119 = vld [vmem:[#allocation17] sm:$0xf]
          %v3120 = vld [vmem:[#allocation19] sm:$0x1]
          %v3122 = vlaneseq
          %v3123 = vshrl.u32 %v3122, 7
          %v3124 = vsub.s32 0, %v3123
          %v3125 = vrot.slane %v3120, %v3124
          %v3128 = vsel %vm2764, %v3118, 0
          %v3131 = vsel %vm2768, %v3119, 0
          %3133 = vmatprep.subr.mxu0 0.0
          %3134 = vmatpush1.msra.mxu0 0.0
          %3135 = vmatprep.subr.mxu0 0.0
          %3136 = vmatpush1.msra.mxu0 0.0
          %3137 = vmatprep.subr.mxu0 0.0
          %3138 = vmatpush1.msra.mxu0 0.0
          %3139 = vmatprep.subr.mxu0 0.0
          %3140 = vmatpush1.msra.mxu0 0.0
          %3141 = vmatprep.subr.mxu0 0.0
          %3142 = vmatpush1.msra.mxu0 0.0
          %3143 = vmatprep.subr.mxu0 0.0
          %3144 = vmatpush1.msra.mxu0 0.0
          %3145 = vmatprep.subr.mxu0 0.0
          %3146 = vmatpush1.msra.mxu0 0.0
          %3147 = vmatprep.subr.mxu0 0.0
          %3148 = vmatpush1.msra.mxu0 0.0
          %3149 = vmatprep.subr.mxu0 0.0
          %3150 = vmatpush1.msra.mxu0 0.0
          %3151 = vmatprep.subr.mxu0 0.0
          %3152 = vmatpush1.msra.mxu0 0.0
          %3153 = vmatprep.subr.mxu0 0.0
          %3154 = vmatpush1.msra.mxu0 0.0
          %3155 = vmatprep.subr.mxu0 0.0
          %3156 = vmatpush1.msra.mxu0 0.0
          %3157 = vmatprep.subr.mxu0 0.0
          %3158 = vmatpush1.msra.mxu0 0.0
          %3159 = vmatprep.subr.mxu0 0.0
          %3160 = vmatpush1.msra.mxu0 0.0
          %3161 = vmatprep.subr.mxu0 0.0
          %3162 = vmatpush1.msra.mxu0 0.0
          %3163 = vmatprep.subr.mxu0 0.0
          %3164 = vmatpush1.msra.mxu0 %v3131
          %3165 = vmatprep.subr.mxu0 0.0
          %3166 = vmatpush2.msra.mxu0 0.0
          %3167 = vmatprep.subr.mxu0 0.0
          %3168 = vmatpush2.msra.mxu0 0.0
          %3169 = vmatprep.subr.mxu0 0.0
          %3170 = vmatpush2.msra.mxu0 0.0
          %3171 = vmatprep.subr.mxu0 0.0
          %3172 = vmatpush2.msra.mxu0 0.0
          %3173 = vmatprep.subr.mxu0 0.0
          %3174 = vmatpush2.msra.mxu0 0.0
          %3175 = vmatprep.subr.mxu0 0.0
          %3176 = vmatpush2.msra.mxu0 0.0
          %3177 = vmatprep.subr.mxu0 0.0
          %3178 = vmatpush2.msra.mxu0 0.0
          %3179 = vmatprep.subr.mxu0 0.0
          %3180 = vmatpush2.msra.mxu0 0.0
          %3181 = vmatprep.subr.mxu0 0.0
          %3182 = vmatpush2.msra.mxu0 0.0
          %3183 = vmatprep.subr.mxu0 0.0
          %3184 = vmatpush2.msra.mxu0 0.0
          %3185 = vmatprep.subr.mxu0 0.0
          %3186 = vmatpush2.msra.mxu0 0.0
          %3187 = vmatprep.subr.mxu0 0.0
          %3188 = vmatpush2.msra.mxu0 0.0
          %3189 = vmatprep.subr.mxu0 0.0
          %3190 = vmatpush2.msra.mxu0 0.0
          %3191 = vmatprep.subr.mxu0 0.0
          %3192 = vmatpush2.msra.mxu0 0.0
          %3193 = vmatprep.subr.mxu0 0.0
          %3194 = vmatpush2.msra.mxu0 0.0
          %3195 = vmatprep.subr.mxu0 0.0
          %3196 = vmatpush2.msra.mxu0 0.0
          %3197 = vmatprep.mubr.f32.mxu0 0.0
          %3198 = vmatmul.mubr.f32.gmra.mxu0 %v3128
          %v3199 = vpop.f32.mrf.mxu0
          %v3200 = vadd.f32 %v3125, %v3199
          %v3201 = vpop.f32.mrf.mxu0
          %3202 = vdwg.mxu0
          %v3203 = vmax.f32 %v3200, 0.0
          %v3204 = vld [vmem:[%s13] sm:$0xff]
          %v3205 = vld [vmem:[%s13 + $0x8] sm:$0xff]
          %v3206 = vld [vmem:[%s13 + $0x10] sm:$0xff]
          %v3207 = vld [vmem:[%s13 + $0x18] sm:$0xff]
          %v3208 = vld [vmem:[#allocation20] sm:$0x1]
          %v3210 = vlaneseq
          %v3211 = vshrl.u32 %v3210, 7
          %v3212 = vsub.s32 0, %v3211
          %v3213 = vrot.slane %v3208, %v3212
          %vm3215 = vcmask 261120
          %v3217 = vsel %vm3215, %v3203, 0
          %3219 = vmatprep.subr.mxu0 0.0
          %3220 = vmatpush1.msra.mxu0 0.0
          %3221 = vmatprep.subr.mxu0 0.0
          %3222 = vmatpush1.msra.mxu0 0.0
          %3223 = vmatprep.subr.mxu0 0.0
          %3224 = vmatpush1.msra.mxu0 0.0
          %3225 = vmatprep.subr.mxu0 0.0
          %3226 = vmatpush1.msra.mxu0 0.0
          %3227 = vmatprep.subr.mxu0 0.0
          %3228 = vmatpush1.msra.mxu0 0.0
          %3229 = vmatprep.subr.mxu0 0.0
          %3230 = vmatpush1.msra.mxu0 0.0
          %3231 = vmatprep.subr.mxu0 0.0
          %3232 = vmatpush1.msra.mxu0 0.0
          %3233 = vmatprep.subr.mxu0 0.0
          %3234 = vmatpush1.msra.mxu0 0.0
          %3235 = vmatprep.subr.mxu0 0.0
          %3236 = vmatpush1.msra.mxu0 0.0
          %3237 = vmatprep.subr.mxu0 0.0
          %3238 = vmatpush1.msra.mxu0 0.0
          %3239 = vmatprep.subr.mxu0 0.0
          %3240 = vmatpush1.msra.mxu0 0.0
          %3241 = vmatprep.subr.mxu0 0.0
          %3242 = vmatpush1.msra.mxu0 0.0
          %3243 = vmatprep.subr.mxu0 0.0
          %3244 = vmatpush1.msra.mxu0 %v3207
          %3245 = vmatprep.subr.mxu0 0.0
          %3246 = vmatpush1.msra.mxu0 %v3206
          %3247 = vmatprep.subr.mxu0 0.0
          %3248 = vmatpush1.msra.mxu0 %v3205
          %3249 = vmatprep.subr.mxu0 0.0
          %3250 = vmatpush1.msra.mxu0 %v3204
          %3251 = vmatprep.subr.mxu0 0.0
          %3252 = vmatpush2.msra.mxu0 0.0
          %3253 = vmatprep.subr.mxu0 0.0
          %3254 = vmatpush2.msra.mxu0 0.0
          %3255 = vmatprep.subr.mxu0 0.0
          %3256 = vmatpush2.msra.mxu0 0.0
          %3257 = vmatprep.subr.mxu0 0.0
          %3258 = vmatpush2.msra.mxu0 0.0
          %3259 = vmatprep.subr.mxu0 0.0
          %3260 = vmatpush2.msra.mxu0 0.0
          %3261 = vmatprep.subr.mxu0 0.0
          %3262 = vmatpush2.msra.mxu0 0.0
          %3263 = vmatprep.subr.mxu0 0.0
          %3264 = vmatpush2.msra.mxu0 0.0
          %3265 = vmatprep.subr.mxu0 0.0
          %3266 = vmatpush2.msra.mxu0 0.0
          %3267 = vmatprep.subr.mxu0 0.0
          %3268 = vmatpush2.msra.mxu0 0.0
          %3269 = vmatprep.subr.mxu0 0.0
          %3270 = vmatpush2.msra.mxu0 0.0
          %3271 = vmatprep.subr.mxu0 0.0
          %3272 = vmatpush2.msra.mxu0 0.0
          %3273 = vmatprep.subr.mxu0 0.0
          %3274 = vmatpush2.msra.mxu0 0.0
          %3275 = vmatprep.subr.mxu0 0.0
          %3276 = vmatpush2.msra.mxu0 0.0
          %3277 = vmatprep.subr.mxu0 0.0
          %3278 = vmatpush2.msra.mxu0 0.0
          %3279 = vmatprep.subr.mxu0 0.0
          %3280 = vmatpush2.msra.mxu0 0.0
          %3281 = vmatprep.subr.mxu0 0.0
          %3282 = vmatpush2.msra.mxu0 0.0
          %3283 = vmatprep.mubr.f32.mxu0 0.0
          %3284 = vmatmul.mubr.f32.gmra.mxu0 %v3217
          %v3285 = vpop.f32.mrf.mxu0
          %v3286 = vadd.f32 %v3213, %v3285
          %v3287 = vpop.f32.mrf.mxu0
          %3288 = vdwg.mxu0
          %v3289 = vmax.f32 %v3286, 0.0
          %3290 = vst.msk [vmem:[#allocation22] sm:$0x3] %vm2740, %v3289
        $region136: #{tpu_custom_call.1} parent=79 // pred_fallthru
          _
        // Predicated region
        $region137: #{tpu_custom_call.1} parent=79 // pred_check
          %p3291 = pneg %p376
        $region138: #{tpu_custom_call.1} parent=79 // pred_check_branch
          %3293 = sbr.rel (%p3291) target = $region140
        $region139: #{tpu_custom_call.1} parent=79 // pred_region
          %s3295 = ssub.s32 32, 32
          %3296 = vsyncadd [#allocation4], %s3295
          %s3298 = sshll.u32 [#allocation22], 4
          %s3299 = int_to_ptr.vmem [resolvable:$true] %s3298
          %3301 = dma.vmem_to_hbm [thread:$0]  %s3299, 32, %s15, [#allocation4]
        $region140: #{tpu_custom_call.1} parent=79 // pred_fallthru
          _
        // Predicated region
        $region141: #{tpu_custom_call.1} parent=79 // pred_check
          %p3302 = pneg %p376
        $region142: #{tpu_custom_call.1} parent=79 // pred_check_branch
          %3304 = sbr.rel (%p3302) target = $region144
        $region143: #{tpu_custom_call.1} parent=79 // pred_region
          %3305 = dma.done [#allocation4], 32
        $region144: #{tpu_custom_call.1} parent=79 // pred_fallthru
          _
      $region80: #{tpu_custom_call.1} parent=5 // pred_fallthru
        _
      %p3306 = scmp.le.s32.totalorder 2, %s33
      // Predicated region
      $region145: #{tpu_custom_call.1} parent=5 // pred_check
        %p3307 = pneg %p3306
      $region146: #{tpu_custom_call.1} parent=5 // pred_check_branch
        %3309 = sbr.rel (%p3307) target = $region148
      $region147: #{tpu_custom_call.1} parent=5 // pred_region
        %s3310 = ssub.s32 %s33, 2
      $region148: #{tpu_custom_call.1} parent=5 // pred_fallthru
        _
    $region6: #{tpu_custom_call.1} parent=1 // loop_footer
      %s37 = sadd.s32 1, %s33
    $region7: #{tpu_custom_call.1} parent=1 // loop_footer_branch
      %32 = sbr.rel target = $region3
    $region8: #{tpu_custom_call.1} parent=1 // loop_exit
      _
    %3311 = vsyncpa [#allocation3], 1
    %s3312 = scalar_lea.sflag [#allocation3], 1
    %3313 = vsyncpa %s3312, 1
    %3314 = vsyncpa [#allocation6], 1
    %s3315 = scalar_lea.sflag [#allocation6], 1
    %3316 = vsyncpa %s3315, 1
    %3317 = vsyncpa [#allocation9], 1
    %3318 = vsyncpa [#allocation12], 1
    %3319 = vsyncpa [#allocation15], 1
    %3320 = vsyncpa [#allocation18], 1
    %3321 = vsyncpa [#allocation21], 1
    %3322 = vsyncpa [#allocation4], 1
    %s3323 = scalar_lea.sflag [#allocation4], 1
    %3324 = vsyncpa %s3323, 1

</llo_original>
